<compile_context>
chip_gen: v6e
topology: v6e:2x2x1
jax: 0.10.0
libtpu: 0.0.40
codegen_flags: <defaults>
</compile_context>

<pallas_src>
import jax
import jax.numpy as jnp
from jax.experimental import pallas as pl
from jax.experimental.pallas import tpu as pltpu

# ---------------- model dimensions (small but structurally faithful) ---------
EMB = 512                 # nn.Embedding(11, 512)
VOCAB = 11
VOCAB_PAD = 128           # vocab padded to one lane tile for in-kernel one-hot gather
ENC1 = 256                # encoder hidden
ENC2 = 128                # latent dim
SEQ = 8                   # stands in for 5*900 = 4500 in the original module
N_TOK = 2 * SEQ           # input + output halves, interleaved per seq position
TK = 8                    # tokens per grid step (K tile of the layer-1 stream)
BATCH = 2
F1, F2, F3, F4, F5 = 256, 128, 64, 32, 16
FUSION_IN = N_TOK * ENC2  # matches nn.Linear(2*128*SEQ, 256)
BN_EPS = 1e-5
LEAKY_SLOPE = 0.01        # nn.LeakyReLU default


# ------------------------------ helpers --------------------------------------
def _leaky(x):
    return jnp.where(x >= 0.0, x, LEAKY_SLOPE * x)


def _bn_train(x, gamma, beta):
    # BatchNorm1d forward in training mode: batch statistics (biased variance).
    mean = jnp.mean(x, axis=0, keepdims=True)
    var = jnp.mean((x - mean) ** 2, axis=0, keepdims=True)
    return gamma * (x - mean) * jax.lax.rsqrt(var + BN_EPS) + beta


# ------------------------------ fused kernel ---------------------------------
def _fused_kernel(
        # streamed (tiled along the token / K axis by the grid)
        ids_ref, eps_ref, w1_ref,
        # resident (whole array in VMEM, constant block index)
        embt_ref, ew1_ref, eb1_ref, ew2_ref, eb2_ref, wms_ref, bms_ref,
        fb1_ref, g1_ref, be1_ref,
        f2w_ref, f2b_ref, g2_ref, be2_ref,
        f3w_ref, f3b_ref, g3_ref, be3_ref,
        f4w_ref, f4b_ref, g4_ref, be4_ref,
        f5w_ref, f5b_ref,
        bw_ref, bb_ref,
        # output + scratch
        out_ref, acc_ref):
    """Per grid step: one-hot embed -> frozen encoder -> reparameterize ->
    layer-1 partial matmul into the f32 accumulator.  Last step: BN + tail MLP
    + sigmoid, lane-dense store."""
    k = pl.program_id(0)
    nk = pl.num_programs(0)

    rows = eps_ref.shape[1]          # TK * B token rows handled this step
    lat_dim = eps_ref.shape[2]       # 128
    n_b = out_ref.shape[0]           # batch
    tk = rows // n_b                 # tokens in this tile (static)

    @pl.when(k == 0)
    def _init():
        acc_ref[...] = jnp.zeros_like(acc_ref)

    # ---- in-kernel embedding gather: one-hot(ids) @ padded table ----
    ids = ids_ref[0]                                               # (rows, 1) int32
    iota = jax.lax.broadcasted_iota(jnp.int32, (rows, VOCAB_PAD), 1)
    onehot = (iota == ids).astype(jnp.bfloat16)                    # (rows, 128)
    x = jnp.dot(onehot, embt_ref[...], preferred_element_type=jnp.float32)

    # ---- frozen VAE encoder on this step's token rows ----
    h = jnp.dot(x.astype(jnp.bfloat16), ew1_ref[...],
                preferred_element_type=jnp.float32) + eb1_ref[...]
    h = jnp.maximum(h, 0.0).astype(jnp.bfloat16)
    h = jnp.dot(h, ew2_ref[...], preferred_element_type=jnp.float32) + eb2_ref[...]
    h = jnp.maximum(h, 0.0).astype(jnp.bfloat16)

    # fused mu / sigma head: one (128 -> 256) matmul, sliced afterwards
    ms = jnp.dot(h, wms_ref[...], preferred_element_type=jnp.float32) + bms_ref[...]
    mu = ms[:, :lat_dim]
    logvar = ms[:, lat_dim:]
    lat = mu + jnp.exp(0.5 * logvar) * eps_ref[0]                  # (rows, 128) f32

    # ---- fusion layer 1 partial: one matmul per grid step ----
    # Rows are token-major (r = t_local*B + b); concatenating the per-token
    # (B, 128) slices along lanes reproduces torch's cat(...).view(B, -1)
    # column order, matching the streamed w1 block rows ((k*TK+t)*128 + e).
    lat_wide = jnp.concatenate(
        [lat[t * n_b:(t + 1) * n_b, :] for t in range(tk)], axis=1
    ).astype(jnp.bfloat16)                                         # (B, TK*128)
    acc_ref[...] += jnp.dot(lat_wide, w1_ref[...],
                            preferred_element_type=jnp.float32)    # (B, F1)

    # ---- finalize on the last K step: BN + tail MLP + sigmoid head ----
    @pl.when(k == nk - 1)
    def _finalize():
        h1 = _leaky(_bn_train(acc_ref[...] + fb1_ref[...], g1_ref[...], be1_ref[...]))

        h2 = jnp.dot(h1.astype(jnp.bfloat16), f2w_ref[...],
                     preferred_element_type=jnp.float32) + f2b_ref[...]
        h2 = _leaky(_bn_train(h2, g2_ref[...], be2_ref[...]))

        h3 = jnp.dot(h2.astype(jnp.bfloat16), f3w_ref[...],
                     preferred_element_type=jnp.float32) + f3b_ref[...]
        h3 = _leaky(_bn_train(h3, g3_ref[...], be3_ref[...]))

        h4 = jnp.dot(h3.astype(jnp.bfloat16), f4w_ref[...],
                     preferred_element_type=jnp.float32) + f4b_ref[...]
        h4 = _leaky(_bn_train(h4, g4_ref[...], be4_ref[...]))

        h5 = _leaky(jnp.dot(h4.astype(jnp.bfloat16), f5w_ref[...],
                            preferred_element_type=jnp.float32) + f5b_ref[...])

        logit = jnp.dot(h5.astype(jnp.bfloat16), bw_ref[...],
                        preferred_element_type=jnp.float32) + bb_ref[...]
        sig = 1.0 / (1.0 + jnp.exp(-logit))                        # (B, 1)
        # lane-dense store: broadcast the sigmoid column across 128 lanes
        out_ref[...] = jnp.broadcast_to(sig, out_ref.shape)


# ------------------------------ wrapper --------------------------------------
def new_idea_vae_forward(prep, input_x, output_x, key):
    """input_x / output_x: integer token grids of shape (B, 2, 4) -> seq = 8."""
    b = input_x.shape[0]
    idx_in = input_x.reshape(b, -1).astype(jnp.int32)              # (B, SEQ)
    idx_out = output_x.reshape(b, -1).astype(jnp.int32)
    seq = idx_in.shape[1]
    n_tok = 2 * seq
    assert n_tok % TK == 0
    n_k = n_tok // TK
    rows = TK * b

    # Interleave input/output per seq position (t = s*2 + half) so the latent
    # column order matches torch.cat((in_lat, out_lat), dim=2).view(B, -1)
    # and the fusion_layer1 weight needs NO reordering.
    tok = jnp.stack([idx_in, idx_out], axis=2).reshape(b, n_tok)   # (B, n_tok)
    # per grid step k, row r = t_local*B + b  (token-major within the tile)
    ids = tok.T.reshape(n_k, TK, b).reshape(n_k, rows, 1)          # int32

    # eps ~ N(0,1) for the reparameterization, streamed per tile.
    # TODO(synk): generate in-kernel (pltpu.prng_seed + random bits) at real
    # scale to avoid the HBM read entirely.
    eps = jax.random.normal(key, (n_k, rows, ENC2), jnp.float32)

    streamed = [ids, eps, prep["w1"]]
    resident = [prep["embt"],
                prep["ew1"], prep["eb1"], prep["ew2"], prep["eb2"],
                prep["wms"], prep["bms"],
                prep["fb1"], prep["bn1_g"], prep["bn1_b"],
                prep["f2w"], prep["f2b"], prep["bn2_g"], prep["bn2_b"],
                prep["f3w"], prep["f3b"], prep["bn3_g"], prep["bn3_b"],
                prep["f4w"], prep["f4b"], prep["bn4_g"], prep["bn4_b"],
                prep["f5w"], prep["f5b"],
                prep["bw"], prep["bb"]]

    in_specs = [
        pl.BlockSpec((1, rows, 1), lambda k: (k, 0, 0)),        # token ids tile
        pl.BlockSpec((1, rows, ENC2), lambda k: (k, 0, 0)),     # eps tile
        pl.BlockSpec((TK * ENC2, F1), lambda k: (k, 0)),        # w1 K-stream tile
    ] + [pl.BlockSpec(a.shape, lambda k, _nd=a.ndim: (0,) * _nd) for a in resident]

    out128 = pl.pallas_call(
        _fused_kernel,
        out_shape=jax.ShapeDtypeStruct((b, 128), jnp.float32),
        grid=(n_k,),
        in_specs=in_specs,
        out_specs=pl.BlockSpec((b, 128), lambda k: (0, 0)),
        scratch_shapes=[pltpu.VMEM((b, F1), jnp.float32)],      # layer-1 accumulator
        compiler_params=pltpu.CompilerParams(
            # K (token) axis is a reduction -> must stay sequential.
            dimension_semantics=("arbitrary",)),
        # TODO(synk): at real scale set vmem_limit_bytes per generation
        # (v7x ~40-48 MiB with 8 MiB w1 tiles, v5e/v6e 64-96 MiB with 16-32 MiB tiles).
    )(*streamed, *resident)

    # per-sample sigmoid probability, shape (B,) (matches the torch output list)
    return out128[:, 0]


# ------------------------------ parameters -----------------------------------
def _linear(key, fan_in, fan_out):
    kw, kb = jax.random.split(key)
    bound = 1.0 / jnp.sqrt(float(fan_in))
    w = jax.random.uniform(kw, (fan_in, fan_out), jnp.float32, -bound, bound)
    b = jax.random.uniform(kb, (1, fan_out), jnp.float32, -bound, bound)
    return w, b


def init_params(key):
    keys = jax.random.split(key, 16)
    p = {}
    p["embedding"] = jax.random.normal(keys[0], (VOCAB, EMB), jnp.float32)
    p["enc_w1"], p["enc_b1"] = _linear(keys[1], EMB, ENC1)
    p["enc_w2"], p["enc_b2"] = _linear(keys[2], ENC1, ENC2)
    p["mu_w"], p["mu_b"] = _linear(keys[3], ENC2, ENC2)
    p["sig_w"], p["sig_b"] = _linear(keys[4], ENC2, ENC2)
    p["f1_w"], p["f1_b"] = _linear(keys[5], FUSION_IN, F1)
    p["f2_w"], p["f2_b"] = _linear(keys[6], F1, F2)
    p["f3_w"], p["f3_b"] = _linear(keys[7], F2, F3)
    p["f4_w"], p["f4_b"] = _linear(keys[8], F3, F4)
    p["f5_w"], p["f5_b"] = _linear(keys[9], F4, F5)
    p["bin_w"], p["bin_b"] = _linear(keys[10], F5, 1)
    for i, n in zip((1, 2, 3, 4), (F1, F2, F3, F4)):
        p[f"bn{i}_g"] = jnp.ones((1, n), jnp.float32)
        p[f"bn{i}_b"] = jnp.zeros((1, n), jnp.float32)
    return p


def prepare_params(p):
    """One-time wrapper-side transforms: vocab-padded bf16 embedding table,
    mu/sigma weight fusion, bf16 cast of all MXU weights (including the tail).
    TODO(synk): int8 (v5e/v6e) / fp8 (v7x) quantization of the w1 stream."""
    bf = lambda a: a.astype(jnp.bfloat16)
    embt = jnp.zeros((VOCAB_PAD, EMB), jnp.float32).at[:VOCAB].set(p["embedding"])
    return {
        "embt": bf(embt),
        "ew1": bf(p["enc_w1"]), "eb1": p["enc_b1"],
        "ew2": bf(p["enc_w2"]), "eb2": p["enc_b2"],
        "wms": bf(jnp.concatenate([p["mu_w"], p["sig_w"]], axis=1)),
        "bms": jnp.concatenate([p["mu_b"], p["sig_b"]], axis=1),
        # fusion_layer1 weight is used as-is (rows already ordered (s, half, e));
        # it is the HBM-bound K-stream of the kernel.
        "w1": bf(p["f1_w"]), "fb1": p["f1_b"],
        "bn1_g": p["bn1_g"], "bn1_b": p["bn1_b"],
        "f2w": bf(p["f2_w"]), "f2b": p["f2_b"],
        "bn2_g": p["bn2_g"], "bn2_b": p["bn2_b"],
        "f3w": bf(p["f3_w"]), "f3b": p["f3_b"],
        "bn3_g": p["bn3_g"], "bn3_b": p["bn3_b"],
        "f4w": bf(p["f4_w"]), "f4b": p["f4_b"],
        "bn4_g": p["bn4_g"], "bn4_b": p["bn4_b"],
        "f5w": bf(p["f5_w"]), "f5b": p["f5_b"],
        "bw": bf(p["bin_w"]), "bb": p["bin_b"],
    }


# ------------------------------ main ------------------------------------------
if __name__ == "__main__":
    root = jax.random.PRNGKey(0)
    k_params, k_in, k_out, k_eps = jax.random.split(root, 4)

    params = init_params(k_params)
    prep = prepare_params(params)

    # token grids (B, 2, 4) with values in [0, VOCAB) -> flattened seq length 8
    input_x = jax.random.randint(k_in, (BATCH, 2, 4), 0, VOCAB, dtype=jnp.int32)
    output_x = jax.random.randint(k_out, (BATCH, 2, 4), 0, VOCAB, dtype=jnp.int32)

    out = new_idea_vae_forward(prep, input_x, output_x, k_eps)
    out = jax.block_until_ready(out)

    assert out.shape == (BATCH,)
    assert bool(jnp.all(jnp.isfinite(out)))
    assert bool(jnp.all((out >= 0.0) & (out <= 1.0)))
    print("KERNEL_OK")
</pallas_src>

<mosaic_0001>
module attributes {stable_mosaic.version = 11 : i64} {
  func.func @_fused_kernel(%arg0: i32, %arg1: memref<1x16x1xi32, #tpu.memory_space<vmem>>, %arg2: memref<1x16x128xf32, #tpu.memory_space<vmem>>, %arg3: memref<1024x256xbf16, #tpu.memory_space<vmem>>, %arg4: memref<128x512xbf16, #tpu.memory_space<vmem>>, %arg5: memref<512x256xbf16, #tpu.memory_space<vmem>>, %arg6: memref<1x256xf32, #tpu.memory_space<vmem>>, %arg7: memref<256x128xbf16, #tpu.memory_space<vmem>>, %arg8: memref<1x128xf32, #tpu.memory_space<vmem>>, %arg9: memref<128x256xbf16, #tpu.memory_space<vmem>>, %arg10: memref<1x256xf32, #tpu.memory_space<vmem>>, %arg11: memref<1x256xf32, #tpu.memory_space<vmem>>, %arg12: memref<1x256xf32, #tpu.memory_space<vmem>>, %arg13: memref<1x256xf32, #tpu.memory_space<vmem>>, %arg14: memref<256x128xbf16, #tpu.memory_space<vmem>>, %arg15: memref<1x128xf32, #tpu.memory_space<vmem>>, %arg16: memref<1x128xf32, #tpu.memory_space<vmem>>, %arg17: memref<1x128xf32, #tpu.memory_space<vmem>>, %arg18: memref<128x64xbf16, #tpu.memory_space<vmem>>, %arg19: memref<1x64xf32, #tpu.memory_space<vmem>>, %arg20: memref<1x64xf32, #tpu.memory_space<vmem>>, %arg21: memref<1x64xf32, #tpu.memory_space<vmem>>, %arg22: memref<64x32xbf16, #tpu.memory_space<vmem>>, %arg23: memref<1x32xf32, #tpu.memory_space<vmem>>, %arg24: memref<1x32xf32, #tpu.memory_space<vmem>>, %arg25: memref<1x32xf32, #tpu.memory_space<vmem>>, %arg26: memref<32x16xbf16, #tpu.memory_space<vmem>>, %arg27: memref<1x16xf32, #tpu.memory_space<vmem>>, %arg28: memref<16x1xbf16, #tpu.memory_space<vmem>>, %arg29: memref<1x1xf32, #tpu.memory_space<vmem>>, %arg30: memref<2x128xf32, #tpu.memory_space<vmem>>, %arg31: memref<2x256xf32, #tpu.memory_space<vmem>>) attributes {dimension_semantics = [#tpu.dimension_semantics<arbitrary>], iteration_bounds = array<i64: 2>, scalar_prefetch = 0 : i64, scratch_operands = 1 : i64, tpu.core_type = #tpu.core_type<tc>, window_params = [{transform_indices = @transform_0, window_bounds = array<i64: 1, 16, 1>}, {transform_indices = @transform_1, window_bounds = array<i64: 1, 16, 128>}, {transform_indices = @transform_2, window_bounds = array<i64: 1024, 256>}, {pipeline_mode = #tpu.pipeline_mode<synchronous>, transform_indices = @transform_3, window_bounds = array<i64: 128, 512>}, {pipeline_mode = #tpu.pipeline_mode<synchronous>, transform_indices = @transform_4, window_bounds = array<i64: 512, 256>}, {pipeline_mode = #tpu.pipeline_mode<synchronous>, transform_indices = @transform_5, window_bounds = array<i64: 1, 256>}, {pipeline_mode = #tpu.pipeline_mode<synchronous>, transform_indices = @transform_6, window_bounds = array<i64: 256, 128>}, {pipeline_mode = #tpu.pipeline_mode<synchronous>, transform_indices = @transform_7, window_bounds = array<i64: 1, 128>}, {pipeline_mode = #tpu.pipeline_mode<synchronous>, transform_indices = @transform_8, window_bounds = array<i64: 128, 256>}, {pipeline_mode = #tpu.pipeline_mode<synchronous>, transform_indices = @transform_9, window_bounds = array<i64: 1, 256>}, {pipeline_mode = #tpu.pipeline_mode<synchronous>, transform_indices = @transform_10, window_bounds = array<i64: 1, 256>}, {pipeline_mode = #tpu.pipeline_mode<synchronous>, transform_indices = @transform_11, window_bounds = array<i64: 1, 256>}, {pipeline_mode = #tpu.pipeline_mode<synchronous>, transform_indices = @transform_12, window_bounds = array<i64: 1, 256>}, {pipeline_mode = #tpu.pipeline_mode<synchronous>, transform_indices = @transform_13, window_bounds = array<i64: 256, 128>}, {pipeline_mode = #tpu.pipeline_mode<synchronous>, transform_indices = @transform_14, window_bounds = array<i64: 1, 128>}, {pipeline_mode = #tpu.pipeline_mode<synchronous>, transform_indices = @transform_15, window_bounds = array<i64: 1, 128>}, {pipeline_mode = #tpu.pipeline_mode<synchronous>, transform_indices = @transform_16, window_bounds = array<i64: 1, 128>}, {pipeline_mode = #tpu.pipeline_mode<synchronous>, transform_indices = @transform_17, window_bounds = array<i64: 128, 64>}, {pipeline_mode = #tpu.pipeline_mode<synchronous>, transform_indices = @transform_18, window_bounds = array<i64: 1, 64>}, {pipeline_mode = #tpu.pipeline_mode<synchronous>, transform_indices = @transform_19, window_bounds = array<i64: 1, 64>}, {pipeline_mode = #tpu.pipeline_mode<synchronous>, transform_indices = @transform_20, window_bounds = array<i64: 1, 64>}, {pipeline_mode = #tpu.pipeline_mode<synchronous>, transform_indices = @transform_21, window_bounds = array<i64: 64, 32>}, {pipeline_mode = #tpu.pipeline_mode<synchronous>, transform_indices = @transform_22, window_bounds = array<i64: 1, 32>}, {pipeline_mode = #tpu.pipeline_mode<synchronous>, transform_indices = @transform_23, window_bounds = array<i64: 1, 32>}, {pipeline_mode = #tpu.pipeline_mode<synchronous>, transform_indices = @transform_24, window_bounds = array<i64: 1, 32>}, {pipeline_mode = #tpu.pipeline_mode<synchronous>, transform_indices = @transform_25, window_bounds = array<i64: 32, 16>}, {pipeline_mode = #tpu.pipeline_mode<synchronous>, transform_indices = @transform_26, window_bounds = array<i64: 1, 16>}, {pipeline_mode = #tpu.pipeline_mode<synchronous>, transform_indices = @transform_27, window_bounds = array<i64: 16, 1>}, {pipeline_mode = #tpu.pipeline_mode<synchronous>, transform_indices = @transform_28, window_bounds = array<i64: 1, 1>}, {pipeline_mode = #tpu.pipeline_mode<synchronous>, transform_indices = @transform_29, window_bounds = array<i64: 2, 128>}]} {
    %c0_i32 = arith.constant 0 : i32
    %0 = arith.cmpi eq, %arg0, %c0_i32 : i32
    %1 = arith.extui %0 : i1 to i32
    %c0_i32_0 = arith.constant 0 : i32
    %2 = arith.cmpi ne, %1, %c0_i32_0 : i32
    scf.if %2 {
      %cst_34 = arith.constant 0.000000e+00 : f32
      %62 = vector.broadcast %cst_34 : f32 to vector<2x256xf32>
      %c0_35 = arith.constant 0 : index
      %c0_36 = arith.constant 0 : index
      %63 = vector.load %arg31[%c0_35, %c0_36] : memref<2x256xf32, #tpu.memory_space<vmem>>, vector<2x256xf32>
      tpu.vector_store %arg31[%c0_35, %c0_36], %62 {strides = array<i32>} : memref<2x256xf32, #tpu.memory_space<vmem>>, vector<2x256xf32>,
    } else {
    }
    %c0 = arith.constant 0 : index
    %c0_1 = arith.constant 0 : index
    %c0_2 = arith.constant 0 : index
    %3 = vector.load %arg1[%c0, %c0_1, %c0_2] : memref<1x16x1xi32, #tpu.memory_space<vmem>>, vector<1x16x1xi32>
    %4 = vector.shape_cast %3 : vector<1x16x1xi32> to vector<16x1xi32>
    %5 = tpu.iota {dimensions = array<i32: 1>} : vector<16x128xi32>
    %6 = vector.broadcast %4 : vector<16x1xi32> to vector<16x128xi32>
    %7 = arith.cmpi eq, %5, %6 : vector<16x128xi32>
    %8 = arith.extui %7 : vector<16x128xi1> to vector<16x128xi32>
    %9 = arith.sitofp %8 : vector<16x128xi32> to vector<16x128xf32>
    %10 = arith.truncf %9 : vector<16x128xf32> to vector<16x128xbf16>
    %c0_3 = arith.constant 0 : index
    %c0_4 = arith.constant 0 : index
    %11 = vector.load %arg4[%c0_3, %c0_4] : memref<128x512xbf16, #tpu.memory_space<vmem>>, vector<128x512xbf16>
    %cst = arith.constant dense<0.000000e+00> : vector<16x512xf32>
    %12 = tpu.matmul %10, %11, %cst {dimension_numbers = #tpu.dot_dimension_numbers<[1], [0], [0], [1], [0, 0, 1, 1], [], []>} : vector<16x128xbf16>, vector<128x512xbf16>, vector<16x512xf32> -> vector<16x512xf32>
    %13 = arith.truncf %12 : vector<16x512xf32> to vector<16x512xbf16>
    %c0_5 = arith.constant 0 : index
    %c0_6 = arith.constant 0 : index
    %14 = vector.load %arg5[%c0_5, %c0_6] : memref<512x256xbf16, #tpu.memory_space<vmem>>, vector<512x256xbf16>
    %cst_7 = arith.constant dense<0.000000e+00> : vector<16x256xf32>
    %15 = tpu.matmul %13, %14, %cst_7 {dimension_numbers = #tpu.dot_dimension_numbers<[1], [0], [0], [1], [0, 0, 1, 1], [], []>} : vector<16x512xbf16>, vector<512x256xbf16>, vector<16x256xf32> -> vector<16x256xf32>
    %c0_8 = arith.constant 0 : index
    %c0_9 = arith.constant 0 : index
    %16 = vector.load %arg6[%c0_8, %c0_9] : memref<1x256xf32, #tpu.memory_space<vmem>>, vector<1x256xf32>
    %17 = vector.broadcast %16 : vector<1x256xf32> to vector<16x256xf32>
    %18 = arith.addf %15, %17 : vector<16x256xf32>
    %cst_10 = arith.constant 0.000000e+00 : f32
    %19 = vector.broadcast %cst_10 : f32 to vector<16x256xf32>
    %20 = arith.maximumf %18, %19 : vector<16x256xf32>
    %21 = arith.truncf %20 : vector<16x256xf32> to vector<16x256xbf16>
    %c0_11 = arith.constant 0 : index
    %c0_12 = arith.constant 0 : index
    %22 = vector.load %arg7[%c0_11, %c0_12] : memref<256x128xbf16, #tpu.memory_space<vmem>>, vector<256x128xbf16>
    %cst_13 = arith.constant dense<0.000000e+00> : vector<16x128xf32>
    %23 = tpu.matmul %21, %22, %cst_13 {dimension_numbers = #tpu.dot_dimension_numbers<[1], [0], [0], [1], [0, 0, 1, 1], [], []>} : vector<16x256xbf16>, vector<256x128xbf16>, vector<16x128xf32> -> vector<16x128xf32>
    %c0_14 = arith.constant 0 : index
    %c0_15 = arith.constant 0 : index
    %24 = vector.load %arg8[%c0_14, %c0_15] : memref<1x128xf32, #tpu.memory_space<vmem>>, vector<1x128xf32>
    %25 = vector.broadcast %24 : vector<1x128xf32> to vector<16x128xf32>
    %26 = arith.addf %23, %25 : vector<16x128xf32>
    %cst_16 = arith.constant 0.000000e+00 : f32
    %27 = vector.broadcast %cst_16 : f32 to vector<16x128xf32>
    %28 = arith.maximumf %26, %27 : vector<16x128xf32>
    %29 = arith.truncf %28 : vector<16x128xf32> to vector<16x128xbf16>
    %c0_17 = arith.constant 0 : index
    %c0_18 = arith.constant 0 : index
    %30 = vector.load %arg9[%c0_17, %c0_18] : memref<128x256xbf16, #tpu.memory_space<vmem>>, vector<128x256xbf16>
    %cst_19 = arith.constant dense<0.000000e+00> : vector<16x256xf32>
    %31 = tpu.matmul %29, %30, %cst_19 {dimension_numbers = #tpu.dot_dimension_numbers<[1], [0], [0], [1], [0, 0, 1, 1], [], []>} : vector<16x128xbf16>, vector<128x256xbf16>, vector<16x256xf32> -> vector<16x256xf32>
    %c0_20 = arith.constant 0 : index
    %c0_21 = arith.constant 0 : index
    %32 = vector.load %arg10[%c0_20, %c0_21] : memref<1x256xf32, #tpu.memory_space<vmem>>, vector<1x256xf32>
    %33 = vector.broadcast %32 : vector<1x256xf32> to vector<16x256xf32>
    %34 = arith.addf %31, %33 : vector<16x256xf32>
    %35 = vector.extract_strided_slice %34 {offsets = [0, 0], sizes = [16, 128], strides = [1, 1]} : vector<16x256xf32> to vector<16x128xf32>
    %36 = vector.extract_strided_slice %34 {offsets = [0, 128], sizes = [16, 128], strides = [1, 1]} : vector<16x256xf32> to vector<16x128xf32>
    %cst_22 = arith.constant 5.000000e-01 : f32
    %37 = vector.broadcast %cst_22 : f32 to vector<16x128xf32>
    %38 = arith.mulf %37, %36 : vector<16x128xf32>
    %39 = math.exp %38 : vector<16x128xf32>
    %c0_23 = arith.constant 0 : index
    %c0_24 = arith.constant 0 : index
    %c0_25 = arith.constant 0 : index
    %40 = vector.load %arg2[%c0_23, %c0_24, %c0_25] : memref<1x16x128xf32, #tpu.memory_space<vmem>>, vector<1x16x128xf32>
    %41 = vector.shape_cast %40 : vector<1x16x128xf32> to vector<16x128xf32>
    %42 = arith.mulf %39, %41 : vector<16x128xf32>
    %43 = arith.addf %35, %42 : vector<16x128xf32>
    %44 = vector.extract_strided_slice %43 {offsets = [0, 0], sizes = [2, 128], strides = [1, 1]} : vector<16x128xf32> to vector<2x128xf32>
    %45 = vector.extract_strided_slice %43 {offsets = [2, 0], sizes = [2, 128], strides = [1, 1]} : vector<16x128xf32> to vector<2x128xf32>
    %46 = vector.extract_strided_slice %43 {offsets = [4, 0], sizes = [2, 128], strides = [1, 1]} : vector<16x128xf32> to vector<2x128xf32>
    %47 = vector.extract_strided_slice %43 {offsets = [6, 0], sizes = [2, 128], strides = [1, 1]} : vector<16x128xf32> to vector<2x128xf32>
    %48 = vector.extract_strided_slice %43 {offsets = [8, 0], sizes = [2, 128], strides = [1, 1]} : vector<16x128xf32> to vector<2x128xf32>
    %49 = vector.extract_strided_slice %43 {offsets = [10, 0], sizes = [2, 128], strides = [1, 1]} : vector<16x128xf32> to vector<2x128xf32>
    %50 = vector.extract_strided_slice %43 {offsets = [12, 0], sizes = [2, 128], strides = [1, 1]} : vector<16x128xf32> to vector<2x128xf32>
    %51 = vector.extract_strided_slice %43 {offsets = [14, 0], sizes = [2, 128], strides = [1, 1]} : vector<16x128xf32> to vector<2x128xf32>
    %52 = tpu.concatenate %44, %45, %46, %47, %48, %49, %50, %51 in 1 : vector<2x128xf32>, vector<2x128xf32>, vector<2x128xf32>, vector<2x128xf32>, vector<2x128xf32>, vector<2x128xf32>, vector<2x128xf32>, vector<2x128xf32> -> vector<2x1024xf32>
    %53 = arith.truncf %52 : vector<2x1024xf32> to vector<2x1024xbf16>
    %c0_26 = arith.constant 0 : index
    %c0_27 = arith.constant 0 : index
    %54 = vector.load %arg31[%c0_26, %c0_27] : memref<2x256xf32, #tpu.memory_space<vmem>>, vector<2x256xf32>
    %c0_28 = arith.constant 0 : index
    %c0_29 = arith.constant 0 : index
    %55 = vector.load %arg3[%c0_28, %c0_29] : memref<1024x256xbf16, #tpu.memory_space<vmem>>, vector<1024x256xbf16>
    %cst_30 = arith.constant dense<0.000000e+00> : vector<2x256xf32>
    %56 = tpu.matmul %53, %55, %cst_30 {dimension_numbers = #tpu.dot_dimension_numbers<[1], [0], [0], [1], [0, 0, 1, 1], [], []>} : vector<2x1024xbf16>, vector<1024x256xbf16>, vector<2x256xf32> -> vector<2x256xf32>
    %57 = arith.addf %54, %56 : vector<2x256xf32>
    %c0_31 = arith.constant 0 : index
    %c0_32 = arith.constant 0 : index
    %58 = vector.load %arg31[%c0_31, %c0_32] : memref<2x256xf32, #tpu.memory_space<vmem>>, vector<2x256xf32>
    tpu.vector_store %arg31[%c0_31, %c0_32], %57 {strides = array<i32>} : memref<2x256xf32, #tpu.memory_space<vmem>>, vector<2x256xf32>,
    %c1_i32 = arith.constant 1 : i32
    %59 = arith.cmpi eq, %arg0, %c1_i32 : i32
    %60 = arith.extui %59 : i1 to i32
    %c0_i32_33 = arith.constant 0 : i32
    %61 = arith.cmpi ne, %60, %c0_i32_33 : i32
    scf.if %61 {
      %c0_34 = arith.constant 0 : index
      %c0_35 = arith.constant 0 : index
      %62 = vector.load %arg31[%c0_34, %c0_35] : memref<2x256xf32, #tpu.memory_space<vmem>>, vector<2x256xf32>
      %c0_36 = arith.constant 0 : index
      %c0_37 = arith.constant 0 : index
      %63 = vector.load %arg11[%c0_36, %c0_37] : memref<1x256xf32, #tpu.memory_space<vmem>>, vector<1x256xf32>
      %64 = vector.broadcast %63 : vector<1x256xf32> to vector<2x256xf32>
      %65 = arith.addf %62, %64 : vector<2x256xf32>
      %c0_38 = arith.constant 0 : index
      %c0_39 = arith.constant 0 : index
      %66 = vector.load %arg12[%c0_38, %c0_39] : memref<1x256xf32, #tpu.memory_space<vmem>>, vector<1x256xf32>
      %c0_40 = arith.constant 0 : index
      %c0_41 = arith.constant 0 : index
      %67 = vector.load %arg13[%c0_40, %c0_41] : memref<1x256xf32, #tpu.memory_space<vmem>>, vector<1x256xf32>
      %cst_42 = arith.constant dense<0.000000e+00> : vector<256xf32>
      %68 = vector.multi_reduction <add>, %65, %cst_42 [0] : vector<2x256xf32> to vector<256xf32>
      %69 = vector.shape_cast %68 : vector<256xf32> to vector<1x256xf32>
      %cst_43 = arith.constant 2.000000e+00 : f32
      %70 = vector.broadcast %cst_43 : f32 to vector<1x256xf32>
      %71 = arith.divf %69, %70 : vector<1x256xf32>
      %72 = vector.broadcast %71 : vector<1x256xf32> to vector<2x256xf32>
      %73 = arith.subf %65, %72 : vector<2x256xf32>
      %74 = arith.mulf %73, %73 : vector<2x256xf32>
      %cst_44 = arith.constant dense<0.000000e+00> : vector<256xf32>
      %75 = vector.multi_reduction <add>, %74, %cst_44 [0] : vector<2x256xf32> to vector<256xf32>
      %76 = vector.shape_cast %75 : vector<256xf32> to vector<1x256xf32>
      %cst_45 = arith.constant 2.000000e+00 : f32
      %77 = vector.broadcast %cst_45 : f32 to vector<1x256xf32>
      %78 = arith.divf %76, %77 : vector<1x256xf32>
      %79 = vector.broadcast %71 : vector<1x256xf32> to vector<2x256xf32>
      %80 = arith.subf %65, %79 : vector<2x256xf32>
      %81 = vector.broadcast %66 : vector<1x256xf32> to vector<2x256xf32>
      %82 = arith.mulf %81, %80 : vector<2x256xf32>
      %cst_46 = arith.constant 9.99999974E-6 : f32
      %83 = vector.broadcast %cst_46 : f32 to vector<1x256xf32>
      %84 = arith.addf %78, %83 : vector<1x256xf32>
      %85 = math.rsqrt %84 : vector<1x256xf32>
      %86 = vector.broadcast %85 : vector<1x256xf32> to vector<2x256xf32>
      %87 = arith.mulf %82, %86 : vector<2x256xf32>
      %88 = vector.broadcast %67 : vector<1x256xf32> to vector<2x256xf32>
      %89 = arith.addf %87, %88 : vector<2x256xf32>
      %cst_47 = arith.constant 0.000000e+00 : f32
      %90 = vector.broadcast %cst_47 : f32 to vector<2x256xf32>
      %91 = arith.cmpf oge, %89, %90 : vector<2x256xf32>
      %cst_48 = arith.constant 0.00999999977 : f32
      %92 = vector.broadcast %cst_48 : f32 to vector<2x256xf32>
      %93 = arith.mulf %92, %89 : vector<2x256xf32>
      %94 = arith.select %91, %89, %93 : vector<2x256xi1>, vector<2x256xf32>
      %95 = arith.truncf %94 : vector<2x256xf32> to vector<2x256xbf16>
      %c0_49 = arith.constant 0 : index
      %c0_50 = arith.constant 0 : index
      %96 = vector.load %arg14[%c0_49, %c0_50] : memref<256x128xbf16, #tpu.memory_space<vmem>>, vector<256x128xbf16>
      %cst_51 = arith.constant dense<0.000000e+00> : vector<2x128xf32>
      %97 = tpu.matmul %95, %96, %cst_51 {dimension_numbers = #tpu.dot_dimension_numbers<[1], [0], [0], [1], [0, 0, 1, 1], [], []>} : vector<2x256xbf16>, vector<256x128xbf16>, vector<2x128xf32> -> vector<2x128xf32>
      %c0_52 = arith.constant 0 : index
      %c0_53 = arith.constant 0 : index
      %98 = vector.load %arg15[%c0_52, %c0_53] : memref<1x128xf32, #tpu.memory_space<vmem>>, vector<1x128xf32>
      %99 = vector.broadcast %98 : vector<1x128xf32> to vector<2x128xf32>
      %100 = arith.addf %97, %99 : vector<2x128xf32>
      %c0_54 = arith.constant 0 : index
      %c0_55 = arith.constant 0 : index
      %101 = vector.load %arg16[%c0_54, %c0_55] : memref<1x128xf32, #tpu.memory_space<vmem>>, vector<1x128xf32>
      %c0_56 = arith.constant 0 : index
      %c0_57 = arith.constant 0 : index
      %102 = vector.load %arg17[%c0_56, %c0_57] : memref<1x128xf32, #tpu.memory_space<vmem>>, vector<1x128xf32>
      %cst_58 = arith.constant dense<0.000000e+00> : vector<128xf32>
      %103 = vector.multi_reduction <add>, %100, %cst_58 [0] : vector<2x128xf32> to vector<128xf32>
      %104 = vector.shape_cast %103 : vector<128xf32> to vector<1x128xf32>
      %cst_59 = arith.constant 2.000000e+00 : f32
      %105 = vector.broadcast %cst_59 : f32 to vector<1x128xf32>
      %106 = arith.divf %104, %105 : vector<1x128xf32>
      %107 = vector.broadcast %106 : vector<1x128xf32> to vector<2x128xf32>
      %108 = arith.subf %100, %107 : vector<2x128xf32>
      %109 = arith.mulf %108, %108 : vector<2x128xf32>
      %cst_60 = arith.constant dense<0.000000e+00> : vector<128xf32>
      %110 = vector.multi_reduction <add>, %109, %cst_60 [0] : vector<2x128xf32> to vector<128xf32>
      %111 = vector.shape_cast %110 : vector<128xf32> to vector<1x128xf32>
      %cst_61 = arith.constant 2.000000e+00 : f32
      %112 = vector.broadcast %cst_61 : f32 to vector<1x128xf32>
      %113 = arith.divf %111, %112 : vector<1x128xf32>
      %114 = vector.broadcast %106 : vector<1x128xf32> to vector<2x128xf32>
      %115 = arith.subf %100, %114 : vector<2x128xf32>
      %116 = vector.broadcast %101 : vector<1x128xf32> to vector<2x128xf32>
      %117 = arith.mulf %116, %115 : vector<2x128xf32>
      %cst_62 = arith.constant 9.99999974E-6 : f32
      %118 = vector.broadcast %cst_62 : f32 to vector<1x128xf32>
      %119 = arith.addf %113, %118 : vector<1x128xf32>
      %120 = math.rsqrt %119 : vector<1x128xf32>
      %121 = vector.broadcast %120 : vector<1x128xf32> to vector<2x128xf32>
      %122 = arith.mulf %117, %121 : vector<2x128xf32>
      %123 = vector.broadcast %102 : vector<1x128xf32> to vector<2x128xf32>
      %124 = arith.addf %122, %123 : vector<2x128xf32>
      %cst_63 = arith.constant 0.000000e+00 : f32
      %125 = vector.broadcast %cst_63 : f32 to vector<2x128xf32>
      %126 = arith.cmpf oge, %124, %125 : vector<2x128xf32>
      %cst_64 = arith.constant 0.00999999977 : f32
      %127 = vector.broadcast %cst_64 : f32 to vector<2x128xf32>
      %128 = arith.mulf %127, %124 : vector<2x128xf32>
      %129 = arith.select %126, %124, %128 : vector<2x128xi1>, vector<2x128xf32>
      %130 = arith.truncf %129 : vector<2x128xf32> to vector<2x128xbf16>
      %c0_65 = arith.constant 0 : index
      %c0_66 = arith.constant 0 : index
      %131 = vector.load %arg18[%c0_65, %c0_66] : memref<128x64xbf16, #tpu.memory_space<vmem>>, vector<128x64xbf16>
      %cst_67 = arith.constant dense<0.000000e+00> : vector<2x64xf32>
      %132 = tpu.matmul %130, %131, %cst_67 {dimension_numbers = #tpu.dot_dimension_numbers<[1], [0], [0], [1], [0, 0, 1, 1], [], []>} : vector<2x128xbf16>, vector<128x64xbf16>, vector<2x64xf32> -> vector<2x64xf32>
      %c0_68 = arith.constant 0 : index
      %c0_69 = arith.constant 0 : index
      %133 = vector.load %arg19[%c0_68, %c0_69] : memref<1x64xf32, #tpu.memory_space<vmem>>, vector<1x64xf32>
      %134 = vector.broadcast %133 : vector<1x64xf32> to vector<2x64xf32>
      %135 = arith.addf %132, %134 : vector<2x64xf32>
      %c0_70 = arith.constant 0 : index
      %c0_71 = arith.constant 0 : index
      %136 = vector.load %arg20[%c0_70, %c0_71] : memref<1x64xf32, #tpu.memory_space<vmem>>, vector<1x64xf32>
      %c0_72 = arith.constant 0 : index
      %c0_73 = arith.constant 0 : index
      %137 = vector.load %arg21[%c0_72, %c0_73] : memref<1x64xf32, #tpu.memory_space<vmem>>, vector<1x64xf32>
      %cst_74 = arith.constant dense<0.000000e+00> : vector<64xf32>
      %138 = vector.multi_reduction <add>, %135, %cst_74 [0] : vector<2x64xf32> to vector<64xf32>
      %139 = vector.shape_cast %138 : vector<64xf32> to vector<1x64xf32>
      %cst_75 = arith.constant 2.000000e+00 : f32
      %140 = vector.broadcast %cst_75 : f32 to vector<1x64xf32>
      %141 = arith.divf %139, %140 : vector<1x64xf32>
      %142 = vector.broadcast %141 : vector<1x64xf32> to vector<2x64xf32>
      %143 = arith.subf %135, %142 : vector<2x64xf32>
      %144 = arith.mulf %143, %143 : vector<2x64xf32>
      %cst_76 = arith.constant dense<0.000000e+00> : vector<64xf32>
      %145 = vector.multi_reduction <add>, %144, %cst_76 [0] : vector<2x64xf32> to vector<64xf32>
      %146 = vector.shape_cast %145 : vector<64xf32> to vector<1x64xf32>
      %cst_77 = arith.constant 2.000000e+00 : f32
      %147 = vector.broadcast %cst_77 : f32 to vector<1x64xf32>
      %148 = arith.divf %146, %147 : vector<1x64xf32>
      %149 = vector.broadcast %141 : vector<1x64xf32> to vector<2x64xf32>
      %150 = arith.subf %135, %149 : vector<2x64xf32>
      %151 = vector.broadcast %136 : vector<1x64xf32> to vector<2x64xf32>
      %152 = arith.mulf %151, %150 : vector<2x64xf32>
      %cst_78 = arith.constant 9.99999974E-6 : f32
      %153 = vector.broadcast %cst_78 : f32 to vector<1x64xf32>
      %154 = arith.addf %148, %153 : vector<1x64xf32>
      %155 = math.rsqrt %154 : vector<1x64xf32>
      %156 = vector.broadcast %155 : vector<1x64xf32> to vector<2x64xf32>
      %157 = arith.mulf %152, %156 : vector<2x64xf32>
      %158 = vector.broadcast %137 : vector<1x64xf32> to vector<2x64xf32>
      %159 = arith.addf %157, %158 : vector<2x64xf32>
      %cst_79 = arith.constant 0.000000e+00 : f32
      %160 = vector.broadcast %cst_79 : f32 to vector<2x64xf32>
      %161 = arith.cmpf oge, %159, %160 : vector<2x64xf32>
      %cst_80 = arith.constant 0.00999999977 : f32
      %162 = vector.broadcast %cst_80 : f32 to vector<2x64xf32>
      %163 = arith.mulf %162, %159 : vector<2x64xf32>
      %164 = arith.select %161, %159, %163 : vector<2x64xi1>, vector<2x64xf32>
      %165 = arith.truncf %164 : vector<2x64xf32> to vector<2x64xbf16>
      %c0_81 = arith.constant 0 : index
      %c0_82 = arith.constant 0 : index
      %166 = vector.load %arg22[%c0_81, %c0_82] : memref<64x32xbf16, #tpu.memory_space<vmem>>, vector<64x32xbf16>
      %cst_83 = arith.constant dense<0.000000e+00> : vector<2x32xf32>
      %167 = tpu.matmul %165, %166, %cst_83 {dimension_numbers = #tpu.dot_dimension_numbers<[1], [0], [0], [1], [0, 0, 1, 1], [], []>} : vector<2x64xbf16>, vector<64x32xbf16>, vector<2x32xf32> -> vector<2x32xf32>
      %c0_84 = arith.constant 0 : index
      %c0_85 = arith.constant 0 : index
      %168 = vector.load %arg23[%c0_84, %c0_85] : memref<1x32xf32, #tpu.memory_space<vmem>>, vector<1x32xf32>
      %169 = vector.broadcast %168 : vector<1x32xf32> to vector<2x32xf32>
      %170 = arith.addf %167, %169 : vector<2x32xf32>
      %c0_86 = arith.constant 0 : index
      %c0_87 = arith.constant 0 : index
      %171 = vector.load %arg24[%c0_86, %c0_87] : memref<1x32xf32, #tpu.memory_space<vmem>>, vector<1x32xf32>
      %c0_88 = arith.constant 0 : index
      %c0_89 = arith.constant 0 : index
      %172 = vector.load %arg25[%c0_88, %c0_89] : memref<1x32xf32, #tpu.memory_space<vmem>>, vector<1x32xf32>
      %cst_90 = arith.constant dense<0.000000e+00> : vector<32xf32>
      %173 = vector.multi_reduction <add>, %170, %cst_90 [0] : vector<2x32xf32> to vector<32xf32>
      %174 = vector.shape_cast %173 : vector<32xf32> to vector<1x32xf32>
      %cst_91 = arith.constant 2.000000e+00 : f32
      %175 = vector.broadcast %cst_91 : f32 to vector<1x32xf32>
      %176 = arith.divf %174, %175 : vector<1x32xf32>
      %177 = vector.broadcast %176 : vector<1x32xf32> to vector<2x32xf32>
      %178 = arith.subf %170, %177 : vector<2x32xf32>
      %179 = arith.mulf %178, %178 : vector<2x32xf32>
      %cst_92 = arith.constant dense<0.000000e+00> : vector<32xf32>
      %180 = vector.multi_reduction <add>, %179, %cst_92 [0] : vector<2x32xf32> to vector<32xf32>
      %181 = vector.shape_cast %180 : vector<32xf32> to vector<1x32xf32>
      %cst_93 = arith.constant 2.000000e+00 : f32
      %182 = vector.broadcast %cst_93 : f32 to vector<1x32xf32>
      %183 = arith.divf %181, %182 : vector<1x32xf32>
      %184 = vector.broadcast %176 : vector<1x32xf32> to vector<2x32xf32>
      %185 = arith.subf %170, %184 : vector<2x32xf32>
      %186 = vector.broadcast %171 : vector<1x32xf32> to vector<2x32xf32>
      %187 = arith.mulf %186, %185 : vector<2x32xf32>
      %cst_94 = arith.constant 9.99999974E-6 : f32
      %188 = vector.broadcast %cst_94 : f32 to vector<1x32xf32>
      %189 = arith.addf %183, %188 : vector<1x32xf32>
      %190 = math.rsqrt %189 : vector<1x32xf32>
      %191 = vector.broadcast %190 : vector<1x32xf32> to vector<2x32xf32>
      %192 = arith.mulf %187, %191 : vector<2x32xf32>
      %193 = vector.broadcast %172 : vector<1x32xf32> to vector<2x32xf32>
      %194 = arith.addf %192, %193 : vector<2x32xf32>
      %cst_95 = arith.constant 0.000000e+00 : f32
      %195 = vector.broadcast %cst_95 : f32 to vector<2x32xf32>
      %196 = arith.cmpf oge, %194, %195 : vector<2x32xf32>
      %cst_96 = arith.constant 0.00999999977 : f32
      %197 = vector.broadcast %cst_96 : f32 to vector<2x32xf32>
      %198 = arith.mulf %197, %194 : vector<2x32xf32>
      %199 = arith.select %196, %194, %198 : vector<2x32xi1>, vector<2x32xf32>
      %200 = arith.truncf %199 : vector<2x32xf32> to vector<2x32xbf16>
      %c0_97 = arith.constant 0 : index
      %c0_98 = arith.constant 0 : index
      %201 = vector.load %arg26[%c0_97, %c0_98] : memref<32x16xbf16, #tpu.memory_space<vmem>>, vector<32x16xbf16>
      %cst_99 = arith.constant dense<0.000000e+00> : vector<2x16xf32>
      %202 = tpu.matmul %200, %201, %cst_99 {dimension_numbers = #tpu.dot_dimension_numbers<[1], [0], [0], [1], [0, 0, 1, 1], [], []>} : vector<2x32xbf16>, vector<32x16xbf16>, vector<2x16xf32> -> vector<2x16xf32>
      %c0_100 = arith.constant 0 : index
      %c0_101 = arith.constant 0 : index
      %203 = vector.load %arg27[%c0_100, %c0_101] : memref<1x16xf32, #tpu.memory_space<vmem>>, vector<1x16xf32>
      %204 = vector.broadcast %203 : vector<1x16xf32> to vector<2x16xf32>
      %205 = arith.addf %202, %204 : vector<2x16xf32>
      %cst_102 = arith.constant 0.000000e+00 : f32
      %206 = vector.broadcast %cst_102 : f32 to vector<2x16xf32>
      %207 = arith.cmpf oge, %205, %206 : vector<2x16xf32>
      %cst_103 = arith.constant 0.00999999977 : f32
      %208 = vector.broadcast %cst_103 : f32 to vector<2x16xf32>
      %209 = arith.mulf %208, %205 : vector<2x16xf32>
      %210 = arith.select %207, %205, %209 : vector<2x16xi1>, vector<2x16xf32>
      %211 = arith.truncf %210 : vector<2x16xf32> to vector<2x16xbf16>
      %c0_104 = arith.constant 0 : index
      %c0_105 = arith.constant 0 : index
      %212 = vector.load %arg28[%c0_104, %c0_105] : memref<16x1xbf16, #tpu.memory_space<vmem>>, vector<16x1xbf16>
      %cst_106 = arith.constant dense<0.000000e+00> : vector<2x1xf32>
      %213 = tpu.matmul %211, %212, %cst_106 {dimension_numbers = #tpu.dot_dimension_numbers<[1], [0], [0], [1], [0, 0, 1, 1], [], []>} : vector<2x16xbf16>, vector<16x1xbf16>, vector<2x1xf32> -> vector<2x1xf32>
      %c0_107 = arith.constant 0 : index
      %c0_108 = arith.constant 0 : index
      %214 = vector.load %arg29[%c0_107, %c0_108] : memref<1x1xf32, #tpu.memory_space<vmem>>, vector<1x1xf32>
      %215 = vector.broadcast %214 : vector<1x1xf32> to vector<2x1xf32>
      %216 = arith.addf %213, %215 : vector<2x1xf32>
      %cst_109 = arith.constant 0.000000e+00 : f32
      %217 = vector.broadcast %cst_109 : f32 to vector<2x1xf32>
      %218 = arith.subf %217, %216 : vector<2x1xf32>
      %219 = math.exp %218 : vector<2x1xf32>
      %cst_110 = arith.constant 1.000000e+00 : f32
      %220 = vector.broadcast %cst_110 : f32 to vector<2x1xf32>
      %221 = arith.addf %220, %219 : vector<2x1xf32>
      %cst_111 = arith.constant 1.000000e+00 : f32
      %222 = vector.broadcast %cst_111 : f32 to vector<2x1xf32>
      %223 = arith.divf %222, %221 : vector<2x1xf32>
      %224 = vector.shape_cast %223 : vector<2x1xf32> to vector<2x1xf32>
      %225 = vector.broadcast %224 : vector<2x1xf32> to vector<2x128xf32>
      %c0_112 = arith.constant 0 : index
      %c0_113 = arith.constant 0 : index
      %226 = vector.load %arg30[%c0_112, %c0_113] : memref<2x128xf32, #tpu.memory_space<vmem>>, vector<2x128xf32>
      tpu.vector_store %arg30[%c0_112, %c0_113], %225 {strides = array<i32>} : memref<2x128xf32, #tpu.memory_space<vmem>>, vector<2x128xf32>,
    } else {
    }
    return
  }
  func.func @transform_0(%arg0: i32) -> (i32, i32, i32) {
    %c0_i32 = arith.constant 0 : i32
    %c0_i32_0 = arith.constant 0 : i32
    %c0_i32_1 = arith.constant 0 : i32
    return %arg0, %c0_i32, %c0_i32_0 : i32, i32, i32
  }
  func.func @transform_1(%arg0: i32) -> (i32, i32, i32) {
    %c0_i32 = arith.constant 0 : i32
    %c0_i32_0 = arith.constant 0 : i32
    %c0_i32_1 = arith.constant 0 : i32
    return %arg0, %c0_i32, %c0_i32_0 : i32, i32, i32
  }
  func.func @transform_2(%arg0: i32) -> (i32, i32) {
    %c0_i32 = arith.constant 0 : i32
    %c0_i32_0 = arith.constant 0 : i32
    return %arg0, %c0_i32 : i32, i32
  }
  func.func @transform_3(%arg0: i32) -> (i32, i32) {
    %c0_i32 = arith.constant 0 : i32
    %c0_i32_0 = arith.constant 0 : i32
    %c0_i32_1 = arith.constant 0 : i32
    return %c0_i32, %c0_i32_0 : i32, i32
  }
  func.func @transform_4(%arg0: i32) -> (i32, i32) {
    %c0_i32 = arith.constant 0 : i32
    %c0_i32_0 = arith.constant 0 : i32
    %c0_i32_1 = arith.constant 0 : i32
    return %c0_i32, %c0_i32_0 : i32, i32
  }
  func.func @transform_5(%arg0: i32) -> (i32, i32) {
    %c0_i32 = arith.constant 0 : i32
    %c0_i32_0 = arith.constant 0 : i32
    %c0_i32_1 = arith.constant 0 : i32
    return %c0_i32, %c0_i32_0 : i32, i32
  }
  func.func @transform_6(%arg0: i32) -> (i32, i32) {
    %c0_i32 = arith.constant 0 : i32
    %c0_i32_0 = arith.constant 0 : i32
    %c0_i32_1 = arith.constant 0 : i32
    return %c0_i32, %c0_i32_0 : i32, i32
  }
  func.func @transform_7(%arg0: i32) -> (i32, i32) {
    %c0_i32 = arith.constant 0 : i32
    %c0_i32_0 = arith.constant 0 : i32
    %c0_i32_1 = arith.constant 0 : i32
    return %c0_i32, %c0_i32_0 : i32, i32
  }
  func.func @transform_8(%arg0: i32) -> (i32, i32) {
    %c0_i32 = arith.constant 0 : i32
    %c0_i32_0 = arith.constant 0 : i32
    %c0_i32_1 = arith.constant 0 : i32
    return %c0_i32, %c0_i32_0 : i32, i32
  }
  func.func @transform_9(%arg0: i32) -> (i32, i32) {
    %c0_i32 = arith.constant 0 : i32
    %c0_i32_0 = arith.constant 0 : i32
    %c0_i32_1 = arith.constant 0 : i32
    return %c0_i32, %c0_i32_0 : i32, i32
  }
  func.func @transform_10(%arg0: i32) -> (i32, i32) {
    %c0_i32 = arith.constant 0 : i32
    %c0_i32_0 = arith.constant 0 : i32
    %c0_i32_1 = arith.constant 0 : i32
    return %c0_i32, %c0_i32_0 : i32, i32
  }
  func.func @transform_11(%arg0: i32) -> (i32, i32) {
    %c0_i32 = arith.constant 0 : i32
    %c0_i32_0 = arith.constant 0 : i32
    %c0_i32_1 = arith.constant 0 : i32
    return %c0_i32, %c0_i32_0 : i32, i32
  }
  func.func @transform_12(%arg0: i32) -> (i32, i32) {
    %c0_i32 = arith.constant 0 : i32
    %c0_i32_0 = arith.constant 0 : i32
    %c0_i32_1 = arith.constant 0 : i32
    return %c0_i32, %c0_i32_0 : i32, i32
  }
  func.func @transform_13(%arg0: i32) -> (i32, i32) {
    %c0_i32 = arith.constant 0 : i32
    %c0_i32_0 = arith.constant 0 : i32
    %c0_i32_1 = arith.constant 0 : i32
    return %c0_i32, %c0_i32_0 : i32, i32
  }
  func.func @transform_14(%arg0: i32) -> (i32, i32) {
    %c0_i32 = arith.constant 0 : i32
    %c0_i32_0 = arith.constant 0 : i32
    %c0_i32_1 = arith.constant 0 : i32
    return %c0_i32, %c0_i32_0 : i32, i32
  }
  func.func @transform_15(%arg0: i32) -> (i32, i32) {
    %c0_i32 = arith.constant 0 : i32
    %c0_i32_0 = arith.constant 0 : i32
    %c0_i32_1 = arith.constant 0 : i32
    return %c0_i32, %c0_i32_0 : i32, i32
  }
  func.func @transform_16(%arg0: i32) -> (i32, i32) {
    %c0_i32 = arith.constant 0 : i32
    %c0_i32_0 = arith.constant 0 : i32
    %c0_i32_1 = arith.constant 0 : i32
    return %c0_i32, %c0_i32_0 : i32, i32
  }
  func.func @transform_17(%arg0: i32) -> (i32, i32) {
    %c0_i32 = arith.constant 0 : i32
    %c0_i32_0 = arith.constant 0 : i32
    %c0_i32_1 = arith.constant 0 : i32
    return %c0_i32, %c0_i32_0 : i32, i32
  }
  func.func @transform_18(%arg0: i32) -> (i32, i32) {
    %c0_i32 = arith.constant 0 : i32
    %c0_i32_0 = arith.constant 0 : i32
    %c0_i32_1 = arith.constant 0 : i32
    return %c0_i32, %c0_i32_0 : i32, i32
  }
  func.func @transform_19(%arg0: i32) -> (i32, i32) {
    %c0_i32 = arith.constant 0 : i32
    %c0_i32_0 = arith.constant 0 : i32
    %c0_i32_1 = arith.constant 0 : i32
    return %c0_i32, %c0_i32_0 : i32, i32
  }
  func.func @transform_20(%arg0: i32) -> (i32, i32) {
    %c0_i32 = arith.constant 0 : i32
    %c0_i32_0 = arith.constant 0 : i32
    %c0_i32_1 = arith.constant 0 : i32
    return %c0_i32, %c0_i32_0 : i32, i32
  }
  func.func @transform_21(%arg0: i32) -> (i32, i32) {
    %c0_i32 = arith.constant 0 : i32
    %c0_i32_0 = arith.constant 0 : i32
    %c0_i32_1 = arith.constant 0 : i32
    return %c0_i32, %c0_i32_0 : i32, i32
  }
  func.func @transform_22(%arg0: i32) -> (i32, i32) {
    %c0_i32 = arith.constant 0 : i32
    %c0_i32_0 = arith.constant 0 : i32
    %c0_i32_1 = arith.constant 0 : i32
    return %c0_i32, %c0_i32_0 : i32, i32
  }
  func.func @transform_23(%arg0: i32) -> (i32, i32) {
    %c0_i32 = arith.constant 0 : i32
    %c0_i32_0 = arith.constant 0 : i32
    %c0_i32_1 = arith.constant 0 : i32
    return %c0_i32, %c0_i32_0 : i32, i32
  }
  func.func @transform_24(%arg0: i32) -> (i32, i32) {
    %c0_i32 = arith.constant 0 : i32
    %c0_i32_0 = arith.constant 0 : i32
    %c0_i32_1 = arith.constant 0 : i32
    return %c0_i32, %c0_i32_0 : i32, i32
  }
  func.func @transform_25(%arg0: i32) -> (i32, i32) {
    %c0_i32 = arith.constant 0 : i32
    %c0_i32_0 = arith.constant 0 : i32
    %c0_i32_1 = arith.constant 0 : i32
    return %c0_i32, %c0_i32_0 : i32, i32
  }
  func.func @transform_26(%arg0: i32) -> (i32, i32) {
    %c0_i32 = arith.constant 0 : i32
    %c0_i32_0 = arith.constant 0 : i32
    %c0_i32_1 = arith.constant 0 : i32
    return %c0_i32, %c0_i32_0 : i32, i32
  }
  func.func @transform_27(%arg0: i32) -> (i32, i32) {
    %c0_i32 = arith.constant 0 : i32
    %c0_i32_0 = arith.constant 0 : i32
    %c0_i32_1 = arith.constant 0 : i32
    return %c0_i32, %c0_i32_0 : i32, i32
  }
  func.func @transform_28(%arg0: i32) -> (i32, i32) {
    %c0_i32 = arith.constant 0 : i32
    %c0_i32_0 = arith.constant 0 : i32
    %c0_i32_1 = arith.constant 0 : i32
    return %c0_i32, %c0_i32_0 : i32, i32
  }
  func.func @transform_29(%arg0: i32) -> (i32, i32) {
    %c0_i32 = arith.constant 0 : i32
    %c0_i32_0 = arith.constant 0 : i32
    %c0_i32_1 = arith.constant 0 : i32
    return %c0_i32, %c0_i32_0 : i32, i32
  }
}

</mosaic_0001>

<llo_original>
// kernel: tpu_custom_call.1
$region0: #{tpu_custom_call.1}
  #allocation0 [shape = 'u32[]', space=smem, size = 0x4, offset = 0x4, fixed_abs, tag = 'smem constant byte address 0x4 - core index']
  #allocation1 [shape = 'u32[144,128]{1,0:T(1,128)}', space=vmem, size = 0x12000, scoped, tag = 'internal scratch']
  #allocation2 [shape = 'f32[2,256]{1,0:T(2,128)}', space=vmem, size = 0x800, scoped, tag = 'scratch operand']
  #allocation3 [shape = 'f32[1,1]{1,0:T(1,128)S(1)}', space=vmem, size = 0x200, scoped, tag = 'scoped memory for tpu_custom_call.1']
  %s0 = inlined_call_operand.smem [shape: u32[30], index: -1, kind: input, shape index: {}]
  %s1 = sld [smem:[%s0]]
  %s2 = scalar_lea.smem %s0, 1
  %s3 = sld [smem:[%s2]]
  %s4 = scalar_lea.smem %s0, 2
  %s5 = sld [smem:[%s4]]
  %s6 = scalar_lea.smem %s0, 3
  %s7 = sld [smem:[%s6]]
  %s8 = scalar_lea.smem %s0, 4
  %s9 = sld [smem:[%s8]]
  %s10 = scalar_lea.smem %s0, 5
  %s11 = sld [smem:[%s10]]
  %s12 = scalar_lea.smem %s0, 6
  %s13 = sld [smem:[%s12]]
  %s14 = scalar_lea.smem %s0, 7
  %s15 = sld [smem:[%s14]]
  %s16 = scalar_lea.smem %s0, 8
  %s17 = sld [smem:[%s16]]
  %s18 = scalar_lea.smem %s0, 9
  %s19 = sld [smem:[%s18]]
  %s20 = scalar_lea.smem %s0, 10
  %s21 = sld [smem:[%s20]]
  %s22 = scalar_lea.smem %s0, 11
  %s23 = sld [smem:[%s22]]
  %s24 = scalar_lea.smem %s0, 12
  %s25 = sld [smem:[%s24]]
  %s26 = scalar_lea.smem %s0, 13
  %s27 = sld [smem:[%s26]]
  %s28 = scalar_lea.smem %s0, 14
  %s29 = sld [smem:[%s28]]
  %s30 = scalar_lea.smem %s0, 15
  %s31 = sld [smem:[%s30]]
  %s32 = scalar_lea.smem %s0, 16
  %s33 = sld [smem:[%s32]]
  %s34 = scalar_lea.smem %s0, 17
  %s35 = sld [smem:[%s34]]
  %s36 = scalar_lea.smem %s0, 18
  %s37 = sld [smem:[%s36]]
  %s38 = scalar_lea.smem %s0, 19
  %s39 = sld [smem:[%s38]]
  %s40 = scalar_lea.smem %s0, 20
  %s41 = sld [smem:[%s40]]
  %s42 = scalar_lea.smem %s0, 21
  %s43 = sld [smem:[%s42]]
  %s44 = scalar_lea.smem %s0, 22
  %s45 = sld [smem:[%s44]]
  %s46 = scalar_lea.smem %s0, 23
  %s47 = sld [smem:[%s46]]
  %s48 = scalar_lea.smem %s0, 24
  %s49 = sld [smem:[%s48]]
  %s50 = scalar_lea.smem %s0, 25
  %s51 = sld [smem:[%s50]]
  %s52 = scalar_lea.smem %s0, 26
  %s53 = sld [smem:[%s52]]
  %s54 = scalar_lea.smem %s0, 27
  %s55 = sld [smem:[%s54]]
  %s56 = scalar_lea.smem %s0, 28
  %s57 = sld [smem:[%s56]]
  %s58 = scalar_lea.smem %s0, 29
  %s59 = sld [smem:[%s58]]
  %s60 = sld [smem:[#allocation0]]
  $region177: #{tpu_custom_call.1} parent=0
    _
  %s62 = ssub.s32 1, %s60
  %s63 = scalar_select 0, %s62, %s60
  %v64 = vstv %s57
  %65 = vst [vmem:[#allocation3] sm:$0x1] %v64
  $region1: #{tpu_custom_call.1} parent=0
    #allocation4 [shape = 'u8[1048576]{0}', space=vmem, size = 0x100000, scoped, tag = 'input window, operand 2']
    #allocation5 [shape = 's32[2]{0}', space=sflag, size = 0x8, scoped, tag = 'scoped memory for tpu_custom_call.1']
    #allocation6 [shape = 's32[2]{0}', space=sflag, size = 0x8, scoped, tag = 'scoped memory for tpu_custom_call.1']
    #allocation7 [shape = 'u8[131072]{0}', space=vmem, size = 0x20000, scoped, tag = 'input window, operand 3, single buffered']
    #allocation8 [shape = 's32[1]{0}', space=sflag, size = 0x4, scoped, tag = 'scoped memory for tpu_custom_call.1']
    #allocation9 [shape = 'u8[262144]{0}', space=vmem, size = 0x40000, scoped, tag = 'input window, operand 4, single buffered']
    #allocation10 [shape = 'u8[65536]{0}', space=vmem, size = 0x10000, scoped, tag = 'input window, operand 8, single buffered']
    #allocation11 [shape = 's32[1]{0}', space=sflag, size = 0x4, scoped, tag = 'scoped memory for tpu_custom_call.1']
    #allocation12 [shape = 'u8[65536]{0}', space=vmem, size = 0x10000, scoped, tag = 'input window, operand 13, single buffered']
    #allocation13 [shape = 'u8[1024]{0}', space=vmem, size = 0x400, scoped, tag = 'output window, operand 0, single buffered']
    %66 = vsyncpa [#allocation5], 0
    %s67 = scalar_lea.sflag [#allocation5], 1
    %68 = vsyncpa %s67, 0
    %69 = vsyncpa [#allocation8], 0
    %70 = vsyncpa [#allocation11], 0
    %71 = vsyncpa [#allocation6], 0
    loop: start=0, step=1, limit=4
    $region2: #{tpu_custom_call.1} parent=1 // loop_pre_header
      _
    $region3: #{tpu_custom_call.1} parent=1 // loop_header
      %s73 = sphi 0, %s77
      %p74 = scmp.ge.s32.totalorder %s73, 4
      %s83 = sphi 0, %s85
      %s86 = sphi 0, %s83
      %s87 = sphi 0, %s86
      %s103 = sphi 0, %s87
      %s109 = sphi 0, %s111
      %s112 = sphi 0, %s109
      %s113 = sphi 0, %s112
      %s129 = sphi 0, %s113
      %s135 = sphi 0, %s137
      %s138 = sphi 0, %s135
      %s139 = sphi 0, %s138
      %s155 = sphi 0, %s139
      %s159 = sphi 0, %s159
      %s161 = sphi 0, %s159
      %s162 = sphi 0, %s161
      %s176 = sphi 0, %s162
      %s180 = sphi 0, %s180
      %s182 = sphi 0, %s180
      %s183 = sphi 0, %s182
      %s197 = sphi 0, %s183
      %s201 = sphi 0, %s201
      %s203 = sphi 0, %s201
      %s204 = sphi 0, %s203
      %s218 = sphi 0, %s204
      %s222 = sphi 0, %s222
      %s224 = sphi 0, %s222
      %s225 = sphi 0, %s224
      %s239 = sphi 0, %s225
      %s243 = sphi 0, %s243
      %s245 = sphi 0, %s243
      %s246 = sphi 0, %s245
      %s260 = sphi 0, %s246
      %s264 = sphi 0, %s264
      %s266 = sphi 0, %s264
      %s267 = sphi 0, %s266
      %s281 = sphi 0, %s267
      %s285 = sphi 0, %s285
      %s287 = sphi 0, %s285
      %s288 = sphi 0, %s287
      %s302 = sphi 0, %s288
      %s306 = sphi 0, %s306
      %s308 = sphi 0, %s306
      %s309 = sphi 0, %s308
      %s323 = sphi 0, %s309
      %s327 = sphi 0, %s327
      %s329 = sphi 0, %s327
      %s330 = sphi 0, %s329
      %s344 = sphi 0, %s330
      %s348 = sphi 0, %s348
      %s350 = sphi 0, %s348
      %s351 = sphi 0, %s350
      %s365 = sphi 0, %s351
      %s369 = sphi 0, %s369
      %s371 = sphi 0, %s369
      %s372 = sphi 0, %s371
      %s386 = sphi 0, %s372
      %s390 = sphi 0, %s390
      %s392 = sphi 0, %s390
      %s393 = sphi 0, %s392
      %s407 = sphi 0, %s393
      %s411 = sphi 0, %s411
      %s413 = sphi 0, %s411
      %s414 = sphi 0, %s413
      %s428 = sphi 0, %s414
      %s432 = sphi 0, %s432
      %s434 = sphi 0, %s432
      %s435 = sphi 0, %s434
      %s449 = sphi 0, %s435
      %s453 = sphi 0, %s453
      %s455 = sphi 0, %s453
      %s456 = sphi 0, %s455
      %s470 = sphi 0, %s456
      %s474 = sphi 0, %s474
      %s476 = sphi 0, %s474
      %s477 = sphi 0, %s476
      %s491 = sphi 0, %s477
      %s495 = sphi 0, %s495
      %s497 = sphi 0, %s495
      %s498 = sphi 0, %s497
      %s512 = sphi 0, %s498
      %s516 = sphi 0, %s516
      %s518 = sphi 0, %s516
      %s519 = sphi 0, %s518
      %s533 = sphi 0, %s519
      %s537 = sphi 0, %s537
      %s539 = sphi 0, %s537
      %s540 = sphi 0, %s539
      %s554 = sphi 0, %s540
      %s558 = sphi 0, %s558
      %s560 = sphi 0, %s558
      %s561 = sphi 0, %s560
      %s575 = sphi 0, %s561
      %s579 = sphi 0, %s579
      %s581 = sphi 0, %s579
      %s582 = sphi 0, %s581
      %s596 = sphi 0, %s582
      %s600 = sphi 0, %s600
      %s602 = sphi 0, %s600
      %s603 = sphi 0, %s602
      %s617 = sphi 0, %s603
      %s621 = sphi 0, %s621
      %s623 = sphi 0, %s621
      %s624 = sphi 0, %s623
      %s638 = sphi 0, %s624
      %s642 = sphi 0, %s642
      %s644 = sphi 0, %s642
      %s645 = sphi 0, %s644
      %s659 = sphi 0, %s645
      %s663 = sphi 0, %s663
      %s665 = sphi 0, %s663
      %s666 = sphi 0, %s665
      %s680 = sphi 0, %s666
      %s684 = sphi 0, %s684
      %s686 = sphi 0, %s684
      %s687 = sphi 0, %s686
      %s701 = sphi 0, %s687
      %s705 = sphi 0, %s705
      %s707 = sphi 0, %s705
      %s708 = sphi 0, %s707
      %s722 = sphi 0, %s708
    $region4: #{tpu_custom_call.1} parent=1 // loop_header_branch
      %76 = sbr.rel (%p74) target = $region8
    $region5: #{tpu_custom_call.1} parent=1 // loop_body
      %s78 = ssub.s32 %s73, 1
      %s79 = ssub.s32 %s73, 2
      %s80 = sadd.s32 %s73, 1
      %s81 = ssub.s32 %s73, %s80
      %p82 = scmp.eq.s32.totalorder %s81, 0
      %s84 = sadd.s32 %s83, 1
      %s85 = scalar_select %p82, %s83, %s84
      %p88 = pneg %p82
      %p89 = scmp.eq.s32.totalorder %s73, 1
      %p90 = por %p88, %p89
      %p91 = scmp.ne.s32.totalorder %s83, %s86
      %p92 = scmp.eq.s32.totalorder %s73, 0
      %p93 = por %p91, %p92
      %p94 = scmp.ne.s32.totalorder %s83, %s86
      %p95 = scmp.eq.s32.totalorder %s78, 1
      %p96 = por %p94, %p95
      %p97 = scmp.ne.s32.totalorder %s86, %s87
      %p98 = scmp.eq.s32.totalorder %s78, 0
      %p99 = por %p97, %p98
      %p100 = scmp.ne.s32.totalorder %s86, %s87
      %p101 = scmp.eq.s32.totalorder %s79, 1
      %p102 = por %p100, %p101
      %p104 = scmp.ne.s32.totalorder %s87, %s103
      %p105 = scmp.eq.s32.totalorder %s79, 0
      %p106 = por %p104, %p105
      %s107 = ssub.s32 %s73, %s80
      %p108 = scmp.eq.s32.totalorder %s107, 0
      %s110 = sadd.s32 %s109, 1
      %s111 = scalar_select %p108, %s109, %s110
      %p114 = pneg %p108
      %p115 = scmp.eq.s32.totalorder %s73, 1
      %p116 = por %p114, %p115
      %p117 = scmp.ne.s32.totalorder %s109, %s112
      %p118 = scmp.eq.s32.totalorder %s73, 0
      %p119 = por %p117, %p118
      %p120 = scmp.ne.s32.totalorder %s109, %s112
      %p121 = scmp.eq.s32.totalorder %s78, 1
      %p122 = por %p120, %p121
      %p123 = scmp.ne.s32.totalorder %s112, %s113
      %p124 = scmp.eq.s32.totalorder %s78, 0
      %p125 = por %p123, %p124
      %p126 = scmp.ne.s32.totalorder %s112, %s113
      %p127 = scmp.eq.s32.totalorder %s79, 1
      %p128 = por %p126, %p127
      %p130 = scmp.ne.s32.totalorder %s113, %s129
      %p131 = scmp.eq.s32.totalorder %s79, 0
      %p132 = por %p130, %p131
      %s133 = ssub.s32 %s73, %s80
      %p134 = scmp.eq.s32.totalorder %s133, 0
      %s136 = sadd.s32 %s135, 1
      %s137 = scalar_select %p134, %s135, %s136
      %p140 = pneg %p134
      %p141 = scmp.eq.s32.totalorder %s73, 1
      %p142 = por %p140, %p141
      %p143 = scmp.ne.s32.totalorder %s135, %s138
      %p144 = scmp.eq.s32.totalorder %s73, 0
      %p145 = por %p143, %p144
      %p146 = scmp.ne.s32.totalorder %s135, %s138
      %p147 = scmp.eq.s32.totalorder %s78, 1
      %p148 = por %p146, %p147
      %p149 = scmp.ne.s32.totalorder %s138, %s139
      %p150 = scmp.eq.s32.totalorder %s78, 0
      %p151 = por %p149, %p150
      %p152 = scmp.ne.s32.totalorder %s138, %s139
      %p153 = scmp.eq.s32.totalorder %s79, 1
      %p154 = por %p152, %p153
      %p156 = scmp.ne.s32.totalorder %s139, %s155
      %p157 = scmp.eq.s32.totalorder %s79, 0
      %p158 = por %p156, %p157
      %s160 = sadd.s32 %s159, 1
      %p163 = scmp.eq.s32.totalorder %s73, 1
      %p164 = scmp.ne.s32.totalorder %s159, %s161
      %p165 = scmp.eq.s32.totalorder %s73, 0
      %p166 = por %p164, %p165
      %p167 = scmp.ne.s32.totalorder %s159, %s161
      %p168 = scmp.eq.s32.totalorder %s78, 1
      %p169 = por %p167, %p168
      %p170 = scmp.ne.s32.totalorder %s161, %s162
      %p171 = scmp.eq.s32.totalorder %s78, 0
      %p172 = por %p170, %p171
      %p173 = scmp.ne.s32.totalorder %s161, %s162
      %p174 = scmp.eq.s32.totalorder %s79, 1
      %p175 = por %p173, %p174
      %p177 = scmp.ne.s32.totalorder %s162, %s176
      %p178 = scmp.eq.s32.totalorder %s79, 0
      %p179 = por %p177, %p178
      %s181 = sadd.s32 %s180, 1
      %p184 = scmp.eq.s32.totalorder %s73, 1
      %p185 = scmp.ne.s32.totalorder %s180, %s182
      %p186 = scmp.eq.s32.totalorder %s73, 0
      %p187 = por %p185, %p186
      %p188 = scmp.ne.s32.totalorder %s180, %s182
      %p189 = scmp.eq.s32.totalorder %s78, 1
      %p190 = por %p188, %p189
      %p191 = scmp.ne.s32.totalorder %s182, %s183
      %p192 = scmp.eq.s32.totalorder %s78, 0
      %p193 = por %p191, %p192
      %p194 = scmp.ne.s32.totalorder %s182, %s183
      %p195 = scmp.eq.s32.totalorder %s79, 1
      %p196 = por %p194, %p195
      %p198 = scmp.ne.s32.totalorder %s183, %s197
      %p199 = scmp.eq.s32.totalorder %s79, 0
      %p200 = por %p198, %p199
      %s202 = sadd.s32 %s201, 1
      %p205 = scmp.eq.s32.totalorder %s73, 1
      %p206 = scmp.ne.s32.totalorder %s201, %s203
      %p207 = scmp.eq.s32.totalorder %s73, 0
      %p208 = por %p206, %p207
      %p209 = scmp.ne.s32.totalorder %s201, %s203
      %p210 = scmp.eq.s32.totalorder %s78, 1
      %p211 = por %p209, %p210
      %p212 = scmp.ne.s32.totalorder %s203, %s204
      %p213 = scmp.eq.s32.totalorder %s78, 0
      %p214 = por %p212, %p213
      %p215 = scmp.ne.s32.totalorder %s203, %s204
      %p216 = scmp.eq.s32.totalorder %s79, 1
      %p217 = por %p215, %p216
      %p219 = scmp.ne.s32.totalorder %s204, %s218
      %p220 = scmp.eq.s32.totalorder %s79, 0
      %p221 = por %p219, %p220
      %s223 = sadd.s32 %s222, 1
      %p226 = scmp.eq.s32.totalorder %s73, 1
      %p227 = scmp.ne.s32.totalorder %s222, %s224
      %p228 = scmp.eq.s32.totalorder %s73, 0
      %p229 = por %p227, %p228
      %p230 = scmp.ne.s32.totalorder %s222, %s224
      %p231 = scmp.eq.s32.totalorder %s78, 1
      %p232 = por %p230, %p231
      %p233 = scmp.ne.s32.totalorder %s224, %s225
      %p234 = scmp.eq.s32.totalorder %s78, 0
      %p235 = por %p233, %p234
      %p236 = scmp.ne.s32.totalorder %s224, %s225
      %p237 = scmp.eq.s32.totalorder %s79, 1
      %p238 = por %p236, %p237
      %p240 = scmp.ne.s32.totalorder %s225, %s239
      %p241 = scmp.eq.s32.totalorder %s79, 0
      %p242 = por %p240, %p241
      %s244 = sadd.s32 %s243, 1
      %p247 = scmp.eq.s32.totalorder %s73, 1
      %p248 = scmp.ne.s32.totalorder %s243, %s245
      %p249 = scmp.eq.s32.totalorder %s73, 0
      %p250 = por %p248, %p249
      %p251 = scmp.ne.s32.totalorder %s243, %s245
      %p252 = scmp.eq.s32.totalorder %s78, 1
      %p253 = por %p251, %p252
      %p254 = scmp.ne.s32.totalorder %s245, %s246
      %p255 = scmp.eq.s32.totalorder %s78, 0
      %p256 = por %p254, %p255
      %p257 = scmp.ne.s32.totalorder %s245, %s246
      %p258 = scmp.eq.s32.totalorder %s79, 1
      %p259 = por %p257, %p258
      %p261 = scmp.ne.s32.totalorder %s246, %s260
      %p262 = scmp.eq.s32.totalorder %s79, 0
      %p263 = por %p261, %p262
      %s265 = sadd.s32 %s264, 1
      %p268 = scmp.eq.s32.totalorder %s73, 1
      %p269 = scmp.ne.s32.totalorder %s264, %s266
      %p270 = scmp.eq.s32.totalorder %s73, 0
      %p271 = por %p269, %p270
      %p272 = scmp.ne.s32.totalorder %s264, %s266
      %p273 = scmp.eq.s32.totalorder %s78, 1
      %p274 = por %p272, %p273
      %p275 = scmp.ne.s32.totalorder %s266, %s267
      %p276 = scmp.eq.s32.totalorder %s78, 0
      %p277 = por %p275, %p276
      %p278 = scmp.ne.s32.totalorder %s266, %s267
      %p279 = scmp.eq.s32.totalorder %s79, 1
      %p280 = por %p278, %p279
      %p282 = scmp.ne.s32.totalorder %s267, %s281
      %p283 = scmp.eq.s32.totalorder %s79, 0
      %p284 = por %p282, %p283
      %s286 = sadd.s32 %s285, 1
      %p289 = scmp.eq.s32.totalorder %s73, 1
      %p290 = scmp.ne.s32.totalorder %s285, %s287
      %p291 = scmp.eq.s32.totalorder %s73, 0
      %p292 = por %p290, %p291
      %p293 = scmp.ne.s32.totalorder %s285, %s287
      %p294 = scmp.eq.s32.totalorder %s78, 1
      %p295 = por %p293, %p294
      %p296 = scmp.ne.s32.totalorder %s287, %s288
      %p297 = scmp.eq.s32.totalorder %s78, 0
      %p298 = por %p296, %p297
      %p299 = scmp.ne.s32.totalorder %s287, %s288
      %p300 = scmp.eq.s32.totalorder %s79, 1
      %p301 = por %p299, %p300
      %p303 = scmp.ne.s32.totalorder %s288, %s302
      %p304 = scmp.eq.s32.totalorder %s79, 0
      %p305 = por %p303, %p304
      %s307 = sadd.s32 %s306, 1
      %p310 = scmp.eq.s32.totalorder %s73, 1
      %p311 = scmp.ne.s32.totalorder %s306, %s308
      %p312 = scmp.eq.s32.totalorder %s73, 0
      %p313 = por %p311, %p312
      %p314 = scmp.ne.s32.totalorder %s306, %s308
      %p315 = scmp.eq.s32.totalorder %s78, 1
      %p316 = por %p314, %p315
      %p317 = scmp.ne.s32.totalorder %s308, %s309
      %p318 = scmp.eq.s32.totalorder %s78, 0
      %p319 = por %p317, %p318
      %p320 = scmp.ne.s32.totalorder %s308, %s309
      %p321 = scmp.eq.s32.totalorder %s79, 1
      %p322 = por %p320, %p321
      %p324 = scmp.ne.s32.totalorder %s309, %s323
      %p325 = scmp.eq.s32.totalorder %s79, 0
      %p326 = por %p324, %p325
      %s328 = sadd.s32 %s327, 1
      %p331 = scmp.eq.s32.totalorder %s73, 1
      %p332 = scmp.ne.s32.totalorder %s327, %s329
      %p333 = scmp.eq.s32.totalorder %s73, 0
      %p334 = por %p332, %p333
      %p335 = scmp.ne.s32.totalorder %s327, %s329
      %p336 = scmp.eq.s32.totalorder %s78, 1
      %p337 = por %p335, %p336
      %p338 = scmp.ne.s32.totalorder %s329, %s330
      %p339 = scmp.eq.s32.totalorder %s78, 0
      %p340 = por %p338, %p339
      %p341 = scmp.ne.s32.totalorder %s329, %s330
      %p342 = scmp.eq.s32.totalorder %s79, 1
      %p343 = por %p341, %p342
      %p345 = scmp.ne.s32.totalorder %s330, %s344
      %p346 = scmp.eq.s32.totalorder %s79, 0
      %p347 = por %p345, %p346
      %s349 = sadd.s32 %s348, 1
      %p352 = scmp.eq.s32.totalorder %s73, 1
      %p353 = scmp.ne.s32.totalorder %s348, %s350
      %p354 = scmp.eq.s32.totalorder %s73, 0
      %p355 = por %p353, %p354
      %p356 = scmp.ne.s32.totalorder %s348, %s350
      %p357 = scmp.eq.s32.totalorder %s78, 1
      %p358 = por %p356, %p357
      %p359 = scmp.ne.s32.totalorder %s350, %s351
      %p360 = scmp.eq.s32.totalorder %s78, 0
      %p361 = por %p359, %p360
      %p362 = scmp.ne.s32.totalorder %s350, %s351
      %p363 = scmp.eq.s32.totalorder %s79, 1
      %p364 = por %p362, %p363
      %p366 = scmp.ne.s32.totalorder %s351, %s365
      %p367 = scmp.eq.s32.totalorder %s79, 0
      %p368 = por %p366, %p367
      %s370 = sadd.s32 %s369, 1
      %p373 = scmp.eq.s32.totalorder %s73, 1
      %p374 = scmp.ne.s32.totalorder %s369, %s371
      %p375 = scmp.eq.s32.totalorder %s73, 0
      %p376 = por %p374, %p375
      %p377 = scmp.ne.s32.totalorder %s369, %s371
      %p378 = scmp.eq.s32.totalorder %s78, 1
      %p379 = por %p377, %p378
      %p380 = scmp.ne.s32.totalorder %s371, %s372
      %p381 = scmp.eq.s32.totalorder %s78, 0
      %p382 = por %p380, %p381
      %p383 = scmp.ne.s32.totalorder %s371, %s372
      %p384 = scmp.eq.s32.totalorder %s79, 1
      %p385 = por %p383, %p384
      %p387 = scmp.ne.s32.totalorder %s372, %s386
      %p388 = scmp.eq.s32.totalorder %s79, 0
      %p389 = por %p387, %p388
      %s391 = sadd.s32 %s390, 1
      %p394 = scmp.eq.s32.totalorder %s73, 1
      %p395 = scmp.ne.s32.totalorder %s390, %s392
      %p396 = scmp.eq.s32.totalorder %s73, 0
      %p397 = por %p395, %p396
      %p398 = scmp.ne.s32.totalorder %s390, %s392
      %p399 = scmp.eq.s32.totalorder %s78, 1
      %p400 = por %p398, %p399
      %p401 = scmp.ne.s32.totalorder %s392, %s393
      %p402 = scmp.eq.s32.totalorder %s78, 0
      %p403 = por %p401, %p402
      %p404 = scmp.ne.s32.totalorder %s392, %s393
      %p405 = scmp.eq.s32.totalorder %s79, 1
      %p406 = por %p404, %p405
      %p408 = scmp.ne.s32.totalorder %s393, %s407
      %p409 = scmp.eq.s32.totalorder %s79, 0
      %p410 = por %p408, %p409
      %s412 = sadd.s32 %s411, 1
      %p415 = scmp.eq.s32.totalorder %s73, 1
      %p416 = scmp.ne.s32.totalorder %s411, %s413
      %p417 = scmp.eq.s32.totalorder %s73, 0
      %p418 = por %p416, %p417
      %p419 = scmp.ne.s32.totalorder %s411, %s413
      %p420 = scmp.eq.s32.totalorder %s78, 1
      %p421 = por %p419, %p420
      %p422 = scmp.ne.s32.totalorder %s413, %s414
      %p423 = scmp.eq.s32.totalorder %s78, 0
      %p424 = por %p422, %p423
      %p425 = scmp.ne.s32.totalorder %s413, %s414
      %p426 = scmp.eq.s32.totalorder %s79, 1
      %p427 = por %p425, %p426
      %p429 = scmp.ne.s32.totalorder %s414, %s428
      %p430 = scmp.eq.s32.totalorder %s79, 0
      %p431 = por %p429, %p430
      %s433 = sadd.s32 %s432, 1
      %p436 = scmp.eq.s32.totalorder %s73, 1
      %p437 = scmp.ne.s32.totalorder %s432, %s434
      %p438 = scmp.eq.s32.totalorder %s73, 0
      %p439 = por %p437, %p438
      %p440 = scmp.ne.s32.totalorder %s432, %s434
      %p441 = scmp.eq.s32.totalorder %s78, 1
      %p442 = por %p440, %p441
      %p443 = scmp.ne.s32.totalorder %s434, %s435
      %p444 = scmp.eq.s32.totalorder %s78, 0
      %p445 = por %p443, %p444
      %p446 = scmp.ne.s32.totalorder %s434, %s435
      %p447 = scmp.eq.s32.totalorder %s79, 1
      %p448 = por %p446, %p447
      %p450 = scmp.ne.s32.totalorder %s435, %s449
      %p451 = scmp.eq.s32.totalorder %s79, 0
      %p452 = por %p450, %p451
      %s454 = sadd.s32 %s453, 1
      %p457 = scmp.eq.s32.totalorder %s73, 1
      %p458 = scmp.ne.s32.totalorder %s453, %s455
      %p459 = scmp.eq.s32.totalorder %s73, 0
      %p460 = por %p458, %p459
      %p461 = scmp.ne.s32.totalorder %s453, %s455
      %p462 = scmp.eq.s32.totalorder %s78, 1
      %p463 = por %p461, %p462
      %p464 = scmp.ne.s32.totalorder %s455, %s456
      %p465 = scmp.eq.s32.totalorder %s78, 0
      %p466 = por %p464, %p465
      %p467 = scmp.ne.s32.totalorder %s455, %s456
      %p468 = scmp.eq.s32.totalorder %s79, 1
      %p469 = por %p467, %p468
      %p471 = scmp.ne.s32.totalorder %s456, %s470
      %p472 = scmp.eq.s32.totalorder %s79, 0
      %p473 = por %p471, %p472
      %s475 = sadd.s32 %s474, 1
      %p478 = scmp.eq.s32.totalorder %s73, 1
      %p479 = scmp.ne.s32.totalorder %s474, %s476
      %p480 = scmp.eq.s32.totalorder %s73, 0
      %p481 = por %p479, %p480
      %p482 = scmp.ne.s32.totalorder %s474, %s476
      %p483 = scmp.eq.s32.totalorder %s78, 1
      %p484 = por %p482, %p483
      %p485 = scmp.ne.s32.totalorder %s476, %s477
      %p486 = scmp.eq.s32.totalorder %s78, 0
      %p487 = por %p485, %p486
      %p488 = scmp.ne.s32.totalorder %s476, %s477
      %p489 = scmp.eq.s32.totalorder %s79, 1
      %p490 = por %p488, %p489
      %p492 = scmp.ne.s32.totalorder %s477, %s491
      %p493 = scmp.eq.s32.totalorder %s79, 0
      %p494 = por %p492, %p493
      %s496 = sadd.s32 %s495, 1
      %p499 = scmp.eq.s32.totalorder %s73, 1
      %p500 = scmp.ne.s32.totalorder %s495, %s497
      %p501 = scmp.eq.s32.totalorder %s73, 0
      %p502 = por %p500, %p501
      %p503 = scmp.ne.s32.totalorder %s495, %s497
      %p504 = scmp.eq.s32.totalorder %s78, 1
      %p505 = por %p503, %p504
      %p506 = scmp.ne.s32.totalorder %s497, %s498
      %p507 = scmp.eq.s32.totalorder %s78, 0
      %p508 = por %p506, %p507
      %p509 = scmp.ne.s32.totalorder %s497, %s498
      %p510 = scmp.eq.s32.totalorder %s79, 1
      %p511 = por %p509, %p510
      %p513 = scmp.ne.s32.totalorder %s498, %s512
      %p514 = scmp.eq.s32.totalorder %s79, 0
      %p515 = por %p513, %p514
      %s517 = sadd.s32 %s516, 1
      %p520 = scmp.eq.s32.totalorder %s73, 1
      %p521 = scmp.ne.s32.totalorder %s516, %s518
      %p522 = scmp.eq.s32.totalorder %s73, 0
      %p523 = por %p521, %p522
      %p524 = scmp.ne.s32.totalorder %s516, %s518
      %p525 = scmp.eq.s32.totalorder %s78, 1
      %p526 = por %p524, %p525
      %p527 = scmp.ne.s32.totalorder %s518, %s519
      %p528 = scmp.eq.s32.totalorder %s78, 0
      %p529 = por %p527, %p528
      %p530 = scmp.ne.s32.totalorder %s518, %s519
      %p531 = scmp.eq.s32.totalorder %s79, 1
      %p532 = por %p530, %p531
      %p534 = scmp.ne.s32.totalorder %s519, %s533
      %p535 = scmp.eq.s32.totalorder %s79, 0
      %p536 = por %p534, %p535
      %s538 = sadd.s32 %s537, 1
      %p541 = scmp.eq.s32.totalorder %s73, 1
      %p542 = scmp.ne.s32.totalorder %s537, %s539
      %p543 = scmp.eq.s32.totalorder %s73, 0
      %p544 = por %p542, %p543
      %p545 = scmp.ne.s32.totalorder %s537, %s539
      %p546 = scmp.eq.s32.totalorder %s78, 1
      %p547 = por %p545, %p546
      %p548 = scmp.ne.s32.totalorder %s539, %s540
      %p549 = scmp.eq.s32.totalorder %s78, 0
      %p550 = por %p548, %p549
      %p551 = scmp.ne.s32.totalorder %s539, %s540
      %p552 = scmp.eq.s32.totalorder %s79, 1
      %p553 = por %p551, %p552
      %p555 = scmp.ne.s32.totalorder %s540, %s554
      %p556 = scmp.eq.s32.totalorder %s79, 0
      %p557 = por %p555, %p556
      %s559 = sadd.s32 %s558, 1
      %p562 = scmp.eq.s32.totalorder %s73, 1
      %p563 = scmp.ne.s32.totalorder %s558, %s560
      %p564 = scmp.eq.s32.totalorder %s73, 0
      %p565 = por %p563, %p564
      %p566 = scmp.ne.s32.totalorder %s558, %s560
      %p567 = scmp.eq.s32.totalorder %s78, 1
      %p568 = por %p566, %p567
      %p569 = scmp.ne.s32.totalorder %s560, %s561
      %p570 = scmp.eq.s32.totalorder %s78, 0
      %p571 = por %p569, %p570
      %p572 = scmp.ne.s32.totalorder %s560, %s561
      %p573 = scmp.eq.s32.totalorder %s79, 1
      %p574 = por %p572, %p573
      %p576 = scmp.ne.s32.totalorder %s561, %s575
      %p577 = scmp.eq.s32.totalorder %s79, 0
      %p578 = por %p576, %p577
      %s580 = sadd.s32 %s579, 1
      %p583 = scmp.eq.s32.totalorder %s73, 1
      %p584 = scmp.ne.s32.totalorder %s579, %s581
      %p585 = scmp.eq.s32.totalorder %s73, 0
      %p586 = por %p584, %p585
      %p587 = scmp.ne.s32.totalorder %s579, %s581
      %p588 = scmp.eq.s32.totalorder %s78, 1
      %p589 = por %p587, %p588
      %p590 = scmp.ne.s32.totalorder %s581, %s582
      %p591 = scmp.eq.s32.totalorder %s78, 0
      %p592 = por %p590, %p591
      %p593 = scmp.ne.s32.totalorder %s581, %s582
      %p594 = scmp.eq.s32.totalorder %s79, 1
      %p595 = por %p593, %p594
      %p597 = scmp.ne.s32.totalorder %s582, %s596
      %p598 = scmp.eq.s32.totalorder %s79, 0
      %p599 = por %p597, %p598
      %s601 = sadd.s32 %s600, 1
      %p604 = scmp.eq.s32.totalorder %s73, 1
      %p605 = scmp.ne.s32.totalorder %s600, %s602
      %p606 = scmp.eq.s32.totalorder %s73, 0
      %p607 = por %p605, %p606
      %p608 = scmp.ne.s32.totalorder %s600, %s602
      %p609 = scmp.eq.s32.totalorder %s78, 1
      %p610 = por %p608, %p609
      %p611 = scmp.ne.s32.totalorder %s602, %s603
      %p612 = scmp.eq.s32.totalorder %s78, 0
      %p613 = por %p611, %p612
      %p614 = scmp.ne.s32.totalorder %s602, %s603
      %p615 = scmp.eq.s32.totalorder %s79, 1
      %p616 = por %p614, %p615
      %p618 = scmp.ne.s32.totalorder %s603, %s617
      %p619 = scmp.eq.s32.totalorder %s79, 0
      %p620 = por %p618, %p619
      %s622 = sadd.s32 %s621, 1
      %p625 = scmp.eq.s32.totalorder %s73, 1
      %p626 = scmp.ne.s32.totalorder %s621, %s623
      %p627 = scmp.eq.s32.totalorder %s73, 0
      %p628 = por %p626, %p627
      %p629 = scmp.ne.s32.totalorder %s621, %s623
      %p630 = scmp.eq.s32.totalorder %s78, 1
      %p631 = por %p629, %p630
      %p632 = scmp.ne.s32.totalorder %s623, %s624
      %p633 = scmp.eq.s32.totalorder %s78, 0
      %p634 = por %p632, %p633
      %p635 = scmp.ne.s32.totalorder %s623, %s624
      %p636 = scmp.eq.s32.totalorder %s79, 1
      %p637 = por %p635, %p636
      %p639 = scmp.ne.s32.totalorder %s624, %s638
      %p640 = scmp.eq.s32.totalorder %s79, 0
      %p641 = por %p639, %p640
      %s643 = sadd.s32 %s642, 1
      %p646 = scmp.eq.s32.totalorder %s73, 1
      %p647 = scmp.ne.s32.totalorder %s642, %s644
      %p648 = scmp.eq.s32.totalorder %s73, 0
      %p649 = por %p647, %p648
      %p650 = scmp.ne.s32.totalorder %s642, %s644
      %p651 = scmp.eq.s32.totalorder %s78, 1
      %p652 = por %p650, %p651
      %p653 = scmp.ne.s32.totalorder %s644, %s645
      %p654 = scmp.eq.s32.totalorder %s78, 0
      %p655 = por %p653, %p654
      %p656 = scmp.ne.s32.totalorder %s644, %s645
      %p657 = scmp.eq.s32.totalorder %s79, 1
      %p658 = por %p656, %p657
      %p660 = scmp.ne.s32.totalorder %s645, %s659
      %p661 = scmp.eq.s32.totalorder %s79, 0
      %p662 = por %p660, %p661
      %s664 = sadd.s32 %s663, 1
      %p667 = scmp.eq.s32.totalorder %s73, 1
      %p668 = scmp.ne.s32.totalorder %s663, %s665
      %p669 = scmp.eq.s32.totalorder %s73, 0
      %p670 = por %p668, %p669
      %p671 = scmp.ne.s32.totalorder %s663, %s665
      %p672 = scmp.eq.s32.totalorder %s78, 1
      %p673 = por %p671, %p672
      %p674 = scmp.ne.s32.totalorder %s665, %s666
      %p675 = scmp.eq.s32.totalorder %s78, 0
      %p676 = por %p674, %p675
      %p677 = scmp.ne.s32.totalorder %s665, %s666
      %p678 = scmp.eq.s32.totalorder %s79, 1
      %p679 = por %p677, %p678
      %p681 = scmp.ne.s32.totalorder %s666, %s680
      %p682 = scmp.eq.s32.totalorder %s79, 0
      %p683 = por %p681, %p682
      %s685 = sadd.s32 %s684, 1
      %p688 = scmp.eq.s32.totalorder %s73, 1
      %p689 = scmp.ne.s32.totalorder %s684, %s686
      %p690 = scmp.eq.s32.totalorder %s73, 0
      %p691 = por %p689, %p690
      %p692 = scmp.ne.s32.totalorder %s684, %s686
      %p693 = scmp.eq.s32.totalorder %s78, 1
      %p694 = por %p692, %p693
      %p695 = scmp.ne.s32.totalorder %s686, %s687
      %p696 = scmp.eq.s32.totalorder %s78, 0
      %p697 = por %p695, %p696
      %p698 = scmp.ne.s32.totalorder %s686, %s687
      %p699 = scmp.eq.s32.totalorder %s79, 1
      %p700 = por %p698, %p699
      %p702 = scmp.ne.s32.totalorder %s687, %s701
      %p703 = scmp.eq.s32.totalorder %s79, 0
      %p704 = por %p702, %p703
      %s706 = sadd.s32 %s705, 1
      %p709 = scmp.eq.s32.totalorder %s73, 1
      %p710 = scmp.ne.s32.totalorder %s705, %s707
      %p711 = scmp.eq.s32.totalorder %s73, 0
      %p712 = por %p710, %p711
      %p713 = scmp.ne.s32.totalorder %s705, %s707
      %p714 = scmp.eq.s32.totalorder %s78, 1
      %p715 = por %p713, %p714
      %p716 = scmp.ne.s32.totalorder %s707, %s708
      %p717 = scmp.eq.s32.totalorder %s78, 0
      %p718 = por %p716, %p717
      %p719 = scmp.ne.s32.totalorder %s707, %s708
      %p720 = scmp.eq.s32.totalorder %s79, 1
      %p721 = por %p719, %p720
      %p723 = scmp.ne.s32.totalorder %s708, %s722
      %p724 = scmp.eq.s32.totalorder %s79, 0
      %p725 = por %p723, %p724
      %p726 = scmp.le.s32.totalorder 1, %s73
      %p727 = scmp.lt.s32.totalorder %s73, 3
      %p728 = pnand %p726, %p727
      %p729 = pneg %p728
      // Predicated region
      $region9: #{tpu_custom_call.1} parent=5 // pred_check
        _
      $region10: #{tpu_custom_call.1} parent=5 // pred_check_branch
        %731 = sbr.rel (%p728) target = $region12
      $region11: #{tpu_custom_call.1} parent=5 // pred_region
        %s732 = ssub.s32 %s73, 1
        // Predicated region
        $region13: #{tpu_custom_call.1} parent=11 // pred_check
          %p733 = pneg %p172
        $region14: #{tpu_custom_call.1} parent=11 // pred_check_branch
          %735 = sbr.rel (%p733) target = $region16
        $region15: #{tpu_custom_call.1} parent=11 // pred_region
          %s737 = ssub.s32 4096, 4096
          %738 = vsyncadd [#allocation8], %s737
          %s739 = sshll.u32 [#allocation7], 4
          %s740 = int_to_ptr.vmem [resolvable:$true] %s739
          %745 = dma.hbm_to_vmem [thread:$0]  %s7, 4096, %s740, [#allocation8], 256, 256, 16
        $region16: #{tpu_custom_call.1} parent=11 // pred_fallthru
          _
        // Predicated region
        $region17: #{tpu_custom_call.1} parent=11 // pred_check
          %p746 = pneg %p193
        $region18: #{tpu_custom_call.1} parent=11 // pred_check_branch
          %748 = sbr.rel (%p746) target = $region20
        $region19: #{tpu_custom_call.1} parent=11 // pred_region
          %s750 = ssub.s32 8192, 8192
          %751 = vsyncadd [#allocation8], %s750
          %s752 = sshll.u32 [#allocation9], 4
          %s753 = int_to_ptr.vmem [resolvable:$true] %s752
          %758 = dma.hbm_to_vmem [thread:$0]  %s9, 8192, %s753, [#allocation8], 128, 128, 8
        $region20: #{tpu_custom_call.1} parent=11 // pred_fallthru
          _
        // Predicated region
        $region21: #{tpu_custom_call.1} parent=11 // pred_check
          %p759 = pneg %p214
        $region22: #{tpu_custom_call.1} parent=11 // pred_check_branch
          %761 = sbr.rel (%p759) target = $region24
        $region23: #{tpu_custom_call.1} parent=11 // pred_region
          _
        $region24: #{tpu_custom_call.1} parent=11 // pred_fallthru
          _
        // Predicated region
        $region25: #{tpu_custom_call.1} parent=11 // pred_check
          %p762 = pneg %p235
        $region26: #{tpu_custom_call.1} parent=11 // pred_check_branch
          %764 = sbr.rel (%p762) target = $region28
        $region27: #{tpu_custom_call.1} parent=11 // pred_region
          _
        $region28: #{tpu_custom_call.1} parent=11 // pred_fallthru
          _
        // Predicated region
        $region29: #{tpu_custom_call.1} parent=11 // pred_check
          %p765 = pneg %p256
        $region30: #{tpu_custom_call.1} parent=11 // pred_check_branch
          %767 = sbr.rel (%p765) target = $region32
        $region31: #{tpu_custom_call.1} parent=11 // pred_region
          _
        $region32: #{tpu_custom_call.1} parent=11 // pred_fallthru
          _
        // Predicated region
        $region33: #{tpu_custom_call.1} parent=11 // pred_check
          %p768 = pneg %p277
        $region34: #{tpu_custom_call.1} parent=11 // pred_check_branch
          %770 = sbr.rel (%p768) target = $region36
        $region35: #{tpu_custom_call.1} parent=11 // pred_region
          %s772 = ssub.s32 2048, 2048
          %773 = vsyncadd [#allocation11], %s772
          %s774 = sshll.u32 [#allocation10], 4
          %s775 = int_to_ptr.vmem [resolvable:$true] %s774
          %780 = dma.hbm_to_vmem [thread:$0]  %s17, 2048, %s775, [#allocation11], 128, 128, 8
        $region36: #{tpu_custom_call.1} parent=11 // pred_fallthru
          _
        // Predicated region
        $region37: #{tpu_custom_call.1} parent=11 // pred_check
          %p781 = pneg %p298
        $region38: #{tpu_custom_call.1} parent=11 // pred_check_branch
          %783 = sbr.rel (%p781) target = $region40
        $region39: #{tpu_custom_call.1} parent=11 // pred_region
          _
        $region40: #{tpu_custom_call.1} parent=11 // pred_fallthru
          _
        // Predicated region
        $region41: #{tpu_custom_call.1} parent=11 // pred_check
          %p784 = pneg %p319
        $region42: #{tpu_custom_call.1} parent=11 // pred_check_branch
          %786 = sbr.rel (%p784) target = $region44
        $region43: #{tpu_custom_call.1} parent=11 // pred_region
          _
        $region44: #{tpu_custom_call.1} parent=11 // pred_fallthru
          _
        // Predicated region
        $region45: #{tpu_custom_call.1} parent=11 // pred_check
          %p787 = pneg %p340
        $region46: #{tpu_custom_call.1} parent=11 // pred_check_branch
          %789 = sbr.rel (%p787) target = $region48
        $region47: #{tpu_custom_call.1} parent=11 // pred_region
          _
        $region48: #{tpu_custom_call.1} parent=11 // pred_fallthru
          _
        // Predicated region
        $region49: #{tpu_custom_call.1} parent=11 // pred_check
          %p790 = pneg %p361
        $region50: #{tpu_custom_call.1} parent=11 // pred_check_branch
          %792 = sbr.rel (%p790) target = $region52
        $region51: #{tpu_custom_call.1} parent=11 // pred_region
          _
        $region52: #{tpu_custom_call.1} parent=11 // pred_fallthru
          _
        // Predicated region
        $region53: #{tpu_custom_call.1} parent=11 // pred_check
          %p793 = pneg %p382
        $region54: #{tpu_custom_call.1} parent=11 // pred_check_branch
          %795 = sbr.rel (%p793) target = $region56
        $region55: #{tpu_custom_call.1} parent=11 // pred_region
          %s797 = ssub.s32 2048, 2048
          %798 = vsyncadd [#allocation11], %s797
          %s799 = sshll.u32 [#allocation12], 4
          %s800 = int_to_ptr.vmem [resolvable:$true] %s799
          %805 = dma.hbm_to_vmem [thread:$0]  %s27, 2048, %s800, [#allocation11], 64, 64, 4
        $region56: #{tpu_custom_call.1} parent=11 // pred_fallthru
          _
        // Predicated region
        $region57: #{tpu_custom_call.1} parent=11 // pred_check
          %p806 = pneg %p403
        $region58: #{tpu_custom_call.1} parent=11 // pred_check_branch
          %808 = sbr.rel (%p806) target = $region60
        $region59: #{tpu_custom_call.1} parent=11 // pred_region
          _
        $region60: #{tpu_custom_call.1} parent=11 // pred_fallthru
          _
        // Predicated region
        $region61: #{tpu_custom_call.1} parent=11 // pred_check
          %p809 = pneg %p424
        $region62: #{tpu_custom_call.1} parent=11 // pred_check_branch
          %811 = sbr.rel (%p809) target = $region64
        $region63: #{tpu_custom_call.1} parent=11 // pred_region
          _
        $region64: #{tpu_custom_call.1} parent=11 // pred_fallthru
          _
        // Predicated region
        $region65: #{tpu_custom_call.1} parent=11 // pred_check
          %p812 = pneg %p445
        $region66: #{tpu_custom_call.1} parent=11 // pred_check_branch
          %814 = sbr.rel (%p812) target = $region68
        $region67: #{tpu_custom_call.1} parent=11 // pred_region
          _
        $region68: #{tpu_custom_call.1} parent=11 // pred_fallthru
          _
        // Predicated region
        $region69: #{tpu_custom_call.1} parent=11 // pred_check
          %p815 = pneg %p466
        $region70: #{tpu_custom_call.1} parent=11 // pred_check_branch
          %817 = sbr.rel (%p815) target = $region72
        $region71: #{tpu_custom_call.1} parent=11 // pred_region
          _
        $region72: #{tpu_custom_call.1} parent=11 // pred_fallthru
          _
        // Predicated region
        $region73: #{tpu_custom_call.1} parent=11 // pred_check
          %p818 = pneg %p487
        $region74: #{tpu_custom_call.1} parent=11 // pred_check_branch
          %820 = sbr.rel (%p818) target = $region76
        $region75: #{tpu_custom_call.1} parent=11 // pred_region
          _
        $region76: #{tpu_custom_call.1} parent=11 // pred_fallthru
          _
        // Predicated region
        $region77: #{tpu_custom_call.1} parent=11 // pred_check
          %p821 = pneg %p508
        $region78: #{tpu_custom_call.1} parent=11 // pred_check_branch
          %823 = sbr.rel (%p821) target = $region80
        $region79: #{tpu_custom_call.1} parent=11 // pred_region
          _
        $region80: #{tpu_custom_call.1} parent=11 // pred_fallthru
          _
        // Predicated region
        $region81: #{tpu_custom_call.1} parent=11 // pred_check
          %p824 = pneg %p529
        $region82: #{tpu_custom_call.1} parent=11 // pred_check_branch
          %826 = sbr.rel (%p824) target = $region84
        $region83: #{tpu_custom_call.1} parent=11 // pred_region
          _
        $region84: #{tpu_custom_call.1} parent=11 // pred_fallthru
          _
        // Predicated region
        $region85: #{tpu_custom_call.1} parent=11 // pred_check
          %p827 = pneg %p550
        $region86: #{tpu_custom_call.1} parent=11 // pred_check_branch
          %829 = sbr.rel (%p827) target = $region88
        $region87: #{tpu_custom_call.1} parent=11 // pred_region
          _
        $region88: #{tpu_custom_call.1} parent=11 // pred_fallthru
          _
        // Predicated region
        $region89: #{tpu_custom_call.1} parent=11 // pred_check
          %p830 = pneg %p571
        $region90: #{tpu_custom_call.1} parent=11 // pred_check_branch
          %832 = sbr.rel (%p830) target = $region92
        $region91: #{tpu_custom_call.1} parent=11 // pred_region
          _
        $region92: #{tpu_custom_call.1} parent=11 // pred_fallthru
          _
        // Predicated region
        $region93: #{tpu_custom_call.1} parent=11 // pred_check
          %p833 = pneg %p592
        $region94: #{tpu_custom_call.1} parent=11 // pred_check_branch
          %835 = sbr.rel (%p833) target = $region96
        $region95: #{tpu_custom_call.1} parent=11 // pred_region
          _
        $region96: #{tpu_custom_call.1} parent=11 // pred_fallthru
          _
        // Predicated region
        $region97: #{tpu_custom_call.1} parent=11 // pred_check
          %p836 = pneg %p613
        $region98: #{tpu_custom_call.1} parent=11 // pred_check_branch
          %838 = sbr.rel (%p836) target = $region100
        $region99: #{tpu_custom_call.1} parent=11 // pred_region
          _
        $region100: #{tpu_custom_call.1} parent=11 // pred_fallthru
          _
        // Predicated region
        $region101: #{tpu_custom_call.1} parent=11 // pred_check
          %p839 = pneg %p634
        $region102: #{tpu_custom_call.1} parent=11 // pred_check_branch
          %841 = sbr.rel (%p839) target = $region104
        $region103: #{tpu_custom_call.1} parent=11 // pred_region
          _
        $region104: #{tpu_custom_call.1} parent=11 // pred_fallthru
          _
        // Predicated region
        $region105: #{tpu_custom_call.1} parent=11 // pred_check
          %p842 = pneg %p655
        $region106: #{tpu_custom_call.1} parent=11 // pred_check_branch
          %844 = sbr.rel (%p842) target = $region108
        $region107: #{tpu_custom_call.1} parent=11 // pred_region
          _
        $region108: #{tpu_custom_call.1} parent=11 // pred_fallthru
          _
        // Predicated region
        $region109: #{tpu_custom_call.1} parent=11 // pred_check
          %p845 = pneg %p676
        $region110: #{tpu_custom_call.1} parent=11 // pred_check_branch
          %847 = sbr.rel (%p845) target = $region112
        $region111: #{tpu_custom_call.1} parent=11 // pred_region
          _
        $region112: #{tpu_custom_call.1} parent=11 // pred_fallthru
          _
        // Predicated region
        $region113: #{tpu_custom_call.1} parent=11 // pred_check
          %p848 = pneg %p697
        $region114: #{tpu_custom_call.1} parent=11 // pred_check_branch
          %850 = sbr.rel (%p848) target = $region116
        $region115: #{tpu_custom_call.1} parent=11 // pred_region
          _
        $region116: #{tpu_custom_call.1} parent=11 // pred_fallthru
          _
      $region12: #{tpu_custom_call.1} parent=5 // pred_fallthru
        _
      %p851 = scmp.lt.s32.totalorder %s73, 2
      // Predicated region
      $region117: #{tpu_custom_call.1} parent=5 // pred_check
        %p852 = pneg %p851
      $region118: #{tpu_custom_call.1} parent=5 // pred_check_branch
        %854 = sbr.rel (%p852) target = $region120
      $region119: #{tpu_custom_call.1} parent=5 // pred_region
        // Predicated region
        $region121: #{tpu_custom_call.1} parent=119 // pred_check
          %p855 = pneg %p93
        $region122: #{tpu_custom_call.1} parent=119 // pred_check_branch
          %857 = sbr.rel (%p855) target = $region124
        $region123: #{tpu_custom_call.1} parent=119 // pred_region
          %p858 = scmp.lt.s32.totalorder %s73, 1
          %s859 = scalar_select %p858, %s73, 1
          %s860 = smul.addr %s859, 2
          %s861 = smul.addr %s860, 8
          %s862 = scalar_lea.vmem %s1, %s861
        $region124: #{tpu_custom_call.1} parent=119 // pred_fallthru
          _
        // Predicated region
        $region125: #{tpu_custom_call.1} parent=119 // pred_check
          %p863 = pneg %p119
        $region126: #{tpu_custom_call.1} parent=119 // pred_check_branch
          %865 = sbr.rel (%p863) target = $region128
        $region127: #{tpu_custom_call.1} parent=119 // pred_region
          %p866 = scmp.lt.s32.totalorder %s73, 1
          %s867 = scalar_select %p866, %s73, 1
          %s868 = smul.addr %s867, 2
          %s869 = smul.addr %s868, 8
          %s870 = scalar_lea.vmem %s3, %s869
        $region128: #{tpu_custom_call.1} parent=119 // pred_fallthru
          _
        // Predicated region
        $region129: #{tpu_custom_call.1} parent=119 // pred_check
          %p871 = pneg %p145
        $region130: #{tpu_custom_call.1} parent=119 // pred_check_branch
          %873 = sbr.rel (%p871) target = $region132
        $region131: #{tpu_custom_call.1} parent=119 // pred_region
          %s874 = sand.u32 %s135, 1
          %s875 = scalar_lea.sflag [#allocation5], %s874
          %s876 = sand.u32 %s135, 1
          %s877 = smul.addr %s876, 1024
          %s878 = scalar_lea.vmem [#allocation4], %s877
          %s879 = smul.u32 128, %s73
          %s881 = ssub.s32 16384, 16384
          %882 = vsyncadd %s875, %s881
          %s883 = smul.addr %s879, 2
          %s884 = smul.addr %s883, 64
          %s885 = scalar_lea.hbm %s5, %s884
          %s886 = sshll.u32 %s878, 4
          %s887 = int_to_ptr.vmem [resolvable:$true] %s886
          %892 = dma.hbm_to_vmem [thread:$0]  %s885, 16384, %s887, %s875, 128, 128, 8
        $region132: #{tpu_custom_call.1} parent=119 // pred_fallthru
          _
      $region120: #{tpu_custom_call.1} parent=5 // pred_fallthru
        _
      %p893 = scmp.le.s32.totalorder 1, %s73
      %p894 = scmp.lt.s32.totalorder %s73, 3
      %p895 = pnand %p893, %p894
      %p896 = pneg %p895
      // Predicated region
      $region133: #{tpu_custom_call.1} parent=5 // pred_check
        _
      $region134: #{tpu_custom_call.1} parent=5 // pred_check_branch
        %898 = sbr.rel (%p895) target = $region136
      $region135: #{tpu_custom_call.1} parent=5 // pred_region
        %s899 = ssub.s32 %s73, 1
        %s900 = sand.u32 %s138, 1
        %s901 = scalar_lea.sflag [#allocation5], %s900
        %s902 = sand.u32 %s138, 1
        %s903 = smul.addr %s902, 1024
        %s904 = scalar_lea.vmem [#allocation4], %s903
        // Predicated region
        $region137: #{tpu_custom_call.1} parent=135 // pred_check
          %p905 = pneg %p151
        $region138: #{tpu_custom_call.1} parent=135 // pred_check_branch
          %907 = sbr.rel (%p905) target = $region140
        $region139: #{tpu_custom_call.1} parent=135 // pred_region
          %908 = dma.done %s901, 16384
        $region140: #{tpu_custom_call.1} parent=135 // pred_fallthru
          _
        // Predicated region
        $region141: #{tpu_custom_call.1} parent=135 // pred_check
          %p909 = pneg %p172
        $region142: #{tpu_custom_call.1} parent=135 // pred_check_branch
          %911 = sbr.rel (%p909) target = $region144
        $region143: #{tpu_custom_call.1} parent=135 // pred_region
          %912 = dma.done [#allocation8], 4096
        $region144: #{tpu_custom_call.1} parent=135 // pred_fallthru
          _
        // Predicated region
        $region145: #{tpu_custom_call.1} parent=135 // pred_check
          %p913 = pneg %p193
        $region146: #{tpu_custom_call.1} parent=135 // pred_check_branch
          %915 = sbr.rel (%p913) target = $region148
        $region147: #{tpu_custom_call.1} parent=135 // pred_region
          %916 = dma.done [#allocation8], 8192
        $region148: #{tpu_custom_call.1} parent=135 // pred_fallthru
          _
        // Predicated region
        $region149: #{tpu_custom_call.1} parent=135 // pred_check
          %p917 = pneg %p277
        $region150: #{tpu_custom_call.1} parent=135 // pred_check_branch
          %919 = sbr.rel (%p917) target = $region152
        $region151: #{tpu_custom_call.1} parent=135 // pred_region
          %920 = dma.done [#allocation11], 2048
        $region152: #{tpu_custom_call.1} parent=135 // pred_fallthru
          _
        // Predicated region
        $region153: #{tpu_custom_call.1} parent=135 // pred_check
          %p921 = pneg %p382
        $region154: #{tpu_custom_call.1} parent=135 // pred_check_branch
          %923 = sbr.rel (%p921) target = $region156
        $region155: #{tpu_custom_call.1} parent=135 // pred_region
          %924 = dma.done [#allocation11], 2048
        $region156: #{tpu_custom_call.1} parent=135 // pred_fallthru
          _
        %p925 = scmp.lt.s32.totalorder %s78, 1
        %s926 = scalar_select %p925, %s78, 1
        %s927 = smul.addr %s926, 2
        %s928 = smul.addr %s927, 8
        %s929 = scalar_lea.vmem %s1, %s928
        %p930 = pneg %p99
        %p931 = pneg %p96
        %p932 = scmp.lt.s32.totalorder %s78, 1
        %s933 = scalar_select %p932, %s78, 1
        %s934 = smul.addr %s933, 2
        %s935 = smul.addr %s934, 8
        %s936 = scalar_lea.vmem %s3, %s935
        %p937 = pneg %p125
        %p938 = pneg %p122
        %s939 = sand.u32 %s138, 1
        %s940 = scalar_lea.sflag [#allocation5], %s939
        %s941 = sand.u32 %s138, 1
        %s942 = smul.addr %s941, 1024
        %s943 = scalar_lea.vmem [#allocation4], %s942
        %p944 = pneg %p151
        %p945 = pneg %p148
        %p946 = pneg %p172
        %p947 = pneg %p169
        %p948 = pneg %p193
        %p949 = pneg %p190
        %p950 = pneg %p214
        %p951 = pneg %p211
        %p952 = pneg %p235
        %p953 = pneg %p232
        %p954 = pneg %p256
        %p955 = pneg %p253
        %p956 = pneg %p277
        %p957 = pneg %p274
        %p958 = pneg %p298
        %p959 = pneg %p295
        %p960 = pneg %p319
        %p961 = pneg %p316
        %p962 = pneg %p340
        %p963 = pneg %p337
        %p964 = pneg %p361
        %p965 = pneg %p358
        %p966 = pneg %p382
        %p967 = pneg %p379
        %p968 = pneg %p403
        %p969 = pneg %p400
        %p970 = pneg %p424
        %p971 = pneg %p421
        %p972 = pneg %p445
        %p973 = pneg %p442
        %p974 = pneg %p466
        %p975 = pneg %p463
        %p976 = pneg %p487
        %p977 = pneg %p484
        %p978 = pneg %p508
        %p979 = pneg %p505
        %p980 = pneg %p529
        %p981 = pneg %p526
        %p982 = pneg %p550
        %p983 = pneg %p547
        %p984 = pneg %p571
        %p985 = pneg %p568
        %p986 = pneg %p592
        %p987 = pneg %p589
        %p988 = pneg %p613
        %p989 = pneg %p610
        %p990 = pneg %p634
        %p991 = pneg %p631
        %p992 = pneg %p655
        %p993 = pneg %p652
        %p994 = pneg %p676
        %p995 = pneg %p673
        %p996 = pneg %p697
        %p997 = pneg %p694
        %p998 = pneg %p718
        %p999 = pneg %p715
        %p1000 = scmp.lt.s32.totalorder %s78, 1
        %s1001 = scalar_select %p1000, %s78, 1
        %s1002 = smul.addr %s1001, 2
        %s1003 = smul.addr %s1002, 8
        %s1004 = scalar_lea.vmem %s1, %s1003
        %p1005 = scmp.lt.s32.totalorder %s78, 1
        %s1006 = scalar_select %p1005, %s78, 1
        %s1007 = smul.addr %s1006, 2
        %s1008 = smul.addr %s1007, 8
        %s1009 = scalar_lea.vmem %s3, %s1008
        %s1010 = smul.u32 128, %s78
        %p1012 = scmp.eq.s32.totalorder %s78, 0
        // Predicated region
        $region157: #{tpu_custom_call.1} parent=135 // pred_check
          %p1013 = pneg %p1012
        $region158: #{tpu_custom_call.1} parent=135 // pred_check_branch
          %1015 = sbr.rel (%p1013) target = $region160
        $region159: #{tpu_custom_call.1} parent=135 // pred_region
          %1016 = vst [vmem:[#allocation2] sm:$0xf] 0.0
        $region160: #{tpu_custom_call.1} parent=135 // pred_fallthru
          _
        %v1017 = vld [vmem:[%s1004] sm:$0xff]
        %v1018 = vld [vmem:[%s1004 + $0x8] sm:$0xff]
        %v1019 = vlaneseq
        %v1020 = vand.u32 %v1019, 127
        %1021 = vset.pattern.permute.xlu0 0
        %1022 = vperm.xlu0 %1021, %v1017
        %v1023 = vpop.permute.xlu0 %1022
        %1024 = vset.pattern.permute.xlu0 0
        %1025 = vperm.xlu0 %1024, %v1018
        %v1026 = vpop.permute.xlu0 %1025
        %vm1027 = vcmp.eq.s32.totalorder %v1020, %v1023
        %vm1028 = vcmp.eq.s32.totalorder %v1020, %v1026
        %v1029 = vsel %vm1027, 1, 0
        %v1030 = vsel %vm1028, 1, 0
        %v1031 = vcvt.s32.f32 %v1029
        %v1032 = vcvt.s32.f32 %v1030
        %v1033 = vpack.c.bf16 %v1032, %v1031
        %v1034 = vld [vmem:[#allocation7] sm:$0xff]
        %v1035 = vld [vmem:[#allocation7 + $0x8] sm:$0xff]
        %v1036 = vld [vmem:[#allocation7 + $0x10] sm:$0xff]
        %v1037 = vld [vmem:[#allocation7 + $0x18] sm:$0xff]
        %v1038 = vld [vmem:[#allocation7 + $0x20] sm:$0xff]
        %v1039 = vld [vmem:[#allocation7 + $0x28] sm:$0xff]
        %v1040 = vld [vmem:[#allocation7 + $0x30] sm:$0xff]
        %v1041 = vld [vmem:[#allocation7 + $0x38] sm:$0xff]
        %v1042 = vld [vmem:[#allocation7 + $0x40] sm:$0xff]
        %v1043 = vld [vmem:[#allocation7 + $0x48] sm:$0xff]
        %v1044 = vld [vmem:[#allocation7 + $0x50] sm:$0xff]
        %v1045 = vld [vmem:[#allocation7 + $0x58] sm:$0xff]
        %v1046 = vld [vmem:[#allocation7 + $0x60] sm:$0xff]
        %v1047 = vld [vmem:[#allocation7 + $0x68] sm:$0xff]
        %v1048 = vld [vmem:[#allocation7 + $0x70] sm:$0xff]
        %v1049 = vld [vmem:[#allocation7 + $0x78] sm:$0xff]
        %v1050 = vld [vmem:[#allocation7 + $0x80] sm:$0xff]
        %v1051 = vld [vmem:[#allocation7 + $0x88] sm:$0xff]
        %v1052 = vld [vmem:[#allocation7 + $0x90] sm:$0xff]
        %v1053 = vld [vmem:[#allocation7 + $0x98] sm:$0xff]
        %v1054 = vld [vmem:[#allocation7 + $0xa0] sm:$0xff]
        %v1055 = vld [vmem:[#allocation7 + $0xa8] sm:$0xff]
        %v1056 = vld [vmem:[#allocation7 + $0xb0] sm:$0xff]
        %v1057 = vld [vmem:[#allocation7 + $0xb8] sm:$0xff]
        %v1058 = vld [vmem:[#allocation7 + $0xc0] sm:$0xff]
        %v1059 = vld [vmem:[#allocation7 + $0xc8] sm:$0xff]
        %v1060 = vld [vmem:[#allocation7 + $0xd0] sm:$0xff]
        %v1061 = vld [vmem:[#allocation7 + $0xd8] sm:$0xff]
        %v1062 = vld [vmem:[#allocation7 + $0xe0] sm:$0xff]
        %v1063 = vld [vmem:[#allocation7 + $0xe8] sm:$0xff]
        %v1064 = vld [vmem:[#allocation7 + $0xf0] sm:$0xff]
        %v1065 = vld [vmem:[#allocation7 + $0xf8] sm:$0xff]
        %v1098 = vunpack.c.l.b16 %v1034
        %v1099 = vunpack.c.h.b16 %v1034
        %v1100 = vunpack.c.l.b16 %v1035
        %v1101 = vunpack.c.h.b16 %v1035
        %v1102 = vunpack.c.l.b16 %v1036
        %v1103 = vunpack.c.h.b16 %v1036
        %v1104 = vunpack.c.l.b16 %v1037
        %v1105 = vunpack.c.h.b16 %v1037
        %v1106 = vunpack.c.l.b16 %v1038
        %v1107 = vunpack.c.h.b16 %v1038
        %v1108 = vunpack.c.l.b16 %v1039
        %v1109 = vunpack.c.h.b16 %v1039
        %v1110 = vunpack.c.l.b16 %v1040
        %v1111 = vunpack.c.h.b16 %v1040
        %v1112 = vunpack.c.l.b16 %v1041
        %v1113 = vunpack.c.h.b16 %v1041
        %v1114 = vunpack.c.l.b16 %v1042
        %v1115 = vunpack.c.h.b16 %v1042
        %v1116 = vunpack.c.l.b16 %v1043
        %v1117 = vunpack.c.h.b16 %v1043
        %v1118 = vunpack.c.l.b16 %v1044
        %v1119 = vunpack.c.h.b16 %v1044
        %v1120 = vunpack.c.l.b16 %v1045
        %v1121 = vunpack.c.h.b16 %v1045
        %v1122 = vunpack.c.l.b16 %v1046
        %v1123 = vunpack.c.h.b16 %v1046
        %v1124 = vunpack.c.l.b16 %v1047
        %v1125 = vunpack.c.h.b16 %v1047
        %v1126 = vunpack.c.l.b16 %v1048
        %v1127 = vunpack.c.h.b16 %v1048
        %v1128 = vunpack.c.l.b16 %v1049
        %v1129 = vunpack.c.h.b16 %v1049
        %v1130 = vunpack.c.l.b16 %v1050
        %v1131 = vunpack.c.h.b16 %v1050
        %v1132 = vunpack.c.l.b16 %v1051
        %v1133 = vunpack.c.h.b16 %v1051
        %v1134 = vunpack.c.l.b16 %v1052
        %v1135 = vunpack.c.h.b16 %v1052
        %v1136 = vunpack.c.l.b16 %v1053
        %v1137 = vunpack.c.h.b16 %v1053
        %v1138 = vunpack.c.l.b16 %v1054
        %v1139 = vunpack.c.h.b16 %v1054
        %v1140 = vunpack.c.l.b16 %v1055
        %v1141 = vunpack.c.h.b16 %v1055
        %v1142 = vunpack.c.l.b16 %v1056
        %v1143 = vunpack.c.h.b16 %v1056
        %v1144 = vunpack.c.l.b16 %v1057
        %v1145 = vunpack.c.h.b16 %v1057
        %v1146 = vunpack.c.l.b16 %v1058
        %v1147 = vunpack.c.h.b16 %v1058
        %v1148 = vunpack.c.l.b16 %v1059
        %v1149 = vunpack.c.h.b16 %v1059
        %v1150 = vunpack.c.l.b16 %v1060
        %v1151 = vunpack.c.h.b16 %v1060
        %v1152 = vunpack.c.l.b16 %v1061
        %v1153 = vunpack.c.h.b16 %v1061
        %v1154 = vunpack.c.l.b16 %v1062
        %v1155 = vunpack.c.h.b16 %v1062
        %v1156 = vunpack.c.l.b16 %v1063
        %v1157 = vunpack.c.h.b16 %v1063
        %v1158 = vunpack.c.l.b16 %v1064
        %v1159 = vunpack.c.h.b16 %v1064
        %v1160 = vunpack.c.l.b16 %v1065
        %v1161 = vunpack.c.h.b16 %v1065
        %v1162 = vpack.c.b16 %v1102, %v1098
        %v1163 = vpack.c.b16 %v1103, %v1099
        %v1164 = vpack.c.b16 %v1104, %v1100
        %v1165 = vpack.c.b16 %v1105, %v1101
        %v1166 = vpack.c.b16 %v1110, %v1106
        %v1167 = vpack.c.b16 %v1111, %v1107
        %v1168 = vpack.c.b16 %v1112, %v1108
        %v1169 = vpack.c.b16 %v1113, %v1109
        %v1170 = vpack.c.b16 %v1118, %v1114
        %v1171 = vpack.c.b16 %v1119, %v1115
        %v1172 = vpack.c.b16 %v1120, %v1116
        %v1173 = vpack.c.b16 %v1121, %v1117
        %v1174 = vpack.c.b16 %v1126, %v1122
        %v1175 = vpack.c.b16 %v1127, %v1123
        %v1176 = vpack.c.b16 %v1128, %v1124
        %v1177 = vpack.c.b16 %v1129, %v1125
        %v1178 = vpack.c.b16 %v1134, %v1130
        %v1179 = vpack.c.b16 %v1135, %v1131
        %v1180 = vpack.c.b16 %v1136, %v1132
        %v1181 = vpack.c.b16 %v1137, %v1133
        %v1182 = vpack.c.b16 %v1142, %v1138
        %v1183 = vpack.c.b16 %v1143, %v1139
        %v1184 = vpack.c.b16 %v1144, %v1140
        %v1185 = vpack.c.b16 %v1145, %v1141
        %v1186 = vpack.c.b16 %v1150, %v1146
        %v1187 = vpack.c.b16 %v1151, %v1147
        %v1188 = vpack.c.b16 %v1152, %v1148
        %v1189 = vpack.c.b16 %v1153, %v1149
        %v1190 = vpack.c.b16 %v1158, %v1154
        %v1191 = vpack.c.b16 %v1159, %v1155
        %v1192 = vpack.c.b16 %v1160, %v1156
        %v1193 = vpack.c.b16 %v1161, %v1157
        %1226 = vmatprep.subr.bf16.mxu0 %v1191
        %1227 = vmatpush1.bf16.msra.mxu0 %v1190
        %1228 = vmatprep.subr.bf16.mxu0 %v1187
        %1229 = vmatpush1.bf16.msra.mxu0 %v1186
        %1230 = vmatprep.subr.bf16.mxu0 %v1183
        %1231 = vmatpush1.bf16.msra.mxu0 %v1182
        %1232 = vmatprep.subr.bf16.mxu0 %v1179
        %1233 = vmatpush1.bf16.msra.mxu0 %v1178
        %1234 = vmatprep.subr.bf16.mxu0 %v1175
        %1235 = vmatpush1.bf16.msra.mxu0 %v1174
        %1236 = vmatprep.subr.bf16.mxu0 %v1171
        %1237 = vmatpush1.bf16.msra.mxu0 %v1170
        %1238 = vmatprep.subr.bf16.mxu0 %v1167
        %1239 = vmatpush1.bf16.msra.mxu0 %v1166
        %1240 = vmatprep.subr.bf16.mxu0 %v1163
        %1241 = vmatpush1.bf16.msra.mxu0 %v1162
        %1242 = vmatprep.subr.bf16.mxu0 0
        %1243 = vmatpush2.bf16.msra.mxu0 0
        %1244 = vmatprep.subr.bf16.mxu0 0
        %1245 = vmatpush2.bf16.msra.mxu0 0
        %1246 = vmatprep.subr.bf16.mxu0 0
        %1247 = vmatpush2.bf16.msra.mxu0 0
        %1248 = vmatprep.subr.bf16.mxu0 0
        %1249 = vmatpush2.bf16.msra.mxu0 0
        %1250 = vmatprep.subr.bf16.mxu0 0
        %1251 = vmatpush2.bf16.msra.mxu0 0
        %1252 = vmatprep.subr.bf16.mxu0 0
        %1253 = vmatpush2.bf16.msra.mxu0 0
        %1254 = vmatprep.subr.bf16.mxu0 0
        %1255 = vmatpush2.bf16.msra.mxu0 0
        %1256 = vmatprep.subr.bf16.mxu0 0
        %1257 = vmatpush2.bf16.msra.mxu0 0
        %1258 = vmatprep.mubr.bf16.mxu0 0
        %1259 = vmatmul.mubr.bf16.gmra.mxu0 %v1033
        %v1260 = vpop.f32.mrf.mxu0
        %v1261 = vadd.f32 0.0, %v1260
        %v1262 = vpop.f32.mrf.mxu0
        %v1263 = vadd.f32 0.0, %v1262
        %v1264 = vpop.f32.mrf.mxu0
        %v1265 = vadd.f32 0.0, %v1264
        %v1266 = vpop.f32.mrf.mxu0
        %v1267 = vadd.f32 0.0, %v1266
        %1268 = vdwg.mxu0
        %1269 = vmatprep.subr.bf16.mxu0 %v1193
        %1270 = vmatpush1.bf16.msra.mxu0 %v1192
        %1271 = vmatprep.subr.bf16.mxu0 %v1189
        %1272 = vmatpush1.bf16.msra.mxu0 %v1188
        %1273 = vmatprep.subr.bf16.mxu0 %v1185
        %1274 = vmatpush1.bf16.msra.mxu0 %v1184
        %1275 = vmatprep.subr.bf16.mxu0 %v1181
        %1276 = vmatpush1.bf16.msra.mxu0 %v1180
        %1277 = vmatprep.subr.bf16.mxu0 %v1177
        %1278 = vmatpush1.bf16.msra.mxu0 %v1176
        %1279 = vmatprep.subr.bf16.mxu0 %v1173
        %1280 = vmatpush1.bf16.msra.mxu0 %v1172
        %1281 = vmatprep.subr.bf16.mxu0 %v1169
        %1282 = vmatpush1.bf16.msra.mxu0 %v1168
        %1283 = vmatprep.subr.bf16.mxu0 %v1165
        %1284 = vmatpush1.bf16.msra.mxu0 %v1164
        %1285 = vmatprep.subr.bf16.mxu0 0
        %1286 = vmatpush2.bf16.msra.mxu0 0
        %1287 = vmatprep.subr.bf16.mxu0 0
        %1288 = vmatpush2.bf16.msra.mxu0 0
        %1289 = vmatprep.subr.bf16.mxu0 0
        %1290 = vmatpush2.bf16.msra.mxu0 0
        %1291 = vmatprep.subr.bf16.mxu0 0
        %1292 = vmatpush2.bf16.msra.mxu0 0
        %1293 = vmatprep.subr.bf16.mxu0 0
        %1294 = vmatpush2.bf16.msra.mxu0 0
        %1295 = vmatprep.subr.bf16.mxu0 0
        %1296 = vmatpush2.bf16.msra.mxu0 0
        %1297 = vmatprep.subr.bf16.mxu0 0
        %1298 = vmatpush2.bf16.msra.mxu0 0
        %1299 = vmatprep.subr.bf16.mxu0 0
        %1300 = vmatpush2.bf16.msra.mxu0 0
        %1301 = vmatprep.mubr.bf16.mxu0 0
        %1302 = vmatmul.mubr.bf16.gmra.mxu0 %v1033
        %v1303 = vpop.f32.mrf.mxu0
        %v1304 = vadd.f32 0.0, %v1303
        %v1305 = vpop.f32.mrf.mxu0
        %v1306 = vadd.f32 0.0, %v1305
        %v1307 = vpop.f32.mrf.mxu0
        %v1308 = vadd.f32 0.0, %v1307
        %v1309 = vpop.f32.mrf.mxu0
        %v1310 = vadd.f32 0.0, %v1309
        %1311 = vdwg.mxu0
        %v1312 = vpack.c.bf16 %v1265, %v1261
        %v1313 = vpack.c.bf16 %v1267, %v1263
        %v1314 = vpack.c.bf16 %v1308, %v1304
        %v1315 = vpack.c.bf16 %v1310, %v1306
        %v1316 = vld [vmem:[#allocation9] sm:$0xff]
        %v1317 = vld [vmem:[#allocation9 + $0x8] sm:$0xff]
        %v1318 = vld [vmem:[#allocation9 + $0x10] sm:$0xff]
        %v1319 = vld [vmem:[#allocation9 + $0x18] sm:$0xff]
        %v1320 = vld [vmem:[#allocation9 + $0x20] sm:$0xff]
        %v1321 = vld [vmem:[#allocation9 + $0x28] sm:$0xff]
        %v1322 = vld [vmem:[#allocation9 + $0x30] sm:$0xff]
        %v1323 = vld [vmem:[#allocation9 + $0x38] sm:$0xff]
        %v1324 = vld [vmem:[#allocation9 + $0x40] sm:$0xff]
        %v1325 = vld [vmem:[#allocation9 + $0x48] sm:$0xff]
        %v1326 = vld [vmem:[#allocation9 + $0x50] sm:$0xff]
        %v1327 = vld [vmem:[#allocation9 + $0x58] sm:$0xff]
        %v1328 = vld [vmem:[#allocation9 + $0x60] sm:$0xff]
        %v1329 = vld [vmem:[#allocation9 + $0x68] sm:$0xff]
        %v1330 = vld [vmem:[#allocation9 + $0x70] sm:$0xff]
        %v1331 = vld [vmem:[#allocation9 + $0x78] sm:$0xff]
        %v1332 = vld [vmem:[#allocation9 + $0x80] sm:$0xff]
        %v1333 = vld [vmem:[#allocation9 + $0x88] sm:$0xff]
        %v1334 = vld [vmem:[#allocation9 + $0x90] sm:$0xff]
        %v1335 = vld [vmem:[#allocation9 + $0x98] sm:$0xff]
        %v1336 = vld [vmem:[#allocation9 + $0xa0] sm:$0xff]
        %v1337 = vld [vmem:[#allocation9 + $0xa8] sm:$0xff]
        %v1338 = vld [vmem:[#allocation9 + $0xb0] sm:$0xff]
        %v1339 = vld [vmem:[#allocation9 + $0xb8] sm:$0xff]
        %v1340 = vld [vmem:[#allocation9 + $0xc0] sm:$0xff]
        %v1341 = vld [vmem:[#allocation9 + $0xc8] sm:$0xff]
        %v1342 = vld [vmem:[#allocation9 + $0xd0] sm:$0xff]
        %v1343 = vld [vmem:[#allocation9 + $0xd8] sm:$0xff]
        %v1344 = vld [vmem:[#allocation9 + $0xe0] sm:$0xff]
        %v1345 = vld [vmem:[#allocation9 + $0xe8] sm:$0xff]
        %v1346 = vld [vmem:[#allocation9 + $0xf0] sm:$0xff]
        %v1347 = vld [vmem:[#allocation9 + $0xf8] sm:$0xff]
        %v1348 = vld [vmem:[#allocation9 + $0x100] sm:$0xff]
        %v1349 = vld [vmem:[#allocation9 + $0x108] sm:$0xff]
        %v1350 = vld [vmem:[#allocation9 + $0x110] sm:$0xff]
        %v1351 = vld [vmem:[#allocation9 + $0x118] sm:$0xff]
        %v1352 = vld [vmem:[#allocation9 + $0x120] sm:$0xff]
        %v1353 = vld [vmem:[#allocation9 + $0x128] sm:$0xff]
        %v1354 = vld [vmem:[#allocation9 + $0x130] sm:$0xff]
        %v1355 = vld [vmem:[#allocation9 + $0x138] sm:$0xff]
        %v1356 = vld [vmem:[#allocation9 + $0x140] sm:$0xff]
        %v1357 = vld [vmem:[#allocation9 + $0x148] sm:$0xff]
        %v1358 = vld [vmem:[#allocation9 + $0x150] sm:$0xff]
        %v1359 = vld [vmem:[#allocation9 + $0x158] sm:$0xff]
        %v1360 = vld [vmem:[#allocation9 + $0x160] sm:$0xff]
        %v1361 = vld [vmem:[#allocation9 + $0x168] sm:$0xff]
        %v1362 = vld [vmem:[#allocation9 + $0x170] sm:$0xff]
        %v1363 = vld [vmem:[#allocation9 + $0x178] sm:$0xff]
        %v1364 = vld [vmem:[#allocation9 + $0x180] sm:$0xff]
        %v1365 = vld [vmem:[#allocation9 + $0x188] sm:$0xff]
        %v1366 = vld [vmem:[#allocation9 + $0x190] sm:$0xff]
        %v1367 = vld [vmem:[#allocation9 + $0x198] sm:$0xff]
        %v1368 = vld [vmem:[#allocation9 + $0x1a0] sm:$0xff]
        %v1369 = vld [vmem:[#allocation9 + $0x1a8] sm:$0xff]
        %v1370 = vld [vmem:[#allocation9 + $0x1b0] sm:$0xff]
        %v1371 = vld [vmem:[#allocation9 + $0x1b8] sm:$0xff]
        %v1372 = vld [vmem:[#allocation9 + $0x1c0] sm:$0xff]
        %v1373 = vld [vmem:[#allocation9 + $0x1c8] sm:$0xff]
        %v1374 = vld [vmem:[#allocation9 + $0x1d0] sm:$0xff]
        %v1375 = vld [vmem:[#allocation9 + $0x1d8] sm:$0xff]
        %v1376 = vld [vmem:[#allocation9 + $0x1e0] sm:$0xff]
        %v1377 = vld [vmem:[#allocation9 + $0x1e8] sm:$0xff]
        %v1378 = vld [vmem:[#allocation9 + $0x1f0] sm:$0xff]
        %v1379 = vld [vmem:[#allocation9 + $0x1f8] sm:$0xff]
        %v1380 = vld [vmem:[%s11] sm:$0x3]
        %v1382 = vlaneseq
        %v1383 = vshrl.u32 %v1382, 7
        %v1384 = vsub.s32 0, %v1383
        %v1385 = vrot.slane %v1380, %v1384
        %v1386 = vlaneseq
        %v1387 = vshrl.u32 %v1386, 7
        %v1388 = vsub.s32 1, %v1387
        %v1389 = vrot.slane %v1380, %v1388
        %v1456 = vunpack.c.l.b16 %v1316
        %v1457 = vunpack.c.h.b16 %v1316
        %v1458 = vunpack.c.l.b16 %v1317
        %v1459 = vunpack.c.h.b16 %v1317
        %v1460 = vunpack.c.l.b16 %v1318
        %v1461 = vunpack.c.h.b16 %v1318
        %v1462 = vunpack.c.l.b16 %v1319
        %v1463 = vunpack.c.h.b16 %v1319
        %v1464 = vunpack.c.l.b16 %v1320
        %v1465 = vunpack.c.h.b16 %v1320
        %v1466 = vunpack.c.l.b16 %v1321
        %v1467 = vunpack.c.h.b16 %v1321
        %v1468 = vunpack.c.l.b16 %v1322
        %v1469 = vunpack.c.h.b16 %v1322
        %v1470 = vunpack.c.l.b16 %v1323
        %v1471 = vunpack.c.h.b16 %v1323
        %v1472 = vunpack.c.l.b16 %v1324
        %v1473 = vunpack.c.h.b16 %v1324
        %v1474 = vunpack.c.l.b16 %v1325
        %v1475 = vunpack.c.h.b16 %v1325
        %v1476 = vunpack.c.l.b16 %v1326
        %v1477 = vunpack.c.h.b16 %v1326
        %v1478 = vunpack.c.l.b16 %v1327
        %v1479 = vunpack.c.h.b16 %v1327
        %v1480 = vunpack.c.l.b16 %v1328
        %v1481 = vunpack.c.h.b16 %v1328
        %v1482 = vunpack.c.l.b16 %v1329
        %v1483 = vunpack.c.h.b16 %v1329
        %v1484 = vunpack.c.l.b16 %v1330
        %v1485 = vunpack.c.h.b16 %v1330
        %v1486 = vunpack.c.l.b16 %v1331
        %v1487 = vunpack.c.h.b16 %v1331
        %v1488 = vunpack.c.l.b16 %v1332
        %v1489 = vunpack.c.h.b16 %v1332
        %v1490 = vunpack.c.l.b16 %v1333
        %v1491 = vunpack.c.h.b16 %v1333
        %v1492 = vunpack.c.l.b16 %v1334
        %v1493 = vunpack.c.h.b16 %v1334
        %v1494 = vunpack.c.l.b16 %v1335
        %v1495 = vunpack.c.h.b16 %v1335
        %v1496 = vunpack.c.l.b16 %v1336
        %v1497 = vunpack.c.h.b16 %v1336
        %v1498 = vunpack.c.l.b16 %v1337
        %v1499 = vunpack.c.h.b16 %v1337
        %v1500 = vunpack.c.l.b16 %v1338
        %v1501 = vunpack.c.h.b16 %v1338
        %v1502 = vunpack.c.l.b16 %v1339
        %v1503 = vunpack.c.h.b16 %v1339
        %v1504 = vunpack.c.l.b16 %v1340
        %v1505 = vunpack.c.h.b16 %v1340
        %v1506 = vunpack.c.l.b16 %v1341
        %v1507 = vunpack.c.h.b16 %v1341
        %v1508 = vunpack.c.l.b16 %v1342
        %v1509 = vunpack.c.h.b16 %v1342
        %v1510 = vunpack.c.l.b16 %v1343
        %v1511 = vunpack.c.h.b16 %v1343
        %v1512 = vunpack.c.l.b16 %v1344
        %v1513 = vunpack.c.h.b16 %v1344
        %v1514 = vunpack.c.l.b16 %v1345
        %v1515 = vunpack.c.h.b16 %v1345
        %v1516 = vunpack.c.l.b16 %v1346
        %v1517 = vunpack.c.h.b16 %v1346
        %v1518 = vunpack.c.l.b16 %v1347
        %v1519 = vunpack.c.h.b16 %v1347
        %v1520 = vunpack.c.l.b16 %v1348
        %v1521 = vunpack.c.h.b16 %v1348
        %v1522 = vunpack.c.l.b16 %v1349
        %v1523 = vunpack.c.h.b16 %v1349
        %v1524 = vunpack.c.l.b16 %v1350
        %v1525 = vunpack.c.h.b16 %v1350
        %v1526 = vunpack.c.l.b16 %v1351
        %v1527 = vunpack.c.h.b16 %v1351
        %v1528 = vunpack.c.l.b16 %v1352
        %v1529 = vunpack.c.h.b16 %v1352
        %v1530 = vunpack.c.l.b16 %v1353
        %v1531 = vunpack.c.h.b16 %v1353
        %v1532 = vunpack.c.l.b16 %v1354
        %v1533 = vunpack.c.h.b16 %v1354
        %v1534 = vunpack.c.l.b16 %v1355
        %v1535 = vunpack.c.h.b16 %v1355
        %v1536 = vunpack.c.l.b16 %v1356
        %v1537 = vunpack.c.h.b16 %v1356
        %v1538 = vunpack.c.l.b16 %v1357
        %v1539 = vunpack.c.h.b16 %v1357
        %v1540 = vunpack.c.l.b16 %v1358
        %v1541 = vunpack.c.h.b16 %v1358
        %v1542 = vunpack.c.l.b16 %v1359
        %v1543 = vunpack.c.h.b16 %v1359
        %v1544 = vunpack.c.l.b16 %v1360
        %v1545 = vunpack.c.h.b16 %v1360
        %v1546 = vunpack.c.l.b16 %v1361
        %v1547 = vunpack.c.h.b16 %v1361
        %v1548 = vunpack.c.l.b16 %v1362
        %v1549 = vunpack.c.h.b16 %v1362
        %v1550 = vunpack.c.l.b16 %v1363
        %v1551 = vunpack.c.h.b16 %v1363
        %v1552 = vunpack.c.l.b16 %v1364
        %v1553 = vunpack.c.h.b16 %v1364
        %v1554 = vunpack.c.l.b16 %v1365
        %v1555 = vunpack.c.h.b16 %v1365
        %v1556 = vunpack.c.l.b16 %v1366
        %v1557 = vunpack.c.h.b16 %v1366
        %v1558 = vunpack.c.l.b16 %v1367
        %v1559 = vunpack.c.h.b16 %v1367
        %v1560 = vunpack.c.l.b16 %v1368
        %v1561 = vunpack.c.h.b16 %v1368
        %v1562 = vunpack.c.l.b16 %v1369
        %v1563 = vunpack.c.h.b16 %v1369
        %v1564 = vunpack.c.l.b16 %v1370
        %v1565 = vunpack.c.h.b16 %v1370
        %v1566 = vunpack.c.l.b16 %v1371
        %v1567 = vunpack.c.h.b16 %v1371
        %v1568 = vunpack.c.l.b16 %v1372
        %v1569 = vunpack.c.h.b16 %v1372
        %v1570 = vunpack.c.l.b16 %v1373
        %v1571 = vunpack.c.h.b16 %v1373
        %v1572 = vunpack.c.l.b16 %v1374
        %v1573 = vunpack.c.h.b16 %v1374
        %v1574 = vunpack.c.l.b16 %v1375
        %v1575 = vunpack.c.h.b16 %v1375
        %v1576 = vunpack.c.l.b16 %v1376
        %v1577 = vunpack.c.h.b16 %v1376
        %v1578 = vunpack.c.l.b16 %v1377
        %v1579 = vunpack.c.h.b16 %v1377
        %v1580 = vunpack.c.l.b16 %v1378
        %v1581 = vunpack.c.h.b16 %v1378
        %v1582 = vunpack.c.l.b16 %v1379
        %v1583 = vunpack.c.h.b16 %v1379
        %v1584 = vpack.c.b16 %v1458, %v1456
        %v1585 = vpack.c.b16 %v1459, %v1457
        %v1586 = vpack.c.b16 %v1462, %v1460
        %v1587 = vpack.c.b16 %v1463, %v1461
        %v1588 = vpack.c.b16 %v1466, %v1464
        %v1589 = vpack.c.b16 %v1467, %v1465
        %v1590 = vpack.c.b16 %v1470, %v1468
        %v1591 = vpack.c.b16 %v1471, %v1469
        %v1592 = vpack.c.b16 %v1474, %v1472
        %v1593 = vpack.c.b16 %v1475, %v1473
        %v1594 = vpack.c.b16 %v1478, %v1476
        %v1595 = vpack.c.b16 %v1479, %v1477
        %v1596 = vpack.c.b16 %v1482, %v1480
        %v1597 = vpack.c.b16 %v1483, %v1481
        %v1598 = vpack.c.b16 %v1486, %v1484
        %v1599 = vpack.c.b16 %v1487, %v1485
        %v1600 = vpack.c.b16 %v1490, %v1488
        %v1601 = vpack.c.b16 %v1491, %v1489
        %v1602 = vpack.c.b16 %v1494, %v1492
        %v1603 = vpack.c.b16 %v1495, %v1493
        %v1604 = vpack.c.b16 %v1498, %v1496
        %v1605 = vpack.c.b16 %v1499, %v1497
        %v1606 = vpack.c.b16 %v1502, %v1500
        %v1607 = vpack.c.b16 %v1503, %v1501
        %v1608 = vpack.c.b16 %v1506, %v1504
        %v1609 = vpack.c.b16 %v1507, %v1505
        %v1610 = vpack.c.b16 %v1510, %v1508
        %v1611 = vpack.c.b16 %v1511, %v1509
        %v1612 = vpack.c.b16 %v1514, %v1512
        %v1613 = vpack.c.b16 %v1515, %v1513
        %v1614 = vpack.c.b16 %v1518, %v1516
        %v1615 = vpack.c.b16 %v1519, %v1517
        %v1616 = vpack.c.b16 %v1522, %v1520
        %v1617 = vpack.c.b16 %v1523, %v1521
        %v1618 = vpack.c.b16 %v1526, %v1524
        %v1619 = vpack.c.b16 %v1527, %v1525
        %v1620 = vpack.c.b16 %v1530, %v1528
        %v1621 = vpack.c.b16 %v1531, %v1529
        %v1622 = vpack.c.b16 %v1534, %v1532
        %v1623 = vpack.c.b16 %v1535, %v1533
        %v1624 = vpack.c.b16 %v1538, %v1536
        %v1625 = vpack.c.b16 %v1539, %v1537
        %v1626 = vpack.c.b16 %v1542, %v1540
        %v1627 = vpack.c.b16 %v1543, %v1541
        %v1628 = vpack.c.b16 %v1546, %v1544
        %v1629 = vpack.c.b16 %v1547, %v1545
        %v1630 = vpack.c.b16 %v1550, %v1548
        %v1631 = vpack.c.b16 %v1551, %v1549
        %v1632 = vpack.c.b16 %v1554, %v1552
        %v1633 = vpack.c.b16 %v1555, %v1553
        %v1634 = vpack.c.b16 %v1558, %v1556
        %v1635 = vpack.c.b16 %v1559, %v1557
        %v1636 = vpack.c.b16 %v1562, %v1560
        %v1637 = vpack.c.b16 %v1563, %v1561
        %v1638 = vpack.c.b16 %v1566, %v1564
        %v1639 = vpack.c.b16 %v1567, %v1565
        %v1640 = vpack.c.b16 %v1570, %v1568
        %v1641 = vpack.c.b16 %v1571, %v1569
        %v1642 = vpack.c.b16 %v1574, %v1572
        %v1643 = vpack.c.b16 %v1575, %v1573
        %v1644 = vpack.c.b16 %v1578, %v1576
        %v1645 = vpack.c.b16 %v1579, %v1577
        %v1646 = vpack.c.b16 %v1582, %v1580
        %v1647 = vpack.c.b16 %v1583, %v1581
        %1712 = vmatprep.subr.bf16.mxu0 %v1599
        %1713 = vmatpush1.bf16.msra.mxu0 %v1598
        %1714 = vmatprep.subr.bf16.mxu0 %v1597
        %1715 = vmatpush1.bf16.msra.mxu0 %v1596
        %1716 = vmatprep.subr.bf16.mxu0 %v1595
        %1717 = vmatpush1.bf16.msra.mxu0 %v1594
        %1718 = vmatprep.subr.bf16.mxu0 %v1593
        %1719 = vmatpush1.bf16.msra.mxu0 %v1592
        %1720 = vmatprep.subr.bf16.mxu0 %v1591
        %1721 = vmatpush1.bf16.msra.mxu0 %v1590
        %1722 = vmatprep.subr.bf16.mxu0 %v1589
        %1723 = vmatpush1.bf16.msra.mxu0 %v1588
        %1724 = vmatprep.subr.bf16.mxu0 %v1587
        %1725 = vmatpush1.bf16.msra.mxu0 %v1586
        %1726 = vmatprep.subr.bf16.mxu0 %v1585
        %1727 = vmatpush1.bf16.msra.mxu0 %v1584
        %1728 = vmatprep.subr.bf16.mxu0 %v1615
        %1729 = vmatpush2.bf16.msra.mxu0 %v1614
        %1730 = vmatprep.subr.bf16.mxu0 %v1613
        %1731 = vmatpush2.bf16.msra.mxu0 %v1612
        %1732 = vmatprep.subr.bf16.mxu0 %v1611
        %1733 = vmatpush2.bf16.msra.mxu0 %v1610
        %1734 = vmatprep.subr.bf16.mxu0 %v1609
        %1735 = vmatpush2.bf16.msra.mxu0 %v1608
        %1736 = vmatprep.subr.bf16.mxu0 %v1607
        %1737 = vmatpush2.bf16.msra.mxu0 %v1606
        %1738 = vmatprep.subr.bf16.mxu0 %v1605
        %1739 = vmatpush2.bf16.msra.mxu0 %v1604
        %1740 = vmatprep.subr.bf16.mxu0 %v1603
        %1741 = vmatpush2.bf16.msra.mxu0 %v1602
        %1742 = vmatprep.subr.bf16.mxu0 %v1601
        %1743 = vmatpush2.bf16.msra.mxu0 %v1600
        %1744 = vmatprep.mubr.bf16.mxu0 %v1313
        %1745 = vmatmul.mubr.bf16.gmra.mxu0 %v1312
        %v1746 = vpop.f32.mrf.mxu0
        %v1747 = vadd.f32 %v1385, %v1746
        %v1748 = vpop.f32.mrf.mxu0
        %v1749 = vadd.f32 %v1389, %v1748
        %v1750 = vpop.f32.mrf.mxu0
        %v1751 = vadd.f32 %v1385, %v1750
        %v1752 = vpop.f32.mrf.mxu0
        %v1753 = vadd.f32 %v1389, %v1752
        %1754 = vdwg.mxu0
        %1755 = vmatprep.subr.bf16.mxu0 %v1631
        %1756 = vmatpush1.bf16.msra.mxu0 %v1630
        %1757 = vmatprep.subr.bf16.mxu0 %v1629
        %1758 = vmatpush1.bf16.msra.mxu0 %v1628
        %1759 = vmatprep.subr.bf16.mxu0 %v1627
        %1760 = vmatpush1.bf16.msra.mxu0 %v1626
        %1761 = vmatprep.subr.bf16.mxu0 %v1625
        %1762 = vmatpush1.bf16.msra.mxu0 %v1624
        %1763 = vmatprep.subr.bf16.mxu0 %v1623
        %1764 = vmatpush1.bf16.msra.mxu0 %v1622
        %1765 = vmatprep.subr.bf16.mxu0 %v1621
        %1766 = vmatpush1.bf16.msra.mxu0 %v1620
        %1767 = vmatprep.subr.bf16.mxu0 %v1619
        %1768 = vmatpush1.bf16.msra.mxu0 %v1618
        %1769 = vmatprep.subr.bf16.mxu0 %v1617
        %1770 = vmatpush1.bf16.msra.mxu0 %v1616
        %1771 = vmatprep.subr.bf16.mxu0 %v1647
        %1772 = vmatpush2.bf16.msra.mxu0 %v1646
        %1773 = vmatprep.subr.bf16.mxu0 %v1645
        %1774 = vmatpush2.bf16.msra.mxu0 %v1644
        %1775 = vmatprep.subr.bf16.mxu0 %v1643
        %1776 = vmatpush2.bf16.msra.mxu0 %v1642
        %1777 = vmatprep.subr.bf16.mxu0 %v1641
        %1778 = vmatpush2.bf16.msra.mxu0 %v1640
        %1779 = vmatprep.subr.bf16.mxu0 %v1639
        %1780 = vmatpush2.bf16.msra.mxu0 %v1638
        %1781 = vmatprep.subr.bf16.mxu0 %v1637
        %1782 = vmatpush2.bf16.msra.mxu0 %v1636
        %1783 = vmatprep.subr.bf16.mxu0 %v1635
        %1784 = vmatpush2.bf16.msra.mxu0 %v1634
        %1785 = vmatprep.subr.bf16.mxu0 %v1633
        %1786 = vmatpush2.bf16.msra.mxu0 %v1632
        %1787 = vmatprep.mubr.bf16.mxu0 %v1315
        %1788 = vmatmul.mubr.bf16.gmra.mxu0 %v1314
        %v1789 = vpop.f32.mrf.mxu0
        %v1790 = vadd.f32 %v1747, %v1789
        %v1791 = vpop.f32.mrf.mxu0
        %v1792 = vadd.f32 %v1749, %v1791
        %v1793 = vpop.f32.mrf.mxu0
        %v1794 = vadd.f32 %v1751, %v1793
        %v1795 = vpop.f32.mrf.mxu0
        %v1796 = vadd.f32 %v1753, %v1795
        %1797 = vdwg.mxu0
        %v1798 = vmax.f32 %v1790, 0.0
        %v1799 = vmax.f32 %v1792, 0.0
        %v1800 = vmax.f32 %v1794, 0.0
        %v1801 = vmax.f32 %v1796, 0.0
        %v1802 = vpack.c.bf16 %v1800, %v1798
        %v1803 = vpack.c.bf16 %v1801, %v1799
        %v1804 = vld [vmem:[%s13] sm:$0xf]
        %v1805 = vld [vmem:[%s13 + $0x4] sm:$0xf]
        %v1806 = vld [vmem:[%s13 + $0x8] sm:$0xf]
        %v1807 = vld [vmem:[%s13 + $0xc] sm:$0xf]
        %v1808 = vld [vmem:[%s13 + $0x10] sm:$0xf]
        %v1809 = vld [vmem:[%s13 + $0x14] sm:$0xf]
        %v1810 = vld [vmem:[%s13 + $0x18] sm:$0xf]
        %v1811 = vld [vmem:[%s13 + $0x1c] sm:$0xf]
        %v1812 = vld [vmem:[%s13 + $0x20] sm:$0xf]
        %v1813 = vld [vmem:[%s13 + $0x24] sm:$0xf]
        %v1814 = vld [vmem:[%s13 + $0x28] sm:$0xf]
        %v1815 = vld [vmem:[%s13 + $0x2c] sm:$0xf]
        %v1816 = vld [vmem:[%s13 + $0x30] sm:$0xf]
        %v1817 = vld [vmem:[%s13 + $0x34] sm:$0xf]
        %v1818 = vld [vmem:[%s13 + $0x38] sm:$0xf]
        %v1819 = vld [vmem:[%s13 + $0x3c] sm:$0xf]
        %v1820 = vld [vmem:[%s13 + $0x40] sm:$0xf]
        %v1821 = vld [vmem:[%s13 + $0x44] sm:$0xf]
        %v1822 = vld [vmem:[%s13 + $0x48] sm:$0xf]
        %v1823 = vld [vmem:[%s13 + $0x4c] sm:$0xf]
        %v1824 = vld [vmem:[%s13 + $0x50] sm:$0xf]
        %v1825 = vld [vmem:[%s13 + $0x54] sm:$0xf]
        %v1826 = vld [vmem:[%s13 + $0x58] sm:$0xf]
        %v1827 = vld [vmem:[%s13 + $0x5c] sm:$0xf]
        %v1828 = vld [vmem:[%s13 + $0x60] sm:$0xf]
        %v1829 = vld [vmem:[%s13 + $0x64] sm:$0xf]
        %v1830 = vld [vmem:[%s13 + $0x68] sm:$0xf]
        %v1831 = vld [vmem:[%s13 + $0x6c] sm:$0xf]
        %v1832 = vld [vmem:[%s13 + $0x70] sm:$0xf]
        %v1833 = vld [vmem:[%s13 + $0x74] sm:$0xf]
        %v1834 = vld [vmem:[%s13 + $0x78] sm:$0xf]
        %v1835 = vld [vmem:[%s13 + $0x7c] sm:$0xf]
        %v1836 = vld [vmem:[%s15] sm:$0x1]
        %v1838 = vlaneseq
        %v1839 = vshrl.u32 %v1838, 7
        %v1840 = vsub.s32 0, %v1839
        %v1841 = vrot.slane %v1836, %v1840
        %v1875 = vunpack.c.l.b16 %v1804
        %v1876 = vunpack.c.l.b16 %v1805
        %v1877 = vunpack.c.l.b16 %v1806
        %v1878 = vunpack.c.l.b16 %v1807
        %v1879 = vunpack.c.l.b16 %v1808
        %v1880 = vunpack.c.l.b16 %v1809
        %v1881 = vunpack.c.l.b16 %v1810
        %v1882 = vunpack.c.l.b16 %v1811
        %v1883 = vunpack.c.l.b16 %v1812
        %v1884 = vunpack.c.l.b16 %v1813
        %v1885 = vunpack.c.l.b16 %v1814
        %v1886 = vunpack.c.l.b16 %v1815
        %v1887 = vunpack.c.l.b16 %v1816
        %v1888 = vunpack.c.l.b16 %v1817
        %v1889 = vunpack.c.l.b16 %v1818
        %v1890 = vunpack.c.l.b16 %v1819
        %v1891 = vunpack.c.l.b16 %v1820
        %v1892 = vunpack.c.l.b16 %v1821
        %v1893 = vunpack.c.l.b16 %v1822
        %v1894 = vunpack.c.l.b16 %v1823
        %v1895 = vunpack.c.l.b16 %v1824
        %v1896 = vunpack.c.l.b16 %v1825
        %v1897 = vunpack.c.l.b16 %v1826
        %v1898 = vunpack.c.l.b16 %v1827
        %v1899 = vunpack.c.l.b16 %v1828
        %v1900 = vunpack.c.l.b16 %v1829
        %v1901 = vunpack.c.l.b16 %v1830
        %v1902 = vunpack.c.l.b16 %v1831
        %v1903 = vunpack.c.l.b16 %v1832
        %v1904 = vunpack.c.l.b16 %v1833
        %v1905 = vunpack.c.l.b16 %v1834
        %v1906 = vunpack.c.l.b16 %v1835
        %v1907 = vpack.c.b16 %v1876, %v1875
        %v1908 = vpack.c.b16 %v1878, %v1877
        %v1909 = vpack.c.b16 %v1880, %v1879
        %v1910 = vpack.c.b16 %v1882, %v1881
        %v1911 = vpack.c.b16 %v1884, %v1883
        %v1912 = vpack.c.b16 %v1886, %v1885
        %v1913 = vpack.c.b16 %v1888, %v1887
        %v1914 = vpack.c.b16 %v1890, %v1889
        %v1915 = vpack.c.b16 %v1892, %v1891
        %v1916 = vpack.c.b16 %v1894, %v1893
        %v1917 = vpack.c.b16 %v1896, %v1895
        %v1918 = vpack.c.b16 %v1898, %v1897
        %v1919 = vpack.c.b16 %v1900, %v1899
        %v1920 = vpack.c.b16 %v1902, %v1901
        %v1921 = vpack.c.b16 %v1904, %v1903
        %v1922 = vpack.c.b16 %v1906, %v1905
        %1939 = vmatprep.subr.bf16.mxu0 0
        %1940 = vmatpush1.bf16.msra.mxu0 %v1914
        %1941 = vmatprep.subr.bf16.mxu0 0
        %1942 = vmatpush1.bf16.msra.mxu0 %v1913
        %1943 = vmatprep.subr.bf16.mxu0 0
        %1944 = vmatpush1.bf16.msra.mxu0 %v1912
        %1945 = vmatprep.subr.bf16.mxu0 0
        %1946 = vmatpush1.bf16.msra.mxu0 %v1911
        %1947 = vmatprep.subr.bf16.mxu0 0
        %1948 = vmatpush1.bf16.msra.mxu0 %v1910
        %1949 = vmatprep.subr.bf16.mxu0 0
        %1950 = vmatpush1.bf16.msra.mxu0 %v1909
        %1951 = vmatprep.subr.bf16.mxu0 0
        %1952 = vmatpush1.bf16.msra.mxu0 %v1908
        %1953 = vmatprep.subr.bf16.mxu0 0
        %1954 = vmatpush1.bf16.msra.mxu0 %v1907
        %1955 = vmatprep.subr.bf16.mxu0 0
        %1956 = vmatpush2.bf16.msra.mxu0 %v1922
        %1957 = vmatprep.subr.bf16.mxu0 0
        %1958 = vmatpush2.bf16.msra.mxu0 %v1921
        %1959 = vmatprep.subr.bf16.mxu0 0
        %1960 = vmatpush2.bf16.msra.mxu0 %v1920
        %1961 = vmatprep.subr.bf16.mxu0 0
        %1962 = vmatpush2.bf16.msra.mxu0 %v1919
        %1963 = vmatprep.subr.bf16.mxu0 0
        %1964 = vmatpush2.bf16.msra.mxu0 %v1918
        %1965 = vmatprep.subr.bf16.mxu0 0
        %1966 = vmatpush2.bf16.msra.mxu0 %v1917
        %1967 = vmatprep.subr.bf16.mxu0 0
        %1968 = vmatpush2.bf16.msra.mxu0 %v1916
        %1969 = vmatprep.subr.bf16.mxu0 0
        %1970 = vmatpush2.bf16.msra.mxu0 %v1915
        %1971 = vmatprep.mubr.bf16.mxu0 %v1803
        %1972 = vmatmul.mubr.bf16.gmra.mxu0 %v1802
        %v1973 = vpop.f32.mrf.mxu0
        %v1974 = vadd.f32 %v1841, %v1973
        %v1975 = vpop.f32.mrf.mxu0
        %v1976 = vpop.f32.mrf.mxu0
        %v1977 = vadd.f32 %v1841, %v1976
        %v1978 = vpop.f32.mrf.mxu0
        %1979 = vdwg.mxu0
        %v1980 = vmax.f32 %v1974, 0.0
        %v1981 = vmax.f32 %v1977, 0.0
        %v1982 = vpack.c.bf16 %v1981, %v1980
        %v1983 = vld [vmem:[#allocation10] sm:$0xff]
        %v1984 = vld [vmem:[#allocation10 + $0x8] sm:$0xff]
        %v1985 = vld [vmem:[#allocation10 + $0x10] sm:$0xff]
        %v1986 = vld [vmem:[#allocation10 + $0x18] sm:$0xff]
        %v1987 = vld [vmem:[#allocation10 + $0x20] sm:$0xff]
        %v1988 = vld [vmem:[#allocation10 + $0x28] sm:$0xff]
        %v1989 = vld [vmem:[#allocation10 + $0x30] sm:$0xff]
        %v1990 = vld [vmem:[#allocation10 + $0x38] sm:$0xff]
        %v1991 = vld [vmem:[#allocation10 + $0x40] sm:$0xff]
        %v1992 = vld [vmem:[#allocation10 + $0x48] sm:$0xff]
        %v1993 = vld [vmem:[#allocation10 + $0x50] sm:$0xff]
        %v1994 = vld [vmem:[#allocation10 + $0x58] sm:$0xff]
        %v1995 = vld [vmem:[#allocation10 + $0x60] sm:$0xff]
        %v1996 = vld [vmem:[#allocation10 + $0x68] sm:$0xff]
        %v1997 = vld [vmem:[#allocation10 + $0x70] sm:$0xff]
        %v1998 = vld [vmem:[#allocation10 + $0x78] sm:$0xff]
        %v1999 = vld [vmem:[%s19] sm:$0x3]
        %v2001 = vlaneseq
        %v2002 = vshrl.u32 %v2001, 7
        %v2003 = vsub.s32 0, %v2002
        %v2004 = vrot.slane %v1999, %v2003
        %v2005 = vlaneseq
        %v2006 = vshrl.u32 %v2005, 7
        %v2007 = vsub.s32 1, %v2006
        %v2008 = vrot.slane %v1999, %v2007
        %v2027 = vunpack.c.l.b16 %v1983
        %v2028 = vunpack.c.h.b16 %v1983
        %v2029 = vunpack.c.l.b16 %v1984
        %v2030 = vunpack.c.h.b16 %v1984
        %v2031 = vunpack.c.l.b16 %v1985
        %v2032 = vunpack.c.h.b16 %v1985
        %v2033 = vunpack.c.l.b16 %v1986
        %v2034 = vunpack.c.h.b16 %v1986
        %v2035 = vunpack.c.l.b16 %v1987
        %v2036 = vunpack.c.h.b16 %v1987
        %v2037 = vunpack.c.l.b16 %v1988
        %v2038 = vunpack.c.h.b16 %v1988
        %v2039 = vunpack.c.l.b16 %v1989
        %v2040 = vunpack.c.h.b16 %v1989
        %v2041 = vunpack.c.l.b16 %v1990
        %v2042 = vunpack.c.h.b16 %v1990
        %v2043 = vunpack.c.l.b16 %v1991
        %v2044 = vunpack.c.h.b16 %v1991
        %v2045 = vunpack.c.l.b16 %v1992
        %v2046 = vunpack.c.h.b16 %v1992
        %v2047 = vunpack.c.l.b16 %v1993
        %v2048 = vunpack.c.h.b16 %v1993
        %v2049 = vunpack.c.l.b16 %v1994
        %v2050 = vunpack.c.h.b16 %v1994
        %v2051 = vunpack.c.l.b16 %v1995
        %v2052 = vunpack.c.h.b16 %v1995
        %v2053 = vunpack.c.l.b16 %v1996
        %v2054 = vunpack.c.h.b16 %v1996
        %v2055 = vunpack.c.l.b16 %v1997
        %v2056 = vunpack.c.h.b16 %v1997
        %v2057 = vunpack.c.l.b16 %v1998
        %v2058 = vunpack.c.h.b16 %v1998
        %v2059 = vpack.c.b16 %v2029, %v2027
        %v2060 = vpack.c.b16 %v2030, %v2028
        %v2061 = vpack.c.b16 %v2033, %v2031
        %v2062 = vpack.c.b16 %v2034, %v2032
        %v2063 = vpack.c.b16 %v2037, %v2035
        %v2064 = vpack.c.b16 %v2038, %v2036
        %v2065 = vpack.c.b16 %v2041, %v2039
        %v2066 = vpack.c.b16 %v2042, %v2040
        %v2067 = vpack.c.b16 %v2045, %v2043
        %v2068 = vpack.c.b16 %v2046, %v2044
        %v2069 = vpack.c.b16 %v2049, %v2047
        %v2070 = vpack.c.b16 %v2050, %v2048
        %v2071 = vpack.c.b16 %v2053, %v2051
        %v2072 = vpack.c.b16 %v2054, %v2052
        %v2073 = vpack.c.b16 %v2057, %v2055
        %v2074 = vpack.c.b16 %v2058, %v2056
        %2091 = vmatprep.subr.bf16.mxu0 %v2074
        %2092 = vmatpush1.bf16.msra.mxu0 %v2073
        %2093 = vmatprep.subr.bf16.mxu0 %v2072
        %2094 = vmatpush1.bf16.msra.mxu0 %v2071
        %2095 = vmatprep.subr.bf16.mxu0 %v2070
        %2096 = vmatpush1.bf16.msra.mxu0 %v2069
        %2097 = vmatprep.subr.bf16.mxu0 %v2068
        %2098 = vmatpush1.bf16.msra.mxu0 %v2067
        %2099 = vmatprep.subr.bf16.mxu0 %v2066
        %2100 = vmatpush1.bf16.msra.mxu0 %v2065
        %2101 = vmatprep.subr.bf16.mxu0 %v2064
        %2102 = vmatpush1.bf16.msra.mxu0 %v2063
        %2103 = vmatprep.subr.bf16.mxu0 %v2062
        %2104 = vmatpush1.bf16.msra.mxu0 %v2061
        %2105 = vmatprep.subr.bf16.mxu0 %v2060
        %2106 = vmatpush1.bf16.msra.mxu0 %v2059
        %2107 = vmatprep.subr.bf16.mxu0 0
        %2108 = vmatpush2.bf16.msra.mxu0 0
        %2109 = vmatprep.subr.bf16.mxu0 0
        %2110 = vmatpush2.bf16.msra.mxu0 0
        %2111 = vmatprep.subr.bf16.mxu0 0
        %2112 = vmatpush2.bf16.msra.mxu0 0
        %2113 = vmatprep.subr.bf16.mxu0 0
        %2114 = vmatpush2.bf16.msra.mxu0 0
        %2115 = vmatprep.subr.bf16.mxu0 0
        %2116 = vmatpush2.bf16.msra.mxu0 0
        %2117 = vmatprep.subr.bf16.mxu0 0
        %2118 = vmatpush2.bf16.msra.mxu0 0
        %2119 = vmatprep.subr.bf16.mxu0 0
        %2120 = vmatpush2.bf16.msra.mxu0 0
        %2121 = vmatprep.subr.bf16.mxu0 0
        %2122 = vmatpush2.bf16.msra.mxu0 0
        %2123 = vmatprep.mubr.bf16.mxu0 0
        %2124 = vmatmul.mubr.bf16.gmra.mxu0 %v1982
        %v2125 = vpop.f32.mrf.mxu0
        %v2126 = vadd.f32 %v2004, %v2125
        %v2127 = vpop.f32.mrf.mxu0
        %v2128 = vadd.f32 %v2008, %v2127
        %v2129 = vpop.f32.mrf.mxu0
        %v2130 = vadd.f32 %v2004, %v2129
        %v2131 = vpop.f32.mrf.mxu0
        %v2132 = vadd.f32 %v2008, %v2131
        %2133 = vdwg.mxu0
        %v2134 = vmul.f32 %v2128, 0.5
        %v2135 = vmul.f32 %v2132, 0.5
        %v2136 = vmul.f32 %v2134, 1.442695
        %v2137 = vpow.pop %v2136
        %v2138 = vmul.f32 %v2135, 1.442695
        %v2139 = vpow.pop %v2138
        %v2140 = vld [vmem:[%s1009] sm:$0xff]
        %v2141 = vld [vmem:[%s1009 + $0x8] sm:$0xff]
        %v2142 = vmul.f32 %v2137, %v2140
        %v2143 = vmul.f32 %v2139, %v2141
        %v2144 = vadd.f32 %v2126, %v2142
        %v2145 = vadd.f32 %v2130, %v2143
        %v2147 = vrot.slane %v2144, 2
        %v2149 = vrot.slane %v2144, 4
        %v2151 = vrot.slane %v2144, 6
        %v2154 = vrot.slane %v2145, 2
        %v2156 = vrot.slane %v2145, 4
        %v2158 = vrot.slane %v2145, 6
        %v2160 = vpack.c.bf16 %v2144, %v2144
        %v2161 = vpack.c.bf16 %v2147, %v2147
        %v2162 = vpack.c.bf16 %v2149, %v2149
        %v2163 = vpack.c.bf16 %v2151, %v2151
        %v2164 = vpack.c.bf16 %v2145, %v2145
        %v2165 = vpack.c.bf16 %v2154, %v2154
        %v2166 = vpack.c.bf16 %v2156, %v2156
        %v2167 = vpack.c.bf16 %v2158, %v2158
        %v2168 = vld [vmem:[#allocation2] sm:$0xf]
        %v2169 = vld [vmem:[%s904] sm:$0xff]
        %v2170 = vld [vmem:[%s904 + $0x8] sm:$0xff]
        %v2171 = vld [vmem:[%s904 + $0x10] sm:$0xff]
        %v2172 = vld [vmem:[%s904 + $0x18] sm:$0xff]
        %v2173 = vld [vmem:[%s904 + $0x20] sm:$0xff]
        %v2174 = vld [vmem:[%s904 + $0x28] sm:$0xff]
        %v2175 = vld [vmem:[%s904 + $0x30] sm:$0xff]
        %v2176 = vld [vmem:[%s904 + $0x38] sm:$0xff]
        %v2177 = vld [vmem:[%s904 + $0x40] sm:$0xff]
        %v2178 = vld [vmem:[%s904 + $0x48] sm:$0xff]
        %v2179 = vld [vmem:[%s904 + $0x50] sm:$0xff]
        %v2180 = vld [vmem:[%s904 + $0x58] sm:$0xff]
        %v2181 = vld [vmem:[%s904 + $0x60] sm:$0xff]
        %v2182 = vld [vmem:[%s904 + $0x68] sm:$0xff]
        %v2183 = vld [vmem:[%s904 + $0x70] sm:$0xff]
        %v2184 = vld [vmem:[%s904 + $0x78] sm:$0xff]
        %v2185 = vld [vmem:[%s904 + $0x80] sm:$0xff]
        %v2186 = vld [vmem:[%s904 + $0x88] sm:$0xff]
        %v2187 = vld [vmem:[%s904 + $0x90] sm:$0xff]
        %v2188 = vld [vmem:[%s904 + $0x98] sm:$0xff]
        %v2189 = vld [vmem:[%s904 + $0xa0] sm:$0xff]
        %v2190 = vld [vmem:[%s904 + $0xa8] sm:$0xff]
        %v2191 = vld [vmem:[%s904 + $0xb0] sm:$0xff]
        %v2192 = vld [vmem:[%s904 + $0xb8] sm:$0xff]
        %v2193 = vld [vmem:[%s904 + $0xc0] sm:$0xff]
        %v2194 = vld [vmem:[%s904 + $0xc8] sm:$0xff]
        %v2195 = vld [vmem:[%s904 + $0xd0] sm:$0xff]
        %v2196 = vld [vmem:[%s904 + $0xd8] sm:$0xff]
        %v2197 = vld [vmem:[%s904 + $0xe0] sm:$0xff]
        %v2198 = vld [vmem:[%s904 + $0xe8] sm:$0xff]
        %v2199 = vld [vmem:[%s904 + $0xf0] sm:$0xff]
        %v2200 = vld [vmem:[%s904 + $0xf8] sm:$0xff]
        %v2201 = vld [vmem:[%s904 + $0x100] sm:$0xff]
        %v2202 = vld [vmem:[%s904 + $0x108] sm:$0xff]
        %v2203 = vld [vmem:[%s904 + $0x110] sm:$0xff]
        %v2204 = vld [vmem:[%s904 + $0x118] sm:$0xff]
        %v2205 = vld [vmem:[%s904 + $0x120] sm:$0xff]
        %v2206 = vld [vmem:[%s904 + $0x128] sm:$0xff]
        %v2207 = vld [vmem:[%s904 + $0x130] sm:$0xff]
        %v2208 = vld [vmem:[%s904 + $0x138] sm:$0xff]
        %v2209 = vld [vmem:[%s904 + $0x140] sm:$0xff]
        %v2210 = vld [vmem:[%s904 + $0x148] sm:$0xff]
        %v2211 = vld [vmem:[%s904 + $0x150] sm:$0xff]
        %v2212 = vld [vmem:[%s904 + $0x158] sm:$0xff]
        %v2213 = vld [vmem:[%s904 + $0x160] sm:$0xff]
        %v2214 = vld [vmem:[%s904 + $0x168] sm:$0xff]
        %v2215 = vld [vmem:[%s904 + $0x170] sm:$0xff]
        %v2216 = vld [vmem:[%s904 + $0x178] sm:$0xff]
        %v2217 = vld [vmem:[%s904 + $0x180] sm:$0xff]
        %v2218 = vld [vmem:[%s904 + $0x188] sm:$0xff]
        %v2219 = vld [vmem:[%s904 + $0x190] sm:$0xff]
        %v2220 = vld [vmem:[%s904 + $0x198] sm:$0xff]
        %v2221 = vld [vmem:[%s904 + $0x1a0] sm:$0xff]
        %v2222 = vld [vmem:[%s904 + $0x1a8] sm:$0xff]
        %v2223 = vld [vmem:[%s904 + $0x1b0] sm:$0xff]
        %v2224 = vld [vmem:[%s904 + $0x1b8] sm:$0xff]
        %v2225 = vld [vmem:[%s904 + $0x1c0] sm:$0xff]
        %v2226 = vld [vmem:[%s904 + $0x1c8] sm:$0xff]
        %v2227 = vld [vmem:[%s904 + $0x1d0] sm:$0xff]
        %v2228 = vld [vmem:[%s904 + $0x1d8] sm:$0xff]
        %v2229 = vld [vmem:[%s904 + $0x1e0] sm:$0xff]
        %v2230 = vld [vmem:[%s904 + $0x1e8] sm:$0xff]
        %v2231 = vld [vmem:[%s904 + $0x1f0] sm:$0xff]
        %v2232 = vld [vmem:[%s904 + $0x1f8] sm:$0xff]
        %v2233 = vld [vmem:[%s904 + $0x200] sm:$0xff]
        %v2234 = vld [vmem:[%s904 + $0x208] sm:$0xff]
        %v2235 = vld [vmem:[%s904 + $0x210] sm:$0xff]
        %v2236 = vld [vmem:[%s904 + $0x218] sm:$0xff]
        %v2237 = vld [vmem:[%s904 + $0x220] sm:$0xff]
        %v2238 = vld [vmem:[%s904 + $0x228] sm:$0xff]
        %v2239 = vld [vmem:[%s904 + $0x230] sm:$0xff]
        %v2240 = vld [vmem:[%s904 + $0x238] sm:$0xff]
        %v2241 = vld [vmem:[%s904 + $0x240] sm:$0xff]
        %v2242 = vld [vmem:[%s904 + $0x248] sm:$0xff]
        %v2243 = vld [vmem:[%s904 + $0x250] sm:$0xff]
        %v2244 = vld [vmem:[%s904 + $0x258] sm:$0xff]
        %v2245 = vld [vmem:[%s904 + $0x260] sm:$0xff]
        %v2246 = vld [vmem:[%s904 + $0x268] sm:$0xff]
        %v2247 = vld [vmem:[%s904 + $0x270] sm:$0xff]
        %v2248 = vld [vmem:[%s904 + $0x278] sm:$0xff]
        %v2249 = vld [vmem:[%s904 + $0x280] sm:$0xff]
        %v2250 = vld [vmem:[%s904 + $0x288] sm:$0xff]
        %v2251 = vld [vmem:[%s904 + $0x290] sm:$0xff]
        %v2252 = vld [vmem:[%s904 + $0x298] sm:$0xff]
        %v2253 = vld [vmem:[%s904 + $0x2a0] sm:$0xff]
        %v2254 = vld [vmem:[%s904 + $0x2a8] sm:$0xff]
        %v2255 = vld [vmem:[%s904 + $0x2b0] sm:$0xff]
        %v2256 = vld [vmem:[%s904 + $0x2b8] sm:$0xff]
        %v2257 = vld [vmem:[%s904 + $0x2c0] sm:$0xff]
        %v2258 = vld [vmem:[%s904 + $0x2c8] sm:$0xff]
        %v2259 = vld [vmem:[%s904 + $0x2d0] sm:$0xff]
        %v2260 = vld [vmem:[%s904 + $0x2d8] sm:$0xff]
        %v2261 = vld [vmem:[%s904 + $0x2e0] sm:$0xff]
        %v2262 = vld [vmem:[%s904 + $0x2e8] sm:$0xff]
        %v2263 = vld [vmem:[%s904 + $0x2f0] sm:$0xff]
        %v2264 = vld [vmem:[%s904 + $0x2f8] sm:$0xff]
        %v2265 = vld [vmem:[%s904 + $0x300] sm:$0xff]
        %v2266 = vld [vmem:[%s904 + $0x308] sm:$0xff]
        %v2267 = vld [vmem:[%s904 + $0x310] sm:$0xff]
        %v2268 = vld [vmem:[%s904 + $0x318] sm:$0xff]
        %v2269 = vld [vmem:[%s904 + $0x320] sm:$0xff]
        %v2270 = vld [vmem:[%s904 + $0x328] sm:$0xff]
        %v2271 = vld [vmem:[%s904 + $0x330] sm:$0xff]
        %v2272 = vld [vmem:[%s904 + $0x338] sm:$0xff]
        %v2273 = vld [vmem:[%s904 + $0x340] sm:$0xff]
        %v2274 = vld [vmem:[%s904 + $0x348] sm:$0xff]
        %v2275 = vld [vmem:[%s904 + $0x350] sm:$0xff]
        %v2276 = vld [vmem:[%s904 + $0x358] sm:$0xff]
        %v2277 = vld [vmem:[%s904 + $0x360] sm:$0xff]
        %v2278 = vld [vmem:[%s904 + $0x368] sm:$0xff]
        %v2279 = vld [vmem:[%s904 + $0x370] sm:$0xff]
        %v2280 = vld [vmem:[%s904 + $0x378] sm:$0xff]
        %v2281 = vld [vmem:[%s904 + $0x380] sm:$0xff]
        %v2282 = vld [vmem:[%s904 + $0x388] sm:$0xff]
        %v2283 = vld [vmem:[%s904 + $0x390] sm:$0xff]
        %v2284 = vld [vmem:[%s904 + $0x398] sm:$0xff]
        %v2285 = vld [vmem:[%s904 + $0x3a0] sm:$0xff]
        %v2286 = vld [vmem:[%s904 + $0x3a8] sm:$0xff]
        %v2287 = vld [vmem:[%s904 + $0x3b0] sm:$0xff]
        %v2288 = vld [vmem:[%s904 + $0x3b8] sm:$0xff]
        %v2289 = vld [vmem:[%s904 + $0x3c0] sm:$0xff]
        %v2290 = vld [vmem:[%s904 + $0x3c8] sm:$0xff]
        %v2291 = vld [vmem:[%s904 + $0x3d0] sm:$0xff]
        %v2292 = vld [vmem:[%s904 + $0x3d8] sm:$0xff]
        %v2293 = vld [vmem:[%s904 + $0x3e0] sm:$0xff]
        %v2294 = vld [vmem:[%s904 + $0x3e8] sm:$0xff]
        %v2295 = vld [vmem:[%s904 + $0x3f0] sm:$0xff]
        %v2296 = vld [vmem:[%s904 + $0x3f8] sm:$0xff]
        %v2425 = vunpack.c.l.b16 %v2169
        %v2426 = vunpack.c.h.b16 %v2169
        %v2427 = vunpack.c.l.b16 %v2170
        %v2428 = vunpack.c.h.b16 %v2170
        %v2429 = vunpack.c.l.b16 %v2171
        %v2430 = vunpack.c.h.b16 %v2171
        %v2431 = vunpack.c.l.b16 %v2172
        %v2432 = vunpack.c.h.b16 %v2172
        %v2433 = vunpack.c.l.b16 %v2173
        %v2434 = vunpack.c.h.b16 %v2173
        %v2435 = vunpack.c.l.b16 %v2174
        %v2436 = vunpack.c.h.b16 %v2174
        %v2437 = vunpack.c.l.b16 %v2175
        %v2438 = vunpack.c.h.b16 %v2175
        %v2439 = vunpack.c.l.b16 %v2176
        %v2440 = vunpack.c.h.b16 %v2176
        %v2441 = vunpack.c.l.b16 %v2177
        %v2442 = vunpack.c.h.b16 %v2177
        %v2443 = vunpack.c.l.b16 %v2178
        %v2444 = vunpack.c.h.b16 %v2178
        %v2445 = vunpack.c.l.b16 %v2179
        %v2446 = vunpack.c.h.b16 %v2179
        %v2447 = vunpack.c.l.b16 %v2180
        %v2448 = vunpack.c.h.b16 %v2180
        %v2449 = vunpack.c.l.b16 %v2181
        %v2450 = vunpack.c.h.b16 %v2181
        %v2451 = vunpack.c.l.b16 %v2182
        %v2452 = vunpack.c.h.b16 %v2182
        %v2453 = vunpack.c.l.b16 %v2183
        %v2454 = vunpack.c.h.b16 %v2183
        %v2455 = vunpack.c.l.b16 %v2184
        %v2456 = vunpack.c.h.b16 %v2184
        %v2457 = vunpack.c.l.b16 %v2185
        %v2458 = vunpack.c.h.b16 %v2185
        %v2459 = vunpack.c.l.b16 %v2186
        %v2460 = vunpack.c.h.b16 %v2186
        %v2461 = vunpack.c.l.b16 %v2187
        %v2462 = vunpack.c.h.b16 %v2187
        %v2463 = vunpack.c.l.b16 %v2188
        %v2464 = vunpack.c.h.b16 %v2188
        %v2465 = vunpack.c.l.b16 %v2189
        %v2466 = vunpack.c.h.b16 %v2189
        %v2467 = vunpack.c.l.b16 %v2190
        %v2468 = vunpack.c.h.b16 %v2190
        %v2469 = vunpack.c.l.b16 %v2191
        %v2470 = vunpack.c.h.b16 %v2191
        %v2471 = vunpack.c.l.b16 %v2192
        %v2472 = vunpack.c.h.b16 %v2192
        %v2473 = vunpack.c.l.b16 %v2193
        %v2474 = vunpack.c.h.b16 %v2193
        %v2475 = vunpack.c.l.b16 %v2194
        %v2476 = vunpack.c.h.b16 %v2194
        %v2477 = vunpack.c.l.b16 %v2195
        %v2478 = vunpack.c.h.b16 %v2195
        %v2479 = vunpack.c.l.b16 %v2196
        %v2480 = vunpack.c.h.b16 %v2196
        %v2481 = vunpack.c.l.b16 %v2197
        %v2482 = vunpack.c.h.b16 %v2197
        %v2483 = vunpack.c.l.b16 %v2198
        %v2484 = vunpack.c.h.b16 %v2198
        %v2485 = vunpack.c.l.b16 %v2199
        %v2486 = vunpack.c.h.b16 %v2199
        %v2487 = vunpack.c.l.b16 %v2200
        %v2488 = vunpack.c.h.b16 %v2200
        %v2489 = vunpack.c.l.b16 %v2201
        %v2490 = vunpack.c.h.b16 %v2201
        %v2491 = vunpack.c.l.b16 %v2202
        %v2492 = vunpack.c.h.b16 %v2202
        %v2493 = vunpack.c.l.b16 %v2203
        %v2494 = vunpack.c.h.b16 %v2203
        %v2495 = vunpack.c.l.b16 %v2204
        %v2496 = vunpack.c.h.b16 %v2204
        %v2497 = vunpack.c.l.b16 %v2205
        %v2498 = vunpack.c.h.b16 %v2205
        %v2499 = vunpack.c.l.b16 %v2206
        %v2500 = vunpack.c.h.b16 %v2206
        %v2501 = vunpack.c.l.b16 %v2207
        %v2502 = vunpack.c.h.b16 %v2207
        %v2503 = vunpack.c.l.b16 %v2208
        %v2504 = vunpack.c.h.b16 %v2208
        %v2505 = vunpack.c.l.b16 %v2209
        %v2506 = vunpack.c.h.b16 %v2209
        %v2507 = vunpack.c.l.b16 %v2210
        %v2508 = vunpack.c.h.b16 %v2210
        %v2509 = vunpack.c.l.b16 %v2211
        %v2510 = vunpack.c.h.b16 %v2211
        %v2511 = vunpack.c.l.b16 %v2212
        %v2512 = vunpack.c.h.b16 %v2212
        %v2513 = vunpack.c.l.b16 %v2213
        %v2514 = vunpack.c.h.b16 %v2213
        %v2515 = vunpack.c.l.b16 %v2214
        %v2516 = vunpack.c.h.b16 %v2214
        %v2517 = vunpack.c.l.b16 %v2215
        %v2518 = vunpack.c.h.b16 %v2215
        %v2519 = vunpack.c.l.b16 %v2216
        %v2520 = vunpack.c.h.b16 %v2216
        %v2521 = vunpack.c.l.b16 %v2217
        %v2522 = vunpack.c.h.b16 %v2217
        %v2523 = vunpack.c.l.b16 %v2218
        %v2524 = vunpack.c.h.b16 %v2218
        %v2525 = vunpack.c.l.b16 %v2219
        %v2526 = vunpack.c.h.b16 %v2219
        %v2527 = vunpack.c.l.b16 %v2220
        %v2528 = vunpack.c.h.b16 %v2220
        %v2529 = vunpack.c.l.b16 %v2221
        %v2530 = vunpack.c.h.b16 %v2221
        %v2531 = vunpack.c.l.b16 %v2222
        %v2532 = vunpack.c.h.b16 %v2222
        %v2533 = vunpack.c.l.b16 %v2223
        %v2534 = vunpack.c.h.b16 %v2223
        %v2535 = vunpack.c.l.b16 %v2224
        %v2536 = vunpack.c.h.b16 %v2224
        %v2537 = vunpack.c.l.b16 %v2225
        %v2538 = vunpack.c.h.b16 %v2225
        %v2539 = vunpack.c.l.b16 %v2226
        %v2540 = vunpack.c.h.b16 %v2226
        %v2541 = vunpack.c.l.b16 %v2227
        %v2542 = vunpack.c.h.b16 %v2227
        %v2543 = vunpack.c.l.b16 %v2228
        %v2544 = vunpack.c.h.b16 %v2228
        %v2545 = vunpack.c.l.b16 %v2229
        %v2546 = vunpack.c.h.b16 %v2229
        %v2547 = vunpack.c.l.b16 %v2230
        %v2548 = vunpack.c.h.b16 %v2230
        %v2549 = vunpack.c.l.b16 %v2231
        %v2550 = vunpack.c.h.b16 %v2231
        %v2551 = vunpack.c.l.b16 %v2232
        %v2552 = vunpack.c.h.b16 %v2232
        %v2553 = vunpack.c.l.b16 %v2233
        %v2554 = vunpack.c.h.b16 %v2233
        %v2555 = vunpack.c.l.b16 %v2234
        %v2556 = vunpack.c.h.b16 %v2234
        %v2557 = vunpack.c.l.b16 %v2235
        %v2558 = vunpack.c.h.b16 %v2235
        %v2559 = vunpack.c.l.b16 %v2236
        %v2560 = vunpack.c.h.b16 %v2236
        %v2561 = vunpack.c.l.b16 %v2237
        %v2562 = vunpack.c.h.b16 %v2237
        %v2563 = vunpack.c.l.b16 %v2238
        %v2564 = vunpack.c.h.b16 %v2238
        %v2565 = vunpack.c.l.b16 %v2239
        %v2566 = vunpack.c.h.b16 %v2239
        %v2567 = vunpack.c.l.b16 %v2240
        %v2568 = vunpack.c.h.b16 %v2240
        %v2569 = vunpack.c.l.b16 %v2241
        %v2570 = vunpack.c.h.b16 %v2241
        %v2571 = vunpack.c.l.b16 %v2242
        %v2572 = vunpack.c.h.b16 %v2242
        %v2573 = vunpack.c.l.b16 %v2243
        %v2574 = vunpack.c.h.b16 %v2243
        %v2575 = vunpack.c.l.b16 %v2244
        %v2576 = vunpack.c.h.b16 %v2244
        %v2577 = vunpack.c.l.b16 %v2245
        %v2578 = vunpack.c.h.b16 %v2245
        %v2579 = vunpack.c.l.b16 %v2246
        %v2580 = vunpack.c.h.b16 %v2246
        %v2581 = vunpack.c.l.b16 %v2247
        %v2582 = vunpack.c.h.b16 %v2247
        %v2583 = vunpack.c.l.b16 %v2248
        %v2584 = vunpack.c.h.b16 %v2248
        %v2585 = vunpack.c.l.b16 %v2249
        %v2586 = vunpack.c.h.b16 %v2249
        %v2587 = vunpack.c.l.b16 %v2250
        %v2588 = vunpack.c.h.b16 %v2250
        %v2589 = vunpack.c.l.b16 %v2251
        %v2590 = vunpack.c.h.b16 %v2251
        %v2591 = vunpack.c.l.b16 %v2252
        %v2592 = vunpack.c.h.b16 %v2252
        %v2593 = vunpack.c.l.b16 %v2253
        %v2594 = vunpack.c.h.b16 %v2253
        %v2595 = vunpack.c.l.b16 %v2254
        %v2596 = vunpack.c.h.b16 %v2254
        %v2597 = vunpack.c.l.b16 %v2255
        %v2598 = vunpack.c.h.b16 %v2255
        %v2599 = vunpack.c.l.b16 %v2256
        %v2600 = vunpack.c.h.b16 %v2256
        %v2601 = vunpack.c.l.b16 %v2257
        %v2602 = vunpack.c.h.b16 %v2257
        %v2603 = vunpack.c.l.b16 %v2258
        %v2604 = vunpack.c.h.b16 %v2258
        %v2605 = vunpack.c.l.b16 %v2259
        %v2606 = vunpack.c.h.b16 %v2259
        %v2607 = vunpack.c.l.b16 %v2260
        %v2608 = vunpack.c.h.b16 %v2260
        %v2609 = vunpack.c.l.b16 %v2261
        %v2610 = vunpack.c.h.b16 %v2261
        %v2611 = vunpack.c.l.b16 %v2262
        %v2612 = vunpack.c.h.b16 %v2262
        %v2613 = vunpack.c.l.b16 %v2263
        %v2614 = vunpack.c.h.b16 %v2263
        %v2615 = vunpack.c.l.b16 %v2264
        %v2616 = vunpack.c.h.b16 %v2264
        %v2617 = vunpack.c.l.b16 %v2265
        %v2618 = vunpack.c.h.b16 %v2265
        %v2619 = vunpack.c.l.b16 %v2266
        %v2620 = vunpack.c.h.b16 %v2266
        %v2621 = vunpack.c.l.b16 %v2267
        %v2622 = vunpack.c.h.b16 %v2267
        %v2623 = vunpack.c.l.b16 %v2268
        %v2624 = vunpack.c.h.b16 %v2268
        %v2625 = vunpack.c.l.b16 %v2269
        %v2626 = vunpack.c.h.b16 %v2269
        %v2627 = vunpack.c.l.b16 %v2270
        %v2628 = vunpack.c.h.b16 %v2270
        %v2629 = vunpack.c.l.b16 %v2271
        %v2630 = vunpack.c.h.b16 %v2271
        %v2631 = vunpack.c.l.b16 %v2272
        %v2632 = vunpack.c.h.b16 %v2272
        %v2633 = vunpack.c.l.b16 %v2273
        %v2634 = vunpack.c.h.b16 %v2273
        %v2635 = vunpack.c.l.b16 %v2274
        %v2636 = vunpack.c.h.b16 %v2274
        %v2637 = vunpack.c.l.b16 %v2275
        %v2638 = vunpack.c.h.b16 %v2275
        %v2639 = vunpack.c.l.b16 %v2276
        %v2640 = vunpack.c.h.b16 %v2276
        %v2641 = vunpack.c.l.b16 %v2277
        %v2642 = vunpack.c.h.b16 %v2277
        %v2643 = vunpack.c.l.b16 %v2278
        %v2644 = vunpack.c.h.b16 %v2278
        %v2645 = vunpack.c.l.b16 %v2279
        %v2646 = vunpack.c.h.b16 %v2279
        %v2647 = vunpack.c.l.b16 %v2280
        %v2648 = vunpack.c.h.b16 %v2280
        %v2649 = vunpack.c.l.b16 %v2281
        %v2650 = vunpack.c.h.b16 %v2281
        %v2651 = vunpack.c.l.b16 %v2282
        %v2652 = vunpack.c.h.b16 %v2282
        %v2653 = vunpack.c.l.b16 %v2283
        %v2654 = vunpack.c.h.b16 %v2283
        %v2655 = vunpack.c.l.b16 %v2284
        %v2656 = vunpack.c.h.b16 %v2284
        %v2657 = vunpack.c.l.b16 %v2285
        %v2658 = vunpack.c.h.b16 %v2285
        %v2659 = vunpack.c.l.b16 %v2286
        %v2660 = vunpack.c.h.b16 %v2286
        %v2661 = vunpack.c.l.b16 %v2287
        %v2662 = vunpack.c.h.b16 %v2287
        %v2663 = vunpack.c.l.b16 %v2288
        %v2664 = vunpack.c.h.b16 %v2288
        %v2665 = vunpack.c.l.b16 %v2289
        %v2666 = vunpack.c.h.b16 %v2289
        %v2667 = vunpack.c.l.b16 %v2290
        %v2668 = vunpack.c.h.b16 %v2290
        %v2669 = vunpack.c.l.b16 %v2291
        %v2670 = vunpack.c.h.b16 %v2291
        %v2671 = vunpack.c.l.b16 %v2292
        %v2672 = vunpack.c.h.b16 %v2292
        %v2673 = vunpack.c.l.b16 %v2293
        %v2674 = vunpack.c.h.b16 %v2293
        %v2675 = vunpack.c.l.b16 %v2294
        %v2676 = vunpack.c.h.b16 %v2294
        %v2677 = vunpack.c.l.b16 %v2295
        %v2678 = vunpack.c.h.b16 %v2295
        %v2679 = vunpack.c.l.b16 %v2296
        %v2680 = vunpack.c.h.b16 %v2296
        %v2681 = vpack.c.b16 %v2427, %v2425
        %v2682 = vpack.c.b16 %v2428, %v2426
        %v2683 = vpack.c.b16 %v2431, %v2429
        %v2684 = vpack.c.b16 %v2432, %v2430
        %v2685 = vpack.c.b16 %v2435, %v2433
        %v2686 = vpack.c.b16 %v2436, %v2434
        %v2687 = vpack.c.b16 %v2439, %v2437
        %v2688 = vpack.c.b16 %v2440, %v2438
        %v2689 = vpack.c.b16 %v2443, %v2441
        %v2690 = vpack.c.b16 %v2444, %v2442
        %v2691 = vpack.c.b16 %v2447, %v2445
        %v2692 = vpack.c.b16 %v2448, %v2446
        %v2693 = vpack.c.b16 %v2451, %v2449
        %v2694 = vpack.c.b16 %v2452, %v2450
        %v2695 = vpack.c.b16 %v2455, %v2453
        %v2696 = vpack.c.b16 %v2456, %v2454
        %v2697 = vpack.c.b16 %v2459, %v2457
        %v2698 = vpack.c.b16 %v2460, %v2458
        %v2699 = vpack.c.b16 %v2463, %v2461
        %v2700 = vpack.c.b16 %v2464, %v2462
        %v2701 = vpack.c.b16 %v2467, %v2465
        %v2702 = vpack.c.b16 %v2468, %v2466
        %v2703 = vpack.c.b16 %v2471, %v2469
        %v2704 = vpack.c.b16 %v2472, %v2470
        %v2705 = vpack.c.b16 %v2475, %v2473
        %v2706 = vpack.c.b16 %v2476, %v2474
        %v2707 = vpack.c.b16 %v2479, %v2477
        %v2708 = vpack.c.b16 %v2480, %v2478
        %v2709 = vpack.c.b16 %v2483, %v2481
        %v2710 = vpack.c.b16 %v2484, %v2482
        %v2711 = vpack.c.b16 %v2487, %v2485
        %v2712 = vpack.c.b16 %v2488, %v2486
        %v2713 = vpack.c.b16 %v2491, %v2489
        %v2714 = vpack.c.b16 %v2492, %v2490
        %v2715 = vpack.c.b16 %v2495, %v2493
        %v2716 = vpack.c.b16 %v2496, %v2494
        %v2717 = vpack.c.b16 %v2499, %v2497
        %v2718 = vpack.c.b16 %v2500, %v2498
        %v2719 = vpack.c.b16 %v2503, %v2501
        %v2720 = vpack.c.b16 %v2504, %v2502
        %v2721 = vpack.c.b16 %v2507, %v2505
        %v2722 = vpack.c.b16 %v2508, %v2506
        %v2723 = vpack.c.b16 %v2511, %v2509
        %v2724 = vpack.c.b16 %v2512, %v2510
        %v2725 = vpack.c.b16 %v2515, %v2513
        %v2726 = vpack.c.b16 %v2516, %v2514
        %v2727 = vpack.c.b16 %v2519, %v2517
        %v2728 = vpack.c.b16 %v2520, %v2518
        %v2729 = vpack.c.b16 %v2523, %v2521
        %v2730 = vpack.c.b16 %v2524, %v2522
        %v2731 = vpack.c.b16 %v2527, %v2525
        %v2732 = vpack.c.b16 %v2528, %v2526
        %v2733 = vpack.c.b16 %v2531, %v2529
        %v2734 = vpack.c.b16 %v2532, %v2530
        %v2735 = vpack.c.b16 %v2535, %v2533
        %v2736 = vpack.c.b16 %v2536, %v2534
        %v2737 = vpack.c.b16 %v2539, %v2537
        %v2738 = vpack.c.b16 %v2540, %v2538
        %v2739 = vpack.c.b16 %v2543, %v2541
        %v2740 = vpack.c.b16 %v2544, %v2542
        %v2741 = vpack.c.b16 %v2547, %v2545
        %v2742 = vpack.c.b16 %v2548, %v2546
        %v2743 = vpack.c.b16 %v2551, %v2549
        %v2744 = vpack.c.b16 %v2552, %v2550
        %v2745 = vpack.c.b16 %v2555, %v2553
        %v2746 = vpack.c.b16 %v2556, %v2554
        %v2747 = vpack.c.b16 %v2559, %v2557
        %v2748 = vpack.c.b16 %v2560, %v2558
        %v2749 = vpack.c.b16 %v2563, %v2561
        %v2750 = vpack.c.b16 %v2564, %v2562
        %v2751 = vpack.c.b16 %v2567, %v2565
        %v2752 = vpack.c.b16 %v2568, %v2566
        %v2753 = vpack.c.b16 %v2571, %v2569
        %v2754 = vpack.c.b16 %v2572, %v2570
        %v2755 = vpack.c.b16 %v2575, %v2573
        %v2756 = vpack.c.b16 %v2576, %v2574
        %v2757 = vpack.c.b16 %v2579, %v2577
        %v2758 = vpack.c.b16 %v2580, %v2578
        %v2759 = vpack.c.b16 %v2583, %v2581
        %v2760 = vpack.c.b16 %v2584, %v2582
        %v2761 = vpack.c.b16 %v2587, %v2585
        %v2762 = vpack.c.b16 %v2588, %v2586
        %v2763 = vpack.c.b16 %v2591, %v2589
        %v2764 = vpack.c.b16 %v2592, %v2590
        %v2765 = vpack.c.b16 %v2595, %v2593
        %v2766 = vpack.c.b16 %v2596, %v2594
        %v2767 = vpack.c.b16 %v2599, %v2597
        %v2768 = vpack.c.b16 %v2600, %v2598
        %v2769 = vpack.c.b16 %v2603, %v2601
        %v2770 = vpack.c.b16 %v2604, %v2602
        %v2771 = vpack.c.b16 %v2607, %v2605
        %v2772 = vpack.c.b16 %v2608, %v2606
        %v2773 = vpack.c.b16 %v2611, %v2609
        %v2774 = vpack.c.b16 %v2612, %v2610
        %v2775 = vpack.c.b16 %v2615, %v2613
        %v2776 = vpack.c.b16 %v2616, %v2614
        %v2777 = vpack.c.b16 %v2619, %v2617
        %v2778 = vpack.c.b16 %v2620, %v2618
        %v2779 = vpack.c.b16 %v2623, %v2621
        %v2780 = vpack.c.b16 %v2624, %v2622
        %v2781 = vpack.c.b16 %v2627, %v2625
        %v2782 = vpack.c.b16 %v2628, %v2626
        %v2783 = vpack.c.b16 %v2631, %v2629
        %v2784 = vpack.c.b16 %v2632, %v2630
        %v2785 = vpack.c.b16 %v2635, %v2633
        %v2786 = vpack.c.b16 %v2636, %v2634
        %v2787 = vpack.c.b16 %v2639, %v2637
        %v2788 = vpack.c.b16 %v2640, %v2638
        %v2789 = vpack.c.b16 %v2643, %v2641
        %v2790 = vpack.c.b16 %v2644, %v2642
        %v2791 = vpack.c.b16 %v2647, %v2645
        %v2792 = vpack.c.b16 %v2648, %v2646
        %v2793 = vpack.c.b16 %v2651, %v2649
        %v2794 = vpack.c.b16 %v2652, %v2650
        %v2795 = vpack.c.b16 %v2655, %v2653
        %v2796 = vpack.c.b16 %v2656, %v2654
        %v2797 = vpack.c.b16 %v2659, %v2657
        %v2798 = vpack.c.b16 %v2660, %v2658
        %v2799 = vpack.c.b16 %v2663, %v2661
        %v2800 = vpack.c.b16 %v2664, %v2662
        %v2801 = vpack.c.b16 %v2667, %v2665
        %v2802 = vpack.c.b16 %v2668, %v2666
        %v2803 = vpack.c.b16 %v2671, %v2669
        %v2804 = vpack.c.b16 %v2672, %v2670
        %v2805 = vpack.c.b16 %v2675, %v2673
        %v2806 = vpack.c.b16 %v2676, %v2674
        %v2807 = vpack.c.b16 %v2679, %v2677
        %v2808 = vpack.c.b16 %v2680, %v2678
        %2937 = vmatprep.subr.bf16.mxu0 %v2696
        %2938 = vmatpush1.bf16.msra.mxu0 %v2695
        %2939 = vmatprep.subr.bf16.mxu0 %v2694
        %2940 = vmatpush1.bf16.msra.mxu0 %v2693
        %2941 = vmatprep.subr.bf16.mxu0 %v2692
        %2942 = vmatpush1.bf16.msra.mxu0 %v2691
        %2943 = vmatprep.subr.bf16.mxu0 %v2690
        %2944 = vmatpush1.bf16.msra.mxu0 %v2689
        %2945 = vmatprep.subr.bf16.mxu0 %v2688
        %2946 = vmatpush1.bf16.msra.mxu0 %v2687
        %2947 = vmatprep.subr.bf16.mxu0 %v2686
        %2948 = vmatpush1.bf16.msra.mxu0 %v2685
        %2949 = vmatprep.subr.bf16.mxu0 %v2684
        %2950 = vmatpush1.bf16.msra.mxu0 %v2683
        %2951 = vmatprep.subr.bf16.mxu0 %v2682
        %2952 = vmatpush1.bf16.msra.mxu0 %v2681
        %2953 = vmatprep.subr.bf16.mxu0 %v2712
        %2954 = vmatpush2.bf16.msra.mxu0 %v2711
        %2955 = vmatprep.subr.bf16.mxu0 %v2710
        %2956 = vmatpush2.bf16.msra.mxu0 %v2709
        %2957 = vmatprep.subr.bf16.mxu0 %v2708
        %2958 = vmatpush2.bf16.msra.mxu0 %v2707
        %2959 = vmatprep.subr.bf16.mxu0 %v2706
        %2960 = vmatpush2.bf16.msra.mxu0 %v2705
        %2961 = vmatprep.subr.bf16.mxu0 %v2704
        %2962 = vmatpush2.bf16.msra.mxu0 %v2703
        %2963 = vmatprep.subr.bf16.mxu0 %v2702
        %2964 = vmatpush2.bf16.msra.mxu0 %v2701
        %2965 = vmatprep.subr.bf16.mxu0 %v2700
        %2966 = vmatpush2.bf16.msra.mxu0 %v2699
        %2967 = vmatprep.subr.bf16.mxu0 %v2698
        %2968 = vmatpush2.bf16.msra.mxu0 %v2697
        %2969 = vmatprep.mubr.bf16.mxu0 %v2161
        %2970 = vmatmul.mubr.bf16.gmra.mxu0 %v2160
        %v2971 = vpop.f32.mrf.mxu0
        %v2972 = vadd.f32 0.0, %v2971
        %v2973 = vpop.f32.mrf.mxu0
        %v2974 = vadd.f32 0.0, %v2973
        %v2975 = vpop.f32.mrf.mxu0
        %v2976 = vpop.f32.mrf.mxu0
        %2977 = vdwg.mxu0
        %2978 = vmatprep.subr.bf16.mxu0 %v2728
        %2979 = vmatpush1.bf16.msra.mxu0 %v2727
        %2980 = vmatprep.subr.bf16.mxu0 %v2726
        %2981 = vmatpush1.bf16.msra.mxu0 %v2725
        %2982 = vmatprep.subr.bf16.mxu0 %v2724
        %2983 = vmatpush1.bf16.msra.mxu0 %v2723
        %2984 = vmatprep.subr.bf16.mxu0 %v2722
        %2985 = vmatpush1.bf16.msra.mxu0 %v2721
        %2986 = vmatprep.subr.bf16.mxu0 %v2720
        %2987 = vmatpush1.bf16.msra.mxu0 %v2719
        %2988 = vmatprep.subr.bf16.mxu0 %v2718
        %2989 = vmatpush1.bf16.msra.mxu0 %v2717
        %2990 = vmatprep.subr.bf16.mxu0 %v2716
        %2991 = vmatpush1.bf16.msra.mxu0 %v2715
        %2992 = vmatprep.subr.bf16.mxu0 %v2714
        %2993 = vmatpush1.bf16.msra.mxu0 %v2713
        %2994 = vmatprep.subr.bf16.mxu0 %v2744
        %2995 = vmatpush2.bf16.msra.mxu0 %v2743
        %2996 = vmatprep.subr.bf16.mxu0 %v2742
        %2997 = vmatpush2.bf16.msra.mxu0 %v2741
        %2998 = vmatprep.subr.bf16.mxu0 %v2740
        %2999 = vmatpush2.bf16.msra.mxu0 %v2739
        %3000 = vmatprep.subr.bf16.mxu0 %v2738
        %3001 = vmatpush2.bf16.msra.mxu0 %v2737
        %3002 = vmatprep.subr.bf16.mxu0 %v2736
        %3003 = vmatpush2.bf16.msra.mxu0 %v2735
        %3004 = vmatprep.subr.bf16.mxu0 %v2734
        %3005 = vmatpush2.bf16.msra.mxu0 %v2733
        %3006 = vmatprep.subr.bf16.mxu0 %v2732
        %3007 = vmatpush2.bf16.msra.mxu0 %v2731
        %3008 = vmatprep.subr.bf16.mxu0 %v2730
        %3009 = vmatpush2.bf16.msra.mxu0 %v2729
        %3010 = vmatprep.mubr.bf16.mxu0 %v2163
        %3011 = vmatmul.mubr.bf16.gmra.mxu0 %v2162
        %v3012 = vpop.f32.mrf.mxu0
        %v3013 = vadd.f32 %v2972, %v3012
        %v3014 = vpop.f32.mrf.mxu0
        %v3015 = vadd.f32 %v2974, %v3014
        %v3016 = vpop.f32.mrf.mxu0
        %v3017 = vpop.f32.mrf.mxu0
        %3018 = vdwg.mxu0
        %3019 = vmatprep.subr.bf16.mxu0 %v2760
        %3020 = vmatpush1.bf16.msra.mxu0 %v2759
        %3021 = vmatprep.subr.bf16.mxu0 %v2758
        %3022 = vmatpush1.bf16.msra.mxu0 %v2757
        %3023 = vmatprep.subr.bf16.mxu0 %v2756
        %3024 = vmatpush1.bf16.msra.mxu0 %v2755
        %3025 = vmatprep.subr.bf16.mxu0 %v2754
        %3026 = vmatpush1.bf16.msra.mxu0 %v2753
        %3027 = vmatprep.subr.bf16.mxu0 %v2752
        %3028 = vmatpush1.bf16.msra.mxu0 %v2751
        %3029 = vmatprep.subr.bf16.mxu0 %v2750
        %3030 = vmatpush1.bf16.msra.mxu0 %v2749
        %3031 = vmatprep.subr.bf16.mxu0 %v2748
        %3032 = vmatpush1.bf16.msra.mxu0 %v2747
        %3033 = vmatprep.subr.bf16.mxu0 %v2746
        %3034 = vmatpush1.bf16.msra.mxu0 %v2745
        %3035 = vmatprep.subr.bf16.mxu0 %v2776
        %3036 = vmatpush2.bf16.msra.mxu0 %v2775
        %3037 = vmatprep.subr.bf16.mxu0 %v2774
        %3038 = vmatpush2.bf16.msra.mxu0 %v2773
        %3039 = vmatprep.subr.bf16.mxu0 %v2772
        %3040 = vmatpush2.bf16.msra.mxu0 %v2771
        %3041 = vmatprep.subr.bf16.mxu0 %v2770
        %3042 = vmatpush2.bf16.msra.mxu0 %v2769
        %3043 = vmatprep.subr.bf16.mxu0 %v2768
        %3044 = vmatpush2.bf16.msra.mxu0 %v2767
        %3045 = vmatprep.subr.bf16.mxu0 %v2766
        %3046 = vmatpush2.bf16.msra.mxu0 %v2765
        %3047 = vmatprep.subr.bf16.mxu0 %v2764
        %3048 = vmatpush2.bf16.msra.mxu0 %v2763
        %3049 = vmatprep.subr.bf16.mxu0 %v2762
        %3050 = vmatpush2.bf16.msra.mxu0 %v2761
        %3051 = vmatprep.mubr.bf16.mxu0 %v2165
        %3052 = vmatmul.mubr.bf16.gmra.mxu0 %v2164
        %v3053 = vpop.f32.mrf.mxu0
        %v3054 = vadd.f32 %v3013, %v3053
        %v3055 = vpop.f32.mrf.mxu0
        %v3056 = vadd.f32 %v3015, %v3055
        %v3057 = vpop.f32.mrf.mxu0
        %v3058 = vpop.f32.mrf.mxu0
        %3059 = vdwg.mxu0
        %3060 = vmatprep.subr.bf16.mxu0 %v2792
        %3061 = vmatpush1.bf16.msra.mxu0 %v2791
        %3062 = vmatprep.subr.bf16.mxu0 %v2790
        %3063 = vmatpush1.bf16.msra.mxu0 %v2789
        %3064 = vmatprep.subr.bf16.mxu0 %v2788
        %3065 = vmatpush1.bf16.msra.mxu0 %v2787
        %3066 = vmatprep.subr.bf16.mxu0 %v2786
        %3067 = vmatpush1.bf16.msra.mxu0 %v2785
        %3068 = vmatprep.subr.bf16.mxu0 %v2784
        %3069 = vmatpush1.bf16.msra.mxu0 %v2783
        %3070 = vmatprep.subr.bf16.mxu0 %v2782
        %3071 = vmatpush1.bf16.msra.mxu0 %v2781
        %3072 = vmatprep.subr.bf16.mxu0 %v2780
        %3073 = vmatpush1.bf16.msra.mxu0 %v2779
        %3074 = vmatprep.subr.bf16.mxu0 %v2778
        %3075 = vmatpush1.bf16.msra.mxu0 %v2777
        %3076 = vmatprep.subr.bf16.mxu0 %v2808
        %3077 = vmatpush2.bf16.msra.mxu0 %v2807
        %3078 = vmatprep.subr.bf16.mxu0 %v2806
        %3079 = vmatpush2.bf16.msra.mxu0 %v2805
        %3080 = vmatprep.subr.bf16.mxu0 %v2804
        %3081 = vmatpush2.bf16.msra.mxu0 %v2803
        %3082 = vmatprep.subr.bf16.mxu0 %v2802
        %3083 = vmatpush2.bf16.msra.mxu0 %v2801
        %3084 = vmatprep.subr.bf16.mxu0 %v2800
        %3085 = vmatpush2.bf16.msra.mxu0 %v2799
        %3086 = vmatprep.subr.bf16.mxu0 %v2798
        %3087 = vmatpush2.bf16.msra.mxu0 %v2797
        %3088 = vmatprep.subr.bf16.mxu0 %v2796
        %3089 = vmatpush2.bf16.msra.mxu0 %v2795
        %3090 = vmatprep.subr.bf16.mxu0 %v2794
        %3091 = vmatpush2.bf16.msra.mxu0 %v2793
        %3092 = vmatprep.mubr.bf16.mxu0 %v2167
        %3093 = vmatmul.mubr.bf16.gmra.mxu0 %v2166
        %v3094 = vpop.f32.mrf.mxu0
        %v3095 = vadd.f32 %v3054, %v3094
        %v3096 = vpop.f32.mrf.mxu0
        %v3097 = vadd.f32 %v3056, %v3096
        %v3098 = vpop.f32.mrf.mxu0
        %v3099 = vpop.f32.mrf.mxu0
        %3100 = vdwg.mxu0
        %v3103 = vcombine.low %v3095, %v3097
        %v3105 = vunpack.c.l.s4 1983009808
        %v3106 = vunpack.c.0.s8 %v3105
        %v3107 = vlaneseq
        %v3108 = vshrl.u32 %v3107, 7
        %v3109 = vsub.s32 %v3106, %v3108
        %v3110 = vrot.slane %v3103, %v3109
        %v3112 = vadd.f32 %v2168, %v3110
        %3113 = vst [vmem:[#allocation2] sm:$0xf] %v3112
        %p3114 = scmp.eq.s32.totalorder %s78, 1
        // Predicated region
        $region161: #{tpu_custom_call.1} parent=135 // pred_check
          %p3115 = pneg %p3114
        $region162: #{tpu_custom_call.1} parent=135 // pred_check_branch
          %3117 = sbr.rel (%p3115) target = $region164
        $region163: #{tpu_custom_call.1} parent=135 // pred_region
          %v3118 = vld [vmem:[#allocation2] sm:$0xf]
          %v3119 = vld [vmem:[%s21] sm:$0x3]
          %v3121 = vlaneseq
          %v3122 = vshrl.u32 %v3121, 7
          %v3123 = vsub.s32 0, %v3122
          %v3124 = vrot.slane %v3119, %v3123
          %v3125 = vlaneseq
          %v3126 = vshrl.u32 %v3125, 7
          %v3127 = vsub.s32 1, %v3126
          %v3128 = vrot.slane %v3119, %v3127
          %v3129 = vcombine.low %v3124, %v3128
          %v3131 = vunpack.c.l.s4 1983009808
          %v3132 = vunpack.c.0.s8 %v3131
          %v3133 = vlaneseq
          %v3134 = vshrl.u32 %v3133, 7
          %v3135 = vsub.s32 %v3132, %v3134
          %v3136 = vrot.slane %v3129, %v3135
          %v3138 = vadd.f32 %v3118, %v3136
          %v3139 = vld [vmem:[%s23] sm:$0x3]
          %v3140 = vld [vmem:[%s25] sm:$0x3]
          %v3143 = vunpack.c.l.s4 1983009808
          %v3144 = vunpack.c.0.s8 %v3143
          %v3145 = vlaneseq
          %v3146 = vshrl.u32 %v3145, 7
          %v3147 = vsub.s32 %v3144, %v3146
          %v3148 = vrot.slane %v3138, %v3147
          %v3149 = vcombine.high %v3148, %v3148
          %vm3152 = vcmask 1041408
          %v3153 = vsel %vm3152, %v3148, 0.0
          %v3154 = vrot.slane %v3153, 4
          %v3155 = vadd.f32 %v3153, %v3154
          %v3156 = vrot.slane %v3155, 2
          %v3157 = vadd.f32 %v3155, %v3156
          %v3158 = vrot.slane %v3157, 1
          %v3159 = vadd.f32 %v3157, %v3158
          %v3160 = vsel %vm3152, %v3149, 0.0
          %v3161 = vrot.slane %v3160, 4
          %v3162 = vadd.f32 %v3160, %v3161
          %v3163 = vrot.slane %v3162, 2
          %v3164 = vadd.f32 %v3162, %v3163
          %v3165 = vrot.slane %v3164, 1
          %v3166 = vadd.f32 %v3164, %v3165
          %v3167 = vrcp.pop 2.0
          %v3168 = vmul.f32 %v3159, %v3167
          %v3169 = vmul.f32 %v3166, %v3167
          %v3172 = vcombine.low %v3168, %v3169
          %v3174 = vunpack.c.l.s4 1983009808
          %v3175 = vunpack.c.0.s8 %v3174
          %v3176 = vlaneseq
          %v3177 = vshrl.u32 %v3176, 7
          %v3178 = vsub.s32 %v3175, %v3177
          %v3179 = vrot.slane %v3172, %v3178
          %v3181 = vsub.f32 %v3138, %v3179
          %v3182 = vmul.f32 %v3181, %v3181
          %v3185 = vunpack.c.l.s4 1983009808
          %v3186 = vunpack.c.0.s8 %v3185
          %v3187 = vlaneseq
          %v3188 = vshrl.u32 %v3187, 7
          %v3189 = vsub.s32 %v3186, %v3188
          %v3190 = vrot.slane %v3182, %v3189
          %v3191 = vcombine.high %v3190, %v3190
          %v3194 = vsel %vm3152, %v3190, 0.0
          %v3195 = vrot.slane %v3194, 4
          %v3196 = vadd.f32 %v3194, %v3195
          %v3197 = vrot.slane %v3196, 2
          %v3198 = vadd.f32 %v3196, %v3197
          %v3199 = vrot.slane %v3198, 1
          %v3200 = vadd.f32 %v3198, %v3199
          %v3201 = vsel %vm3152, %v3191, 0.0
          %v3202 = vrot.slane %v3201, 4
          %v3203 = vadd.f32 %v3201, %v3202
          %v3204 = vrot.slane %v3203, 2
          %v3205 = vadd.f32 %v3203, %v3204
          %v3206 = vrot.slane %v3205, 1
          %v3207 = vadd.f32 %v3205, %v3206
          %v3208 = vmul.f32 %v3200, %v3167
          %v3209 = vmul.f32 %v3207, %v3167
          %v3211 = vlaneseq
          %v3212 = vshrl.u32 %v3211, 7
          %v3213 = vsub.s32 0, %v3212
          %v3214 = vrot.slane %v3139, %v3213
          %v3215 = vlaneseq
          %v3216 = vshrl.u32 %v3215, 7
          %v3217 = vsub.s32 1, %v3216
          %v3218 = vrot.slane %v3139, %v3217
          %v3223 = vunpack.c.l.s4 1983009808
          %v3224 = vunpack.c.0.s8 %v3223
          %v3225 = vlaneseq
          %v3226 = vshrl.u32 %v3225, 7
          %v3227 = vsub.s32 %v3224, %v3226
          %v3228 = vrot.slane %v3181, %v3227
          %v3229 = vcombine.high %v3228, %v3228
          %v3232 = vmul.f32 %v3214, %v3228
          %v3233 = vmul.f32 %v3218, %v3229
          %v3234 = vadd.f32 %v3208, 1e-05
          %v3235 = vadd.f32 %v3209, 1e-05
          %v3236 = vrsqrt.pop %v3234
          %v3237 = vrsqrt.pop %v3235
          %v3238 = vmul.f32 %v3232, %v3236
          %v3239 = vmul.f32 %v3233, %v3237
          %v3241 = vlaneseq
          %v3242 = vshrl.u32 %v3241, 7
          %v3243 = vsub.s32 0, %v3242
          %v3244 = vrot.slane %v3140, %v3243
          %v3245 = vlaneseq
          %v3246 = vshrl.u32 %v3245, 7
          %v3247 = vsub.s32 1, %v3246
          %v3248 = vrot.slane %v3140, %v3247
          %v3251 = vadd.f32 %v3238, %v3244
          %v3252 = vadd.f32 %v3239, %v3248
          %vm3253 = vcmp.ge.f32.partialorder %v3251, 0.0
          %vm3254 = vcmp.ge.f32.partialorder %v3252, 0.0
          %v3255 = vmul.f32 %v3251, 0.01
          %v3256 = vmul.f32 %v3252, 0.01
          %v3257 = vsel %vm3253, %v3251, %v3255
          %v3258 = vsel %vm3254, %v3252, %v3256
          %v3259 = vpack.c.bf16 %v3257, %v3257
          %v3260 = vpack.c.bf16 %v3258, %v3258
          %v3261 = vld [vmem:[#allocation12] sm:$0xf]
          %v3262 = vld [vmem:[#allocation12 + $0x4] sm:$0xf]
          %v3263 = vld [vmem:[#allocation12 + $0x8] sm:$0xf]
          %v3264 = vld [vmem:[#allocation12 + $0xc] sm:$0xf]
          %v3265 = vld [vmem:[#allocation12 + $0x10] sm:$0xf]
          %v3266 = vld [vmem:[#allocation12 + $0x14] sm:$0xf]
          %v3267 = vld [vmem:[#allocation12 + $0x18] sm:$0xf]
          %v3268 = vld [vmem:[#allocation12 + $0x1c] sm:$0xf]
          %v3269 = vld [vmem:[#allocation12 + $0x20] sm:$0xf]
          %v3270 = vld [vmem:[#allocation12 + $0x24] sm:$0xf]
          %v3271 = vld [vmem:[#allocation12 + $0x28] sm:$0xf]
          %v3272 = vld [vmem:[#allocation12 + $0x2c] sm:$0xf]
          %v3273 = vld [vmem:[#allocation12 + $0x30] sm:$0xf]
          %v3274 = vld [vmem:[#allocation12 + $0x34] sm:$0xf]
          %v3275 = vld [vmem:[#allocation12 + $0x38] sm:$0xf]
          %v3276 = vld [vmem:[#allocation12 + $0x3c] sm:$0xf]
          %v3277 = vld [vmem:[#allocation12 + $0x40] sm:$0xf]
          %v3278 = vld [vmem:[#allocation12 + $0x44] sm:$0xf]
          %v3279 = vld [vmem:[#allocation12 + $0x48] sm:$0xf]
          %v3280 = vld [vmem:[#allocation12 + $0x4c] sm:$0xf]
          %v3281 = vld [vmem:[#allocation12 + $0x50] sm:$0xf]
          %v3282 = vld [vmem:[#allocation12 + $0x54] sm:$0xf]
          %v3283 = vld [vmem:[#allocation12 + $0x58] sm:$0xf]
          %v3284 = vld [vmem:[#allocation12 + $0x5c] sm:$0xf]
          %v3285 = vld [vmem:[#allocation12 + $0x60] sm:$0xf]
          %v3286 = vld [vmem:[#allocation12 + $0x64] sm:$0xf]
          %v3287 = vld [vmem:[#allocation12 + $0x68] sm:$0xf]
          %v3288 = vld [vmem:[#allocation12 + $0x6c] sm:$0xf]
          %v3289 = vld [vmem:[#allocation12 + $0x70] sm:$0xf]
          %v3290 = vld [vmem:[#allocation12 + $0x74] sm:$0xf]
          %v3291 = vld [vmem:[#allocation12 + $0x78] sm:$0xf]
          %v3292 = vld [vmem:[#allocation12 + $0x7c] sm:$0xf]
          %v3293 = vld [vmem:[%s29] sm:$0x1]
          %v3295 = vlaneseq
          %v3296 = vshrl.u32 %v3295, 7
          %v3297 = vsub.s32 0, %v3296
          %v3298 = vrot.slane %v3293, %v3297
          %v3332 = vunpack.c.l.b16 %v3261
          %v3333 = vunpack.c.l.b16 %v3262
          %v3334 = vunpack.c.l.b16 %v3263
          %v3335 = vunpack.c.l.b16 %v3264
          %v3336 = vunpack.c.l.b16 %v3265
          %v3337 = vunpack.c.l.b16 %v3266
          %v3338 = vunpack.c.l.b16 %v3267
          %v3339 = vunpack.c.l.b16 %v3268
          %v3340 = vunpack.c.l.b16 %v3269
          %v3341 = vunpack.c.l.b16 %v3270
          %v3342 = vunpack.c.l.b16 %v3271
          %v3343 = vunpack.c.l.b16 %v3272
          %v3344 = vunpack.c.l.b16 %v3273
          %v3345 = vunpack.c.l.b16 %v3274
          %v3346 = vunpack.c.l.b16 %v3275
          %v3347 = vunpack.c.l.b16 %v3276
          %v3348 = vunpack.c.l.b16 %v3277
          %v3349 = vunpack.c.l.b16 %v3278
          %v3350 = vunpack.c.l.b16 %v3279
          %v3351 = vunpack.c.l.b16 %v3280
          %v3352 = vunpack.c.l.b16 %v3281
          %v3353 = vunpack.c.l.b16 %v3282
          %v3354 = vunpack.c.l.b16 %v3283
          %v3355 = vunpack.c.l.b16 %v3284
          %v3356 = vunpack.c.l.b16 %v3285
          %v3357 = vunpack.c.l.b16 %v3286
          %v3358 = vunpack.c.l.b16 %v3287
          %v3359 = vunpack.c.l.b16 %v3288
          %v3360 = vunpack.c.l.b16 %v3289
          %v3361 = vunpack.c.l.b16 %v3290
          %v3362 = vunpack.c.l.b16 %v3291
          %v3363 = vunpack.c.l.b16 %v3292
          %v3364 = vpack.c.b16 %v3333, %v3332
          %v3365 = vpack.c.b16 %v3335, %v3334
          %v3366 = vpack.c.b16 %v3337, %v3336
          %v3367 = vpack.c.b16 %v3339, %v3338
          %v3368 = vpack.c.b16 %v3341, %v3340
          %v3369 = vpack.c.b16 %v3343, %v3342
          %v3370 = vpack.c.b16 %v3345, %v3344
          %v3371 = vpack.c.b16 %v3347, %v3346
          %v3372 = vpack.c.b16 %v3349, %v3348
          %v3373 = vpack.c.b16 %v3351, %v3350
          %v3374 = vpack.c.b16 %v3353, %v3352
          %v3375 = vpack.c.b16 %v3355, %v3354
          %v3376 = vpack.c.b16 %v3357, %v3356
          %v3377 = vpack.c.b16 %v3359, %v3358
          %v3378 = vpack.c.b16 %v3361, %v3360
          %v3379 = vpack.c.b16 %v3363, %v3362
          %3396 = vmatprep.subr.bf16.mxu0 0
          %3397 = vmatpush1.bf16.msra.mxu0 %v3371
          %3398 = vmatprep.subr.bf16.mxu0 0
          %3399 = vmatpush1.bf16.msra.mxu0 %v3370
          %3400 = vmatprep.subr.bf16.mxu0 0
          %3401 = vmatpush1.bf16.msra.mxu0 %v3369
          %3402 = vmatprep.subr.bf16.mxu0 0
          %3403 = vmatpush1.bf16.msra.mxu0 %v3368
          %3404 = vmatprep.subr.bf16.mxu0 0
          %3405 = vmatpush1.bf16.msra.mxu0 %v3367
          %3406 = vmatprep.subr.bf16.mxu0 0
          %3407 = vmatpush1.bf16.msra.mxu0 %v3366
          %3408 = vmatprep.subr.bf16.mxu0 0
          %3409 = vmatpush1.bf16.msra.mxu0 %v3365
          %3410 = vmatprep.subr.bf16.mxu0 0
          %3411 = vmatpush1.bf16.msra.mxu0 %v3364
          %3412 = vmatprep.subr.bf16.mxu0 0
          %3413 = vmatpush2.bf16.msra.mxu0 %v3379
          %3414 = vmatprep.subr.bf16.mxu0 0
          %3415 = vmatpush2.bf16.msra.mxu0 %v3378
          %3416 = vmatprep.subr.bf16.mxu0 0
          %3417 = vmatpush2.bf16.msra.mxu0 %v3377
          %3418 = vmatprep.subr.bf16.mxu0 0
          %3419 = vmatpush2.bf16.msra.mxu0 %v3376
          %3420 = vmatprep.subr.bf16.mxu0 0
          %3421 = vmatpush2.bf16.msra.mxu0 %v3375
          %3422 = vmatprep.subr.bf16.mxu0 0
          %3423 = vmatpush2.bf16.msra.mxu0 %v3374
          %3424 = vmatprep.subr.bf16.mxu0 0
          %3425 = vmatpush2.bf16.msra.mxu0 %v3373
          %3426 = vmatprep.subr.bf16.mxu0 0
          %3427 = vmatpush2.bf16.msra.mxu0 %v3372
          %3428 = vmatprep.mubr.bf16.mxu0 %v3260
          %3429 = vmatmul.mubr.bf16.gmra.mxu0 %v3259
          %v3430 = vpop.f32.mrf.mxu0
          %v3431 = vadd.f32 %v3298, %v3430
          %v3432 = vpop.f32.mrf.mxu0
          %v3433 = vpop.f32.mrf.mxu0
          %v3434 = vpop.f32.mrf.mxu0
          %3435 = vdwg.mxu0
          %v3436 = vld [vmem:[%s31] sm:$0x1]
          %v3437 = vld [vmem:[%s33] sm:$0x1]
          %v3438 = vsel %vm3152, %v3431, 0.0
          %v3439 = vrot.slane %v3438, 4
          %v3440 = vadd.f32 %v3438, %v3439
          %v3441 = vrot.slane %v3440, 2
          %v3442 = vadd.f32 %v3440, %v3441
          %v3443 = vrot.slane %v3442, 1
          %v3444 = vadd.f32 %v3442, %v3443
          %v3445 = vmul.f32 %v3444, %v3167
          %v3446 = vsub.f32 %v3431, %v3445
          %v3447 = vmul.f32 %v3446, %v3446
          %v3448 = vsel %vm3152, %v3447, 0.0
          %v3449 = vrot.slane %v3448, 4
          %v3450 = vadd.f32 %v3448, %v3449
          %v3451 = vrot.slane %v3450, 2
          %v3452 = vadd.f32 %v3450, %v3451
          %v3453 = vrot.slane %v3452, 1
          %v3454 = vadd.f32 %v3452, %v3453
          %v3455 = vmul.f32 %v3454, %v3167
          %v3457 = vlaneseq
          %v3458 = vshrl.u32 %v3457, 7
          %v3459 = vsub.s32 0, %v3458
          %v3460 = vrot.slane %v3436, %v3459
          %v3462 = vmul.f32 %v3460, %v3446
          %v3463 = vadd.f32 %v3455, 1e-05
          %v3464 = vrsqrt.pop %v3463
          %v3465 = vmul.f32 %v3462, %v3464
          %v3467 = vlaneseq
          %v3468 = vshrl.u32 %v3467, 7
          %v3469 = vsub.s32 0, %v3468
          %v3470 = vrot.slane %v3437, %v3469
          %v3472 = vadd.f32 %v3465, %v3470
          %vm3473 = vcmp.ge.f32.partialorder %v3472, 0.0
          %v3474 = vmul.f32 %v3472, 0.01
          %v3475 = vsel %vm3473, %v3472, %v3474
          %v3476 = vpack.c.bf16 %v3475, %v3475
          %v3477 = vld [vmem:[%s35] sm:$0xf]
          %v3478 = vld [vmem:[%s35 + $0x4] sm:$0xf]
          %v3479 = vld [vmem:[%s35 + $0x8] sm:$0xf]
          %v3480 = vld [vmem:[%s35 + $0xc] sm:$0xf]
          %v3481 = vld [vmem:[%s35 + $0x10] sm:$0xf]
          %v3482 = vld [vmem:[%s35 + $0x14] sm:$0xf]
          %v3483 = vld [vmem:[%s35 + $0x18] sm:$0xf]
          %v3484 = vld [vmem:[%s35 + $0x1c] sm:$0xf]
          %v3485 = vld [vmem:[%s35 + $0x20] sm:$0xf]
          %v3486 = vld [vmem:[%s35 + $0x24] sm:$0xf]
          %v3487 = vld [vmem:[%s35 + $0x28] sm:$0xf]
          %v3488 = vld [vmem:[%s35 + $0x2c] sm:$0xf]
          %v3489 = vld [vmem:[%s35 + $0x30] sm:$0xf]
          %v3490 = vld [vmem:[%s35 + $0x34] sm:$0xf]
          %v3491 = vld [vmem:[%s35 + $0x38] sm:$0xf]
          %v3492 = vld [vmem:[%s35 + $0x3c] sm:$0xf]
          %v3493 = vld [vmem:[%s37] sm:$0x1]
          %v3495 = vlaneseq
          %v3496 = vshrl.u32 %v3495, 7
          %v3497 = vsub.s32 0, %v3496
          %v3498 = vrot.slane %v3493, %v3497
          %v3516 = vunpack.c.l.b16 %v3477
          %v3517 = vunpack.c.l.b16 %v3478
          %v3518 = vunpack.c.l.b16 %v3479
          %v3519 = vunpack.c.l.b16 %v3480
          %v3520 = vunpack.c.l.b16 %v3481
          %v3521 = vunpack.c.l.b16 %v3482
          %v3522 = vunpack.c.l.b16 %v3483
          %v3523 = vunpack.c.l.b16 %v3484
          %v3524 = vunpack.c.l.b16 %v3485
          %v3525 = vunpack.c.l.b16 %v3486
          %v3526 = vunpack.c.l.b16 %v3487
          %v3527 = vunpack.c.l.b16 %v3488
          %v3528 = vunpack.c.l.b16 %v3489
          %v3529 = vunpack.c.l.b16 %v3490
          %v3530 = vunpack.c.l.b16 %v3491
          %v3531 = vunpack.c.l.b16 %v3492
          %v3532 = vpack.c.b16 %v3517, %v3516
          %v3533 = vpack.c.b16 %v3519, %v3518
          %v3534 = vpack.c.b16 %v3521, %v3520
          %v3535 = vpack.c.b16 %v3523, %v3522
          %v3536 = vpack.c.b16 %v3525, %v3524
          %v3537 = vpack.c.b16 %v3527, %v3526
          %v3538 = vpack.c.b16 %v3529, %v3528
          %v3539 = vpack.c.b16 %v3531, %v3530
          %3548 = vmatprep.subr.bf16.mxu0 0
          %3549 = vmatpush1.bf16.msra.mxu0 %v3539
          %3550 = vmatprep.subr.bf16.mxu0 0
          %3551 = vmatpush1.bf16.msra.mxu0 %v3538
          %3552 = vmatprep.subr.bf16.mxu0 0
          %3553 = vmatpush1.bf16.msra.mxu0 %v3537
          %3554 = vmatprep.subr.bf16.mxu0 0
          %3555 = vmatpush1.bf16.msra.mxu0 %v3536
          %3556 = vmatprep.subr.bf16.mxu0 0
          %3557 = vmatpush1.bf16.msra.mxu0 %v3535
          %3558 = vmatprep.subr.bf16.mxu0 0
          %3559 = vmatpush1.bf16.msra.mxu0 %v3534
          %3560 = vmatprep.subr.bf16.mxu0 0
          %3561 = vmatpush1.bf16.msra.mxu0 %v3533
          %3562 = vmatprep.subr.bf16.mxu0 0
          %3563 = vmatpush1.bf16.msra.mxu0 %v3532
          %3564 = vmatprep.subr.bf16.mxu0 0
          %3565 = vmatpush2.bf16.msra.mxu0 0
          %3566 = vmatprep.subr.bf16.mxu0 0
          %3567 = vmatpush2.bf16.msra.mxu0 0
          %3568 = vmatprep.subr.bf16.mxu0 0
          %3569 = vmatpush2.bf16.msra.mxu0 0
          %3570 = vmatprep.subr.bf16.mxu0 0
          %3571 = vmatpush2.bf16.msra.mxu0 0
          %3572 = vmatprep.subr.bf16.mxu0 0
          %3573 = vmatpush2.bf16.msra.mxu0 0
          %3574 = vmatprep.subr.bf16.mxu0 0
          %3575 = vmatpush2.bf16.msra.mxu0 0
          %3576 = vmatprep.subr.bf16.mxu0 0
          %3577 = vmatpush2.bf16.msra.mxu0 0
          %3578 = vmatprep.subr.bf16.mxu0 0
          %3579 = vmatpush2.bf16.msra.mxu0 0
          %3580 = vmatprep.mubr.bf16.mxu0 0
          %3581 = vmatmul.mubr.bf16.gmra.mxu0 %v3476
          %v3582 = vpop.f32.mrf.mxu0
          %v3583 = vadd.f32 %v3498, %v3582
          %v3584 = vpop.f32.mrf.mxu0
          %v3585 = vpop.f32.mrf.mxu0
          %v3586 = vpop.f32.mrf.mxu0
          %3587 = vdwg.mxu0
          %v3588 = vld [vmem:[%s39] sm:$0x1]
          %v3589 = vld [vmem:[%s41] sm:$0x1]
          %vm3590 = vcmask 517120
          %v3591 = vsel %vm3590, %v3583, 0.0
          %v3592 = vrot.slane %v3591, 4
          %v3593 = vadd.f32 %v3591, %v3592
          %v3594 = vrot.slane %v3593, 2
          %v3595 = vadd.f32 %v3593, %v3594
          %v3596 = vrot.slane %v3595, 1
          %v3597 = vadd.f32 %v3595, %v3596
          %v3598 = vmul.f32 %v3597, %v3167
          %v3599 = vsub.f32 %v3583, %v3598
          %v3600 = vmul.f32 %v3599, %v3599
          %v3601 = vsel %vm3590, %v3600, 0.0
          %v3602 = vrot.slane %v3601, 4
          %v3603 = vadd.f32 %v3601, %v3602
          %v3604 = vrot.slane %v3603, 2
          %v3605 = vadd.f32 %v3603, %v3604
          %v3606 = vrot.slane %v3605, 1
          %v3607 = vadd.f32 %v3605, %v3606
          %v3608 = vmul.f32 %v3607, %v3167
          %v3610 = vlaneseq
          %v3611 = vshrl.u32 %v3610, 7
          %v3612 = vsub.s32 0, %v3611
          %v3613 = vrot.slane %v3588, %v3612
          %v3615 = vmul.f32 %v3613, %v3599
          %v3616 = vadd.f32 %v3608, 1e-05
          %v3617 = vrsqrt.pop %v3616
          %v3618 = vmul.f32 %v3615, %v3617
          %v3620 = vlaneseq
          %v3621 = vshrl.u32 %v3620, 7
          %v3622 = vsub.s32 0, %v3621
          %v3623 = vrot.slane %v3589, %v3622
          %v3625 = vadd.f32 %v3618, %v3623
          %vm3626 = vcmp.ge.f32.partialorder %v3625, 0.0
          %v3627 = vmul.f32 %v3625, 0.01
          %v3628 = vsel %vm3626, %v3625, %v3627
          %v3629 = vpack.c.bf16 %v3628, %v3628
          %v3630 = vld [vmem:[%s43] sm:$0xf]
          %v3631 = vld [vmem:[%s43 + $0x4] sm:$0xf]
          %v3632 = vld [vmem:[%s43 + $0x8] sm:$0xf]
          %v3633 = vld [vmem:[%s43 + $0xc] sm:$0xf]
          %v3634 = vld [vmem:[%s43 + $0x10] sm:$0xf]
          %v3635 = vld [vmem:[%s43 + $0x14] sm:$0xf]
          %v3636 = vld [vmem:[%s43 + $0x18] sm:$0xf]
          %v3637 = vld [vmem:[%s43 + $0x1c] sm:$0xf]
          %v3638 = vld [vmem:[%s45] sm:$0x1]
          %v3640 = vlaneseq
          %v3641 = vshrl.u32 %v3640, 7
          %v3642 = vsub.s32 0, %v3641
          %v3643 = vrot.slane %v3638, %v3642
          %v3653 = vunpack.c.l.b16 %v3630
          %v3654 = vunpack.c.l.b16 %v3631
          %v3655 = vunpack.c.l.b16 %v3632
          %v3656 = vunpack.c.l.b16 %v3633
          %v3657 = vunpack.c.l.b16 %v3634
          %v3658 = vunpack.c.l.b16 %v3635
          %v3659 = vunpack.c.l.b16 %v3636
          %v3660 = vunpack.c.l.b16 %v3637
          %v3661 = vpack.c.b16 %v3654, %v3653
          %v3662 = vpack.c.b16 %v3656, %v3655
          %v3663 = vpack.c.b16 %v3658, %v3657
          %v3664 = vpack.c.b16 %v3660, %v3659
          %vm3669 = vcmask 523264
          %v3671 = vsel %vm3669, %v3629, 0
          %3673 = vmatprep.subr.bf16.mxu0 0
          %3674 = vmatpush1.bf16.msra.mxu0 0
          %3675 = vmatprep.subr.bf16.mxu0 0
          %3676 = vmatpush1.bf16.msra.mxu0 0
          %3677 = vmatprep.subr.bf16.mxu0 0
          %3678 = vmatpush1.bf16.msra.mxu0 0
          %3679 = vmatprep.subr.bf16.mxu0 0
          %3680 = vmatpush1.bf16.msra.mxu0 0
          %3681 = vmatprep.subr.bf16.mxu0 0
          %3682 = vmatpush1.bf16.msra.mxu0 %v3664
          %3683 = vmatprep.subr.bf16.mxu0 0
          %3684 = vmatpush1.bf16.msra.mxu0 %v3663
          %3685 = vmatprep.subr.bf16.mxu0 0
          %3686 = vmatpush1.bf16.msra.mxu0 %v3662
          %3687 = vmatprep.subr.bf16.mxu0 0
          %3688 = vmatpush1.bf16.msra.mxu0 %v3661
          %3689 = vmatprep.subr.bf16.mxu0 0
          %3690 = vmatpush2.bf16.msra.mxu0 0
          %3691 = vmatprep.subr.bf16.mxu0 0
          %3692 = vmatpush2.bf16.msra.mxu0 0
          %3693 = vmatprep.subr.bf16.mxu0 0
          %3694 = vmatpush2.bf16.msra.mxu0 0
          %3695 = vmatprep.subr.bf16.mxu0 0
          %3696 = vmatpush2.bf16.msra.mxu0 0
          %3697 = vmatprep.subr.bf16.mxu0 0
          %3698 = vmatpush2.bf16.msra.mxu0 0
          %3699 = vmatprep.subr.bf16.mxu0 0
          %3700 = vmatpush2.bf16.msra.mxu0 0
          %3701 = vmatprep.subr.bf16.mxu0 0
          %3702 = vmatpush2.bf16.msra.mxu0 0
          %3703 = vmatprep.subr.bf16.mxu0 0
          %3704 = vmatpush2.bf16.msra.mxu0 0
          %3705 = vmatprep.mubr.bf16.mxu0 0
          %3706 = vmatmul.mubr.bf16.gmra.mxu0 %v3671
          %v3707 = vpop.f32.mrf.mxu0
          %v3708 = vadd.f32 %v3643, %v3707
          %v3709 = vpop.f32.mrf.mxu0
          %v3710 = vpop.f32.mrf.mxu0
          %v3711 = vpop.f32.mrf.mxu0
          %3712 = vdwg.mxu0
          %v3713 = vld [vmem:[%s47] sm:$0x1]
          %v3714 = vld [vmem:[%s49] sm:$0x1]
          %vm3715 = vcmask 254976
          %v3716 = vsel %vm3715, %v3708, 0.0
          %v3717 = vrot.slane %v3716, 4
          %v3718 = vadd.f32 %v3716, %v3717
          %v3719 = vrot.slane %v3718, 2
          %v3720 = vadd.f32 %v3718, %v3719
          %v3721 = vrot.slane %v3720, 1
          %v3722 = vadd.f32 %v3720, %v3721
          %v3723 = vmul.f32 %v3722, %v3167
          %v3724 = vsub.f32 %v3708, %v3723
          %v3725 = vmul.f32 %v3724, %v3724
          %v3726 = vsel %vm3715, %v3725, 0.0
          %v3727 = vrot.slane %v3726, 4
          %v3728 = vadd.f32 %v3726, %v3727
          %v3729 = vrot.slane %v3728, 2
          %v3730 = vadd.f32 %v3728, %v3729
          %v3731 = vrot.slane %v3730, 1
          %v3732 = vadd.f32 %v3730, %v3731
          %v3733 = vmul.f32 %v3732, %v3167
          %v3735 = vlaneseq
          %v3736 = vshrl.u32 %v3735, 7
          %v3737 = vsub.s32 0, %v3736
          %v3738 = vrot.slane %v3713, %v3737
          %v3740 = vmul.f32 %v3738, %v3724
          %v3741 = vadd.f32 %v3733, 1e-05
          %v3742 = vrsqrt.pop %v3741
          %v3743 = vmul.f32 %v3740, %v3742
          %v3745 = vlaneseq
          %v3746 = vshrl.u32 %v3745, 7
          %v3747 = vsub.s32 0, %v3746
          %v3748 = vrot.slane %v3714, %v3747
          %v3750 = vadd.f32 %v3743, %v3748
          %vm3751 = vcmp.ge.f32.partialorder %v3750, 0.0
          %v3752 = vmul.f32 %v3750, 0.01
          %v3753 = vsel %vm3751, %v3750, %v3752
          %v3754 = vpack.c.bf16 %v3753, %v3753
          %v3755 = vld [vmem:[%s51] sm:$0xf]
          %v3756 = vld [vmem:[%s51 + $0x4] sm:$0xf]
          %v3757 = vld [vmem:[%s51 + $0x8] sm:$0xf]
          %v3758 = vld [vmem:[%s51 + $0xc] sm:$0xf]
          %v3759 = vld [vmem:[%s53] sm:$0x1]
          %v3761 = vlaneseq
          %v3762 = vshrl.u32 %v3761, 7
          %v3763 = vsub.s32 0, %v3762
          %v3764 = vrot.slane %v3759, %v3763
          %v3770 = vunpack.c.l.b16 %v3755
          %v3771 = vunpack.c.l.b16 %v3756
          %v3772 = vunpack.c.l.b16 %v3757
          %v3773 = vunpack.c.l.b16 %v3758
          %v3774 = vpack.c.b16 %v3771, %v3770
          %v3775 = vpack.c.b16 %v3773, %v3772
          %vm3778 = vcmask 261120
          %v3780 = vsel %vm3778, %v3754, 0
          %3782 = vmatprep.subr.bf16.mxu0 0
          %3783 = vmatpush1.bf16.msra.mxu0 0
          %3784 = vmatprep.subr.bf16.mxu0 0
          %3785 = vmatpush1.bf16.msra.mxu0 0
          %3786 = vmatprep.subr.bf16.mxu0 0
          %3787 = vmatpush1.bf16.msra.mxu0 0
          %3788 = vmatprep.subr.bf16.mxu0 0
          %3789 = vmatpush1.bf16.msra.mxu0 0
          %3790 = vmatprep.subr.bf16.mxu0 0
          %3791 = vmatpush1.bf16.msra.mxu0 0
          %3792 = vmatprep.subr.bf16.mxu0 0
          %3793 = vmatpush1.bf16.msra.mxu0 0
          %3794 = vmatprep.subr.bf16.mxu0 0
          %3795 = vmatpush1.bf16.msra.mxu0 %v3775
          %3796 = vmatprep.subr.bf16.mxu0 0
          %3797 = vmatpush1.bf16.msra.mxu0 %v3774
          %3798 = vmatprep.subr.bf16.mxu0 0
          %3799 = vmatpush2.bf16.msra.mxu0 0
          %3800 = vmatprep.subr.bf16.mxu0 0
          %3801 = vmatpush2.bf16.msra.mxu0 0
          %3802 = vmatprep.subr.bf16.mxu0 0
          %3803 = vmatpush2.bf16.msra.mxu0 0
          %3804 = vmatprep.subr.bf16.mxu0 0
          %3805 = vmatpush2.bf16.msra.mxu0 0
          %3806 = vmatprep.subr.bf16.mxu0 0
          %3807 = vmatpush2.bf16.msra.mxu0 0
          %3808 = vmatprep.subr.bf16.mxu0 0
          %3809 = vmatpush2.bf16.msra.mxu0 0
          %3810 = vmatprep.subr.bf16.mxu0 0
          %3811 = vmatpush2.bf16.msra.mxu0 0
          %3812 = vmatprep.subr.bf16.mxu0 0
          %3813 = vmatpush2.bf16.msra.mxu0 0
          %3814 = vmatprep.mubr.bf16.mxu0 0
          %3815 = vmatmul.mubr.bf16.gmra.mxu0 %v3780
          %v3816 = vpop.f32.mrf.mxu0
          %v3817 = vadd.f32 %v3764, %v3816
          %v3818 = vpop.f32.mrf.mxu0
          %v3819 = vpop.f32.mrf.mxu0
          %v3820 = vpop.f32.mrf.mxu0
          %3821 = vdwg.mxu0
          %vm3822 = vcmp.ge.f32.partialorder %v3817, 0.0
          %v3823 = vmul.f32 %v3817, 0.01
          %v3824 = vsel %vm3822, %v3817, %v3823
          %v3825 = vpack.c.bf16 %v3824, %v3824
          %v3826 = vld [vmem:[%s55] sm:$0xf]
          %v3827 = vld [vmem:[%s55 + $0x4] sm:$0xf]
          %v3828 = vld [vmem:[#allocation3] sm:$0x1]
          %v3830 = vlaneseq
          %v3831 = vshrl.u32 %v3830, 7
          %v3832 = vsub.s32 0, %v3831
          %v3833 = vrot.slane %v3828, %v3832
          %v3837 = vunpack.c.l.b16 %v3826
          %v3838 = vunpack.c.l.b16 %v3827
          %v3839 = vpack.c.b16 %v3838, %v3837
          %vm3841 = vcmask 130048
          %v3843 = vsel %vm3841, %v3825, 0
          %3845 = vmatprep.subr.bf16.mxu0 0
          %3846 = vmatpush1.bf16.msra.mxu0 0
          %3847 = vmatprep.subr.bf16.mxu0 0
          %3848 = vmatpush1.bf16.msra.mxu0 0
          %3849 = vmatprep.subr.bf16.mxu0 0
          %3850 = vmatpush1.bf16.msra.mxu0 0
          %3851 = vmatprep.subr.bf16.mxu0 0
          %3852 = vmatpush1.bf16.msra.mxu0 0
          %3853 = vmatprep.subr.bf16.mxu0 0
          %3854 = vmatpush1.bf16.msra.mxu0 0
          %3855 = vmatprep.subr.bf16.mxu0 0
          %3856 = vmatpush1.bf16.msra.mxu0 0
          %3857 = vmatprep.subr.bf16.mxu0 0
          %3858 = vmatpush1.bf16.msra.mxu0 0
          %3859 = vmatprep.subr.bf16.mxu0 0
          %3860 = vmatpush1.bf16.msra.mxu0 %v3839
          %3861 = vmatprep.subr.bf16.mxu0 0
          %3862 = vmatpush2.bf16.msra.mxu0 0
          %3863 = vmatprep.subr.bf16.mxu0 0
          %3864 = vmatpush2.bf16.msra.mxu0 0
          %3865 = vmatprep.subr.bf16.mxu0 0
          %3866 = vmatpush2.bf16.msra.mxu0 0
          %3867 = vmatprep.subr.bf16.mxu0 0
          %3868 = vmatpush2.bf16.msra.mxu0 0
          %3869 = vmatprep.subr.bf16.mxu0 0
          %3870 = vmatpush2.bf16.msra.mxu0 0
          %3871 = vmatprep.subr.bf16.mxu0 0
          %3872 = vmatpush2.bf16.msra.mxu0 0
          %3873 = vmatprep.subr.bf16.mxu0 0
          %3874 = vmatpush2.bf16.msra.mxu0 0
          %3875 = vmatprep.subr.bf16.mxu0 0
          %3876 = vmatpush2.bf16.msra.mxu0 0
          %3877 = vmatprep.mubr.bf16.mxu0 0
          %3878 = vmatmul.mubr.bf16.gmra.mxu0 %v3843
          %v3879 = vpop.f32.mrf.mxu0
          %v3880 = vadd.f32 %v3833, %v3879
          %v3881 = vpop.f32.mrf.mxu0
          %v3882 = vpop.f32.mrf.mxu0
          %v3883 = vpop.f32.mrf.mxu0
          %3884 = vdwg.mxu0
          %v3885 = vsub.f32 0.0, %v3880
          %v3886 = vmul.f32 %v3885, 1.442695
          %v3887 = vpow.pop %v3886
          %v3888 = vadd.f32 %v3887, 1.0
          %v3889 = vrcp.pop %v3888
          %v3890 = vmul.f32 1.0, %v3889
          %3892 = vset.pattern.permute.xlu0 0
          %3893 = vperm.xlu0 %3892, %v3890
          %v3894 = vpop.permute.xlu0 %3893
          %3896 = vst [vmem:[#allocation13] sm:$0x3] %v3894
        $region164: #{tpu_custom_call.1} parent=135 // pred_fallthru
          _
        // Predicated region
        $region165: #{tpu_custom_call.1} parent=135 // pred_check
          %p3897 = pneg %p715
        $region166: #{tpu_custom_call.1} parent=135 // pred_check_branch
          %3899 = sbr.rel (%p3897) target = $region168
        $region167: #{tpu_custom_call.1} parent=135 // pred_region
          %s3901 = ssub.s32 32, 32
          %3902 = vsyncadd [#allocation6], %s3901
          %s3904 = sshll.u32 [#allocation13], 4
          %s3905 = int_to_ptr.vmem [resolvable:$true] %s3904
          %3907 = dma.vmem_to_hbm [thread:$0]  %s3905, 32, %s59, [#allocation6]
        $region168: #{tpu_custom_call.1} parent=135 // pred_fallthru
          _
        // Predicated region
        $region169: #{tpu_custom_call.1} parent=135 // pred_check
          %p3908 = pneg %p715
        $region170: #{tpu_custom_call.1} parent=135 // pred_check_branch
          %3910 = sbr.rel (%p3908) target = $region172
        $region171: #{tpu_custom_call.1} parent=135 // pred_region
          %3911 = dma.done [#allocation6], 32
        $region172: #{tpu_custom_call.1} parent=135 // pred_fallthru
          _
      $region136: #{tpu_custom_call.1} parent=5 // pred_fallthru
        _
      %p3912 = scmp.le.s32.totalorder 2, %s73
      // Predicated region
      $region173: #{tpu_custom_call.1} parent=5 // pred_check
        %p3913 = pneg %p3912
      $region174: #{tpu_custom_call.1} parent=5 // pred_check_branch
        %3915 = sbr.rel (%p3913) target = $region176
      $region175: #{tpu_custom_call.1} parent=5 // pred_region
        %s3916 = ssub.s32 %s73, 2
      $region176: #{tpu_custom_call.1} parent=5 // pred_fallthru
        _
    $region6: #{tpu_custom_call.1} parent=1 // loop_footer
      %s77 = sadd.s32 1, %s73
    $region7: #{tpu_custom_call.1} parent=1 // loop_footer_branch
      %72 = sbr.rel target = $region3
    $region8: #{tpu_custom_call.1} parent=1 // loop_exit
      _
    %3917 = vsyncpa [#allocation5], 1
    %s3918 = scalar_lea.sflag [#allocation5], 1
    %3919 = vsyncpa %s3918, 1
    %3920 = vsyncpa [#allocation8], 1
    %3921 = vsyncpa [#allocation11], 1
    %3922 = vsyncpa [#allocation6], 1
    %s3923 = scalar_lea.sflag [#allocation6], 1
    %3924 = vsyncpa %s3923, 1

</llo_original>
